<compile_context>
chip_gen: v7x
topology: tpu7x:2x2x1
jax: 0.10.0
libtpu: 0.0.40
codegen_flags: <defaults>
</compile_context>

<pallas_src>
import functools

import jax
import jax.numpy as jnp
from jax.experimental import pallas as pl
from jax.experimental.pallas import tpu as pltpu

# ----------------------------- hyper-params (module defaults) ----------------
NUM_CHANN = [20, 10]
KER = 10
STRIDE = 2
NUM_HIDDEN = 60
BN_EPS = 1e-5
LRELU_SLOPE = 0.01  # torch.nn.LeakyReLU default


def conv_out_len(L, k, s):
    return (L - k) // s + 1


# ------------------------------ fused Pallas kernel ---------------------------
def _bn_lrelu(y, gb_ref, eps, slope):
    """Training-mode BatchNorm over rows (per column) + LeakyReLU."""
    inv_m = 1.0 / y.shape[0]
    gamma = gb_ref[pl.ds(0, 1), :]
    beta = gb_ref[pl.ds(1, 1), :]
    mean = jnp.sum(y, axis=0, keepdims=True) * inv_m
    diff = y - mean
    var = jnp.sum(diff * diff, axis=0, keepdims=True) * inv_m   # biased variance
    scale = gamma * jax.lax.rsqrt(var + eps)
    z = diff * scale + beta
    return jnp.where(z >= 0, z, slope * z)


def _fused_forward_kernel(p1_ref, w1_ref, w2s_ref, w3r_ref,
                          gb1_ref, gb2_ref, gb3_ref,
                          o_ref, act1_ref, act2_ref,
                          *, B, L1, L2, K, eps, slope):
    # ---- layer 1: conv1 as im2col matmul, + BN + LeakyReLU -------------------
    y1 = jnp.dot(p1_ref[...], w1_ref[...], preferred_element_type=jnp.float32)
    act1_ref[...] = _bn_lrelu(y1, gb1_ref, eps, slope)      # rows: (parity, m, b)

    # ---- layer 2: stride-2 conv2 = 10 matmuls over contiguous act1 slices ----
    half = (L1 // 2) * B
    n2 = L2 * B
    c2 = act2_ref.shape[1]
    y2 = jnp.zeros((n2, c2), jnp.float32)
    for p in range(2):
        for q in range(K // 2):
            k = 2 * q + p
            a = act1_ref[pl.ds(p * half + q * B, n2), :]     # (L2*B, C1) contiguous
            y2 = y2 + jnp.dot(a, w2s_ref[k], preferred_element_type=jnp.float32)
    act2_ref[...] = _bn_lrelu(y2, gb2_ref, eps, slope)       # rows: (l2, b)

    # ---- layer 3: fc1 as sum over positions l of (B,C2) @ (C2,F) -------------
    F = o_ref.shape[1]
    fc = jnp.zeros((B, F), jnp.float32)
    for l in range(L2):
        a = act2_ref[pl.ds(l * B, B), :]                     # (B, C2) contiguous
        fc = fc + jnp.dot(a, w3r_ref[l], preferred_element_type=jnp.float32)
    o_ref[...] = _bn_lrelu(fc, gb3_ref, eps, slope)


# ------------------------------ wrapper ----------------------------------------
def adverserail_cnn_forward(x, params):
    """x: (B, 1, nbeats) f32 -> (B, NUM_HIDDEN) f32.  One fused pallas_call."""
    B, cin, L0 = x.shape
    assert cin == 1
    C1, C2 = NUM_CHANN
    F = NUM_HIDDEN
    L1 = conv_out_len(L0, KER, STRIDE)
    L2 = conv_out_len(L1, KER, STRIDE)
    assert STRIDE == 2 and KER % 2 == 0 and L1 % 2 == 0
    assert (KER // 2 - 1) + L2 <= L1 // 2

    x2 = x[:, 0, :].astype(jnp.float32)                       # (B, L0)

    # Layer-1 im2col (host prep on the tiny raw input; fused by XLA into the
    # single kernel launch).  Row order (parity p, m=l1//2, batch b) so that
    # the in-kernel stride-2 conv2 only needs contiguous row slices.
    m_idx = jnp.arange(L1 // 2)
    p_idx = jnp.arange(2)
    k_idx = jnp.arange(KER)
    starts = 4 * m_idx[None, :] + 2 * p_idx[:, None]          # (2, L1//2)
    gather_idx = starts[:, :, None] + k_idx[None, None, :]    # (2, L1//2, K)
    patches = x2[:, gather_idx]                               # (B, 2, L1//2, K)
    p1 = jnp.transpose(patches, (1, 2, 0, 3)).reshape(L1 * B, KER)

    # Host-side weight rearrangement (tiny, static).
    w1 = params["conv0_w"].reshape(C1, KER).T                 # (K, C1)
    w2s = jnp.transpose(params["conv1_w"], (2, 1, 0))         # (K, C1, C2)
    w3r = jnp.transpose(params["fc_w"].reshape(F, C2, L2), (2, 1, 0))  # (L2, C2, F)

    gb1 = jnp.stack([params["conv0_gamma"], params["conv0_beta"]])     # (2, C1)
    gb2 = jnp.stack([params["conv1_gamma"], params["conv1_beta"]])     # (2, C2)
    gb3 = jnp.stack([params["fc_gamma"], params["fc_beta"]])           # (2, F)
    # NOTE: conv/linear biases are intentionally not passed to the kernel:
    # training-mode BN subtracts the per-channel batch mean, so they cancel.

    vmem = pl.BlockSpec(memory_space=pltpu.MemorySpace.VMEM)
    kernel = functools.partial(_fused_forward_kernel, B=B, L1=L1, L2=L2, K=KER,
                               eps=BN_EPS, slope=LRELU_SLOPE)
    return pl.pallas_call(
        kernel,
        out_shape=jax.ShapeDtypeStruct((B, F), jnp.float32),
        in_specs=[vmem] * 7,
        out_specs=vmem,
        scratch_shapes=[
            pltpu.VMEM((L1 * B, C1), jnp.float32),   # layer-1 activation
            pltpu.VMEM((L2 * B, C2), jnp.float32),   # layer-2 activation
        ],
    )(p1.astype(jnp.float32), w1.astype(jnp.float32), w2s.astype(jnp.float32),
      w3r.astype(jnp.float32), gb1.astype(jnp.float32), gb2.astype(jnp.float32),
      gb3.astype(jnp.float32))


# ------------------------------ parameters -------------------------------------
def init_params(key, nbeats):
    C1, C2 = NUM_CHANN
    L1 = conv_out_len(nbeats, KER, STRIDE)
    L2 = conv_out_len(L1, KER, STRIDE)
    params = {}
    for name, co, ci in [("conv0", C1, 1), ("conv1", C2, C1)]:
        key, k1, k2, k3, k4 = jax.random.split(key, 5)
        params[f"{name}_w"] = 0.1 * jax.random.normal(k1, (co, ci, KER), jnp.float32)
        params[f"{name}_b"] = 0.1 * jax.random.normal(k2, (co,), jnp.float32)
        params[f"{name}_gamma"] = 1.0 + 0.1 * jax.random.normal(k3, (co,), jnp.float32)
        params[f"{name}_beta"] = 0.1 * jax.random.normal(k4, (co,), jnp.float32)
    fin = C2 * L2
    key, k1, k2, k3, k4 = jax.random.split(key, 5)
    params["fc_w"] = 0.1 * jax.random.normal(k1, (NUM_HIDDEN, fin), jnp.float32)
    params["fc_b"] = 0.1 * jax.random.normal(k2, (NUM_HIDDEN,), jnp.float32)
    params["fc_gamma"] = 1.0 + 0.1 * jax.random.normal(k3, (NUM_HIDDEN,), jnp.float32)
    params["fc_beta"] = 0.1 * jax.random.normal(k4, (NUM_HIDDEN,), jnp.float32)
    return params


# --------------------------- pure-JAX reference ---------------------------------
def _reference_forward(x, params):
    """Direct re-implementation of the PyTorch forward (with biases)."""
    hp = jax.lax.Precision.HIGHEST
    B = x.shape[0]
    out = x
    for i in range(len(NUM_CHANN)):
        w = params[f"conv{i}_w"]
        co, ci, K = w.shape
        Lin = out.shape[2]
        Lout = conv_out_len(Lin, K, STRIDE)
        idx = jnp.arange(Lout)[:, None] * STRIDE + jnp.arange(K)[None, :]
        pch = out[:, :, idx]                                  # (B, Cin, Lout, K)
        pch = jnp.transpose(pch, (0, 2, 1, 3)).reshape(B * Lout, ci * K)
        y = jnp.dot(pch, w.reshape(co, ci * K).T, precision=hp) + params[f"conv{i}_b"]
        mean = jnp.mean(y, axis=0, keepdims=True)
        var = jnp.mean((y - mean) ** 2, axis=0, keepdims=True)
        z = (y - mean) * jax.lax.rsqrt(var + BN_EPS) * params[f"conv{i}_gamma"] \
            + params[f"conv{i}_beta"]
        z = jnp.where(z >= 0, z, LRELU_SLOPE * z)
        out = z.reshape(B, Lout, co).transpose(0, 2, 1)       # (B, C, L)
    out = out.reshape(B, -1)                                  # torch .view(B, -1)
    y = jnp.dot(out, params["fc_w"].T, precision=hp) + params["fc_b"]
    mean = jnp.mean(y, axis=0, keepdims=True)
    var = jnp.mean((y - mean) ** 2, axis=0, keepdims=True)
    z = (y - mean) * jax.lax.rsqrt(var + BN_EPS) * params["fc_gamma"] + params["fc_beta"]
    return jnp.where(z >= 0, z, LRELU_SLOPE * z)


# ----------------------------------- main ---------------------------------------
if __name__ == "__main__":
    B = 2
    NBEATS = 128  # input length; survives two k=10, s=2 convs -> L1=60, L2=26

    key = jax.random.PRNGKey(0)
    key, kx = jax.random.split(key)
    x = jax.random.normal(kx, (B, 1, NBEATS), jnp.float32)
    params = init_params(key, NBEATS)

    fwd = jax.jit(adverserail_cnn_forward)
    out = jax.block_until_ready(fwd(x, params))
    assert out.shape == (B, NUM_HIDDEN), out.shape

    ref = jax.block_until_ready(_reference_forward(x, params))
    # Tolerance note: the final BatchNorm runs over a batch of only 2 rows with
    # eps=1e-5, which can amplify f32 rounding differences by up to 1/sqrt(eps)
    # (~316x) when a feature's two rows nearly coincide, hence the 2e-3 atol.
    if not bool(jnp.allclose(out, ref, atol=2e-3, rtol=2e-3)):
        err = float(jnp.max(jnp.abs(out - ref)))
        raise AssertionError(f"Pallas output does not match JAX reference (max err {err})")

    print("KERNEL_OK")
</pallas_src>

<mosaic_0001>
module attributes {stable_mosaic.version = 11 : i64} {
  func.func @_fused_forward_kernel(%arg0: memref<120x10xf32, #tpu.memory_space<vmem>>, %arg1: memref<10x20xf32, #tpu.memory_space<vmem>>, %arg2: memref<10x20x10xf32, #tpu.memory_space<vmem>>, %arg3: memref<26x10x60xf32, #tpu.memory_space<vmem>>, %arg4: memref<2x20xf32, #tpu.memory_space<vmem>>, %arg5: memref<2x10xf32, #tpu.memory_space<vmem>>, %arg6: memref<2x60xf32, #tpu.memory_space<vmem>>, %arg7: memref<2x60xf32, #tpu.memory_space<vmem>>, %arg8: memref<120x20xf32, #tpu.memory_space<vmem>>, %arg9: memref<52x10xf32, #tpu.memory_space<vmem>>) attributes {dimension_semantics = [], scalar_prefetch = 0 : i64, scratch_operands = 2 : i64, tpu.core_type = #tpu.core_type<tc>} {
    %c0 = arith.constant 0 : index
    %c0_0 = arith.constant 0 : index
    %0 = vector.load %arg0[%c0, %c0_0] : memref<120x10xf32, #tpu.memory_space<vmem>>, vector<120x10xf32>
    %c0_1 = arith.constant 0 : index
    %c0_2 = arith.constant 0 : index
    %1 = vector.load %arg1[%c0_1, %c0_2] : memref<10x20xf32, #tpu.memory_space<vmem>>, vector<10x20xf32>
    %cst = arith.constant dense<0.000000e+00> : vector<120x20xf32>
    %2 = tpu.matmul %0, %1, %cst {dimension_numbers = #tpu.dot_dimension_numbers<[1], [0], [0], [1], [0, 0, 1, 1], [], []>} : vector<120x10xf32>, vector<10x20xf32>, vector<120x20xf32> -> vector<120x20xf32>
    %c0_3 = arith.constant 0 : index
    %c0_4 = arith.constant 0 : index
    %3 = vector.load %arg4[%c0_3, %c0_4] : memref<2x20xf32, #tpu.memory_space<vmem>>, vector<1x20xf32>
    %c1 = arith.constant 1 : index
    %c0_5 = arith.constant 0 : index
    %4 = vector.load %arg4[%c1, %c0_5] : memref<2x20xf32, #tpu.memory_space<vmem>>, vector<1x20xf32>
    %cst_6 = arith.constant dense<0.000000e+00> : vector<20xf32>
    %5 = vector.multi_reduction <add>, %2, %cst_6 [0] : vector<120x20xf32> to vector<20xf32>
    %6 = vector.shape_cast %5 : vector<20xf32> to vector<1x20xf32>
    %cst_7 = arith.constant 0.00833333377 : f32
    %7 = vector.broadcast %cst_7 : f32 to vector<1x20xf32>
    %8 = arith.mulf %6, %7 : vector<1x20xf32>
    %9 = vector.broadcast %8 : vector<1x20xf32> to vector<120x20xf32>
    %10 = arith.subf %2, %9 : vector<120x20xf32>
    %11 = arith.mulf %10, %10 : vector<120x20xf32>
    %cst_8 = arith.constant dense<0.000000e+00> : vector<20xf32>
    %12 = vector.multi_reduction <add>, %11, %cst_8 [0] : vector<120x20xf32> to vector<20xf32>
    %13 = vector.shape_cast %12 : vector<20xf32> to vector<1x20xf32>
    %cst_9 = arith.constant 0.00833333377 : f32
    %14 = vector.broadcast %cst_9 : f32 to vector<1x20xf32>
    %15 = arith.mulf %13, %14 : vector<1x20xf32>
    %cst_10 = arith.constant 9.99999974E-6 : f32
    %16 = vector.broadcast %cst_10 : f32 to vector<1x20xf32>
    %17 = arith.addf %15, %16 : vector<1x20xf32>
    %18 = math.rsqrt %17 : vector<1x20xf32>
    %19 = arith.mulf %3, %18 : vector<1x20xf32>
    %20 = vector.broadcast %19 : vector<1x20xf32> to vector<120x20xf32>
    %21 = arith.mulf %10, %20 : vector<120x20xf32>
    %22 = vector.broadcast %4 : vector<1x20xf32> to vector<120x20xf32>
    %23 = arith.addf %21, %22 : vector<120x20xf32>
    %cst_11 = arith.constant 0.000000e+00 : f32
    %24 = vector.broadcast %cst_11 : f32 to vector<120x20xf32>
    %25 = arith.cmpf oge, %23, %24 : vector<120x20xf32>
    %cst_12 = arith.constant 0.00999999977 : f32
    %26 = vector.broadcast %cst_12 : f32 to vector<120x20xf32>
    %27 = arith.mulf %26, %23 : vector<120x20xf32>
    %28 = arith.select %25, %23, %27 : vector<120x20xi1>, vector<120x20xf32>
    %c0_13 = arith.constant 0 : index
    %c0_14 = arith.constant 0 : index
    %29 = vector.load %arg8[%c0_13, %c0_14] : memref<120x20xf32, #tpu.memory_space<vmem>>, vector<120x20xf32>
    tpu.vector_store %arg8[%c0_13, %c0_14], %28 {strides = array<i32>} : memref<120x20xf32, #tpu.memory_space<vmem>>, vector<120x20xf32>,
    %cst_15 = arith.constant 0.000000e+00 : f32
    %30 = vector.broadcast %cst_15 : f32 to vector<52x10xf32>
    %c0_16 = arith.constant 0 : index
    %c0_17 = arith.constant 0 : index
    %31 = vector.load %arg8[%c0_16, %c0_17] : memref<120x20xf32, #tpu.memory_space<vmem>>, vector<52x20xf32>
    %c0_18 = arith.constant 0 : index
    %c0_19 = arith.constant 0 : index
    %c0_20 = arith.constant 0 : index
    %32 = vector.load %arg2[%c0_18, %c0_19, %c0_20] : memref<10x20x10xf32, #tpu.memory_space<vmem>>, vector<1x20x10xf32>
    %33 = vector.shape_cast %32 : vector<1x20x10xf32> to vector<20x10xf32>
    %cst_21 = arith.constant dense<0.000000e+00> : vector<52x10xf32>
    %34 = tpu.matmul %31, %33, %cst_21 {dimension_numbers = #tpu.dot_dimension_numbers<[1], [0], [0], [1], [0, 0, 1, 1], [], []>} : vector<52x20xf32>, vector<20x10xf32>, vector<52x10xf32> -> vector<52x10xf32>
    %35 = arith.addf %30, %34 : vector<52x10xf32>
    %c2 = arith.constant 2 : index
    %c0_22 = arith.constant 0 : index
    %36 = vector.load %arg8[%c2, %c0_22] : memref<120x20xf32, #tpu.memory_space<vmem>>, vector<52x20xf32>
    %c2_23 = arith.constant 2 : index
    %c0_24 = arith.constant 0 : index
    %c0_25 = arith.constant 0 : index
    %37 = vector.load %arg2[%c2_23, %c0_24, %c0_25] : memref<10x20x10xf32, #tpu.memory_space<vmem>>, vector<1x20x10xf32>
    %38 = vector.shape_cast %37 : vector<1x20x10xf32> to vector<20x10xf32>
    %cst_26 = arith.constant dense<0.000000e+00> : vector<52x10xf32>
    %39 = tpu.matmul %36, %38, %cst_26 {dimension_numbers = #tpu.dot_dimension_numbers<[1], [0], [0], [1], [0, 0, 1, 1], [], []>} : vector<52x20xf32>, vector<20x10xf32>, vector<52x10xf32> -> vector<52x10xf32>
    %40 = arith.addf %35, %39 : vector<52x10xf32>
    %c4 = arith.constant 4 : index
    %c0_27 = arith.constant 0 : index
    %41 = vector.load %arg8[%c4, %c0_27] : memref<120x20xf32, #tpu.memory_space<vmem>>, vector<52x20xf32>
    %c4_28 = arith.constant 4 : index
    %c0_29 = arith.constant 0 : index
    %c0_30 = arith.constant 0 : index
    %42 = vector.load %arg2[%c4_28, %c0_29, %c0_30] : memref<10x20x10xf32, #tpu.memory_space<vmem>>, vector<1x20x10xf32>
    %43 = vector.shape_cast %42 : vector<1x20x10xf32> to vector<20x10xf32>
    %cst_31 = arith.constant dense<0.000000e+00> : vector<52x10xf32>
    %44 = tpu.matmul %41, %43, %cst_31 {dimension_numbers = #tpu.dot_dimension_numbers<[1], [0], [0], [1], [0, 0, 1, 1], [], []>} : vector<52x20xf32>, vector<20x10xf32>, vector<52x10xf32> -> vector<52x10xf32>
    %45 = arith.addf %40, %44 : vector<52x10xf32>
    %c6 = arith.constant 6 : index
    %c0_32 = arith.constant 0 : index
    %46 = vector.load %arg8[%c6, %c0_32] : memref<120x20xf32, #tpu.memory_space<vmem>>, vector<52x20xf32>
    %c6_33 = arith.constant 6 : index
    %c0_34 = arith.constant 0 : index
    %c0_35 = arith.constant 0 : index
    %47 = vector.load %arg2[%c6_33, %c0_34, %c0_35] : memref<10x20x10xf32, #tpu.memory_space<vmem>>, vector<1x20x10xf32>
    %48 = vector.shape_cast %47 : vector<1x20x10xf32> to vector<20x10xf32>
    %cst_36 = arith.constant dense<0.000000e+00> : vector<52x10xf32>
    %49 = tpu.matmul %46, %48, %cst_36 {dimension_numbers = #tpu.dot_dimension_numbers<[1], [0], [0], [1], [0, 0, 1, 1], [], []>} : vector<52x20xf32>, vector<20x10xf32>, vector<52x10xf32> -> vector<52x10xf32>
    %50 = arith.addf %45, %49 : vector<52x10xf32>
    %c8 = arith.constant 8 : index
    %c0_37 = arith.constant 0 : index
    %51 = vector.load %arg8[%c8, %c0_37] : memref<120x20xf32, #tpu.memory_space<vmem>>, vector<52x20xf32>
    %c8_38 = arith.constant 8 : index
    %c0_39 = arith.constant 0 : index
    %c0_40 = arith.constant 0 : index
    %52 = vector.load %arg2[%c8_38, %c0_39, %c0_40] : memref<10x20x10xf32, #tpu.memory_space<vmem>>, vector<1x20x10xf32>
    %53 = vector.shape_cast %52 : vector<1x20x10xf32> to vector<20x10xf32>
    %cst_41 = arith.constant dense<0.000000e+00> : vector<52x10xf32>
    %54 = tpu.matmul %51, %53, %cst_41 {dimension_numbers = #tpu.dot_dimension_numbers<[1], [0], [0], [1], [0, 0, 1, 1], [], []>} : vector<52x20xf32>, vector<20x10xf32>, vector<52x10xf32> -> vector<52x10xf32>
    %55 = arith.addf %50, %54 : vector<52x10xf32>
    %c60 = arith.constant 60 : index
    %c0_42 = arith.constant 0 : index
    %56 = vector.load %arg8[%c60, %c0_42] : memref<120x20xf32, #tpu.memory_space<vmem>>, vector<52x20xf32>
    %c1_43 = arith.constant 1 : index
    %c0_44 = arith.constant 0 : index
    %c0_45 = arith.constant 0 : index
    %57 = vector.load %arg2[%c1_43, %c0_44, %c0_45] : memref<10x20x10xf32, #tpu.memory_space<vmem>>, vector<1x20x10xf32>
    %58 = vector.shape_cast %57 : vector<1x20x10xf32> to vector<20x10xf32>
    %cst_46 = arith.constant dense<0.000000e+00> : vector<52x10xf32>
    %59 = tpu.matmul %56, %58, %cst_46 {dimension_numbers = #tpu.dot_dimension_numbers<[1], [0], [0], [1], [0, 0, 1, 1], [], []>} : vector<52x20xf32>, vector<20x10xf32>, vector<52x10xf32> -> vector<52x10xf32>
    %60 = arith.addf %55, %59 : vector<52x10xf32>
    %c62 = arith.constant 62 : index
    %c0_47 = arith.constant 0 : index
    %61 = vector.load %arg8[%c62, %c0_47] : memref<120x20xf32, #tpu.memory_space<vmem>>, vector<52x20xf32>
    %c3 = arith.constant 3 : index
    %c0_48 = arith.constant 0 : index
    %c0_49 = arith.constant 0 : index
    %62 = vector.load %arg2[%c3, %c0_48, %c0_49] : memref<10x20x10xf32, #tpu.memory_space<vmem>>, vector<1x20x10xf32>
    %63 = vector.shape_cast %62 : vector<1x20x10xf32> to vector<20x10xf32>
    %cst_50 = arith.constant dense<0.000000e+00> : vector<52x10xf32>
    %64 = tpu.matmul %61, %63, %cst_50 {dimension_numbers = #tpu.dot_dimension_numbers<[1], [0], [0], [1], [0, 0, 1, 1], [], []>} : vector<52x20xf32>, vector<20x10xf32>, vector<52x10xf32> -> vector<52x10xf32>
    %65 = arith.addf %60, %64 : vector<52x10xf32>
    %c64 = arith.constant 64 : index
    %c0_51 = arith.constant 0 : index
    %66 = vector.load %arg8[%c64, %c0_51] : memref<120x20xf32, #tpu.memory_space<vmem>>, vector<52x20xf32>
    %c5 = arith.constant 5 : index
    %c0_52 = arith.constant 0 : index
    %c0_53 = arith.constant 0 : index
    %67 = vector.load %arg2[%c5, %c0_52, %c0_53] : memref<10x20x10xf32, #tpu.memory_space<vmem>>, vector<1x20x10xf32>
    %68 = vector.shape_cast %67 : vector<1x20x10xf32> to vector<20x10xf32>
    %cst_54 = arith.constant dense<0.000000e+00> : vector<52x10xf32>
    %69 = tpu.matmul %66, %68, %cst_54 {dimension_numbers = #tpu.dot_dimension_numbers<[1], [0], [0], [1], [0, 0, 1, 1], [], []>} : vector<52x20xf32>, vector<20x10xf32>, vector<52x10xf32> -> vector<52x10xf32>
    %70 = arith.addf %65, %69 : vector<52x10xf32>
    %c66 = arith.constant 66 : index
    %c0_55 = arith.constant 0 : index
    %71 = vector.load %arg8[%c66, %c0_55] : memref<120x20xf32, #tpu.memory_space<vmem>>, vector<52x20xf32>
    %c7 = arith.constant 7 : index
    %c0_56 = arith.constant 0 : index
    %c0_57 = arith.constant 0 : index
    %72 = vector.load %arg2[%c7, %c0_56, %c0_57] : memref<10x20x10xf32, #tpu.memory_space<vmem>>, vector<1x20x10xf32>
    %73 = vector.shape_cast %72 : vector<1x20x10xf32> to vector<20x10xf32>
    %cst_58 = arith.constant dense<0.000000e+00> : vector<52x10xf32>
    %74 = tpu.matmul %71, %73, %cst_58 {dimension_numbers = #tpu.dot_dimension_numbers<[1], [0], [0], [1], [0, 0, 1, 1], [], []>} : vector<52x20xf32>, vector<20x10xf32>, vector<52x10xf32> -> vector<52x10xf32>
    %75 = arith.addf %70, %74 : vector<52x10xf32>
    %c68 = arith.constant 68 : index
    %c0_59 = arith.constant 0 : index
    %76 = vector.load %arg8[%c68, %c0_59] : memref<120x20xf32, #tpu.memory_space<vmem>>, vector<52x20xf32>
    %c9 = arith.constant 9 : index
    %c0_60 = arith.constant 0 : index
    %c0_61 = arith.constant 0 : index
    %77 = vector.load %arg2[%c9, %c0_60, %c0_61] : memref<10x20x10xf32, #tpu.memory_space<vmem>>, vector<1x20x10xf32>
    %78 = vector.shape_cast %77 : vector<1x20x10xf32> to vector<20x10xf32>
    %cst_62 = arith.constant dense<0.000000e+00> : vector<52x10xf32>
    %79 = tpu.matmul %76, %78, %cst_62 {dimension_numbers = #tpu.dot_dimension_numbers<[1], [0], [0], [1], [0, 0, 1, 1], [], []>} : vector<52x20xf32>, vector<20x10xf32>, vector<52x10xf32> -> vector<52x10xf32>
    %80 = arith.addf %75, %79 : vector<52x10xf32>
    %c0_63 = arith.constant 0 : index
    %c0_64 = arith.constant 0 : index
    %81 = vector.load %arg5[%c0_63, %c0_64] : memref<2x10xf32, #tpu.memory_space<vmem>>, vector<1x10xf32>
    %c1_65 = arith.constant 1 : index
    %c0_66 = arith.constant 0 : index
    %82 = vector.load %arg5[%c1_65, %c0_66] : memref<2x10xf32, #tpu.memory_space<vmem>>, vector<1x10xf32>
    %cst_67 = arith.constant dense<0.000000e+00> : vector<10xf32>
    %83 = vector.multi_reduction <add>, %80, %cst_67 [0] : vector<52x10xf32> to vector<10xf32>
    %84 = vector.shape_cast %83 : vector<10xf32> to vector<1x10xf32>
    %cst_68 = arith.constant 0.0192307699 : f32
    %85 = vector.broadcast %cst_68 : f32 to vector<1x10xf32>
    %86 = arith.mulf %84, %85 : vector<1x10xf32>
    %87 = vector.broadcast %86 : vector<1x10xf32> to vector<52x10xf32>
    %88 = arith.subf %80, %87 : vector<52x10xf32>
    %89 = arith.mulf %88, %88 : vector<52x10xf32>
    %cst_69 = arith.constant dense<0.000000e+00> : vector<10xf32>
    %90 = vector.multi_reduction <add>, %89, %cst_69 [0] : vector<52x10xf32> to vector<10xf32>
    %91 = vector.shape_cast %90 : vector<10xf32> to vector<1x10xf32>
    %cst_70 = arith.constant 0.0192307699 : f32
    %92 = vector.broadcast %cst_70 : f32 to vector<1x10xf32>
    %93 = arith.mulf %91, %92 : vector<1x10xf32>
    %cst_71 = arith.constant 9.99999974E-6 : f32
    %94 = vector.broadcast %cst_71 : f32 to vector<1x10xf32>
    %95 = arith.addf %93, %94 : vector<1x10xf32>
    %96 = math.rsqrt %95 : vector<1x10xf32>
    %97 = arith.mulf %81, %96 : vector<1x10xf32>
    %98 = vector.broadcast %97 : vector<1x10xf32> to vector<52x10xf32>
    %99 = arith.mulf %88, %98 : vector<52x10xf32>
    %100 = vector.broadcast %82 : vector<1x10xf32> to vector<52x10xf32>
    %101 = arith.addf %99, %100 : vector<52x10xf32>
    %cst_72 = arith.constant 0.000000e+00 : f32
    %102 = vector.broadcast %cst_72 : f32 to vector<52x10xf32>
    %103 = arith.cmpf oge, %101, %102 : vector<52x10xf32>
    %cst_73 = arith.constant 0.00999999977 : f32
    %104 = vector.broadcast %cst_73 : f32 to vector<52x10xf32>
    %105 = arith.mulf %104, %101 : vector<52x10xf32>
    %106 = arith.select %103, %101, %105 : vector<52x10xi1>, vector<52x10xf32>
    %c0_74 = arith.constant 0 : index
    %c0_75 = arith.constant 0 : index
    %107 = vector.load %arg9[%c0_74, %c0_75] : memref<52x10xf32, #tpu.memory_space<vmem>>, vector<52x10xf32>
    tpu.vector_store %arg9[%c0_74, %c0_75], %106 {strides = array<i32>} : memref<52x10xf32, #tpu.memory_space<vmem>>, vector<52x10xf32>,
    %cst_76 = arith.constant 0.000000e+00 : f32
    %108 = vector.broadcast %cst_76 : f32 to vector<2x60xf32>
    %c0_77 = arith.constant 0 : index
    %c0_78 = arith.constant 0 : index
    %109 = vector.load %arg9[%c0_77, %c0_78] : memref<52x10xf32, #tpu.memory_space<vmem>>, vector<2x10xf32>
    %c0_79 = arith.constant 0 : index
    %c0_80 = arith.constant 0 : index
    %c0_81 = arith.constant 0 : index
    %110 = vector.load %arg3[%c0_79, %c0_80, %c0_81] : memref<26x10x60xf32, #tpu.memory_space<vmem>>, vector<1x10x60xf32>
    %111 = vector.shape_cast %110 : vector<1x10x60xf32> to vector<10x60xf32>
    %cst_82 = arith.constant dense<0.000000e+00> : vector<2x60xf32>
    %112 = tpu.matmul %109, %111, %cst_82 {dimension_numbers = #tpu.dot_dimension_numbers<[1], [0], [0], [1], [0, 0, 1, 1], [], []>} : vector<2x10xf32>, vector<10x60xf32>, vector<2x60xf32> -> vector<2x60xf32>
    %113 = arith.addf %108, %112 : vector<2x60xf32>
    %c2_83 = arith.constant 2 : index
    %c0_84 = arith.constant 0 : index
    %114 = vector.load %arg9[%c2_83, %c0_84] : memref<52x10xf32, #tpu.memory_space<vmem>>, vector<2x10xf32>
    %c1_85 = arith.constant 1 : index
    %c0_86 = arith.constant 0 : index
    %c0_87 = arith.constant 0 : index
    %115 = vector.load %arg3[%c1_85, %c0_86, %c0_87] : memref<26x10x60xf32, #tpu.memory_space<vmem>>, vector<1x10x60xf32>
    %116 = vector.shape_cast %115 : vector<1x10x60xf32> to vector<10x60xf32>
    %cst_88 = arith.constant dense<0.000000e+00> : vector<2x60xf32>
    %117 = tpu.matmul %114, %116, %cst_88 {dimension_numbers = #tpu.dot_dimension_numbers<[1], [0], [0], [1], [0, 0, 1, 1], [], []>} : vector<2x10xf32>, vector<10x60xf32>, vector<2x60xf32> -> vector<2x60xf32>
    %118 = arith.addf %113, %117 : vector<2x60xf32>
    %c4_89 = arith.constant 4 : index
    %c0_90 = arith.constant 0 : index
    %119 = vector.load %arg9[%c4_89, %c0_90] : memref<52x10xf32, #tpu.memory_space<vmem>>, vector<2x10xf32>
    %c2_91 = arith.constant 2 : index
    %c0_92 = arith.constant 0 : index
    %c0_93 = arith.constant 0 : index
    %120 = vector.load %arg3[%c2_91, %c0_92, %c0_93] : memref<26x10x60xf32, #tpu.memory_space<vmem>>, vector<1x10x60xf32>
    %121 = vector.shape_cast %120 : vector<1x10x60xf32> to vector<10x60xf32>
    %cst_94 = arith.constant dense<0.000000e+00> : vector<2x60xf32>
    %122 = tpu.matmul %119, %121, %cst_94 {dimension_numbers = #tpu.dot_dimension_numbers<[1], [0], [0], [1], [0, 0, 1, 1], [], []>} : vector<2x10xf32>, vector<10x60xf32>, vector<2x60xf32> -> vector<2x60xf32>
    %123 = arith.addf %118, %122 : vector<2x60xf32>
    %c6_95 = arith.constant 6 : index
    %c0_96 = arith.constant 0 : index
    %124 = vector.load %arg9[%c6_95, %c0_96] : memref<52x10xf32, #tpu.memory_space<vmem>>, vector<2x10xf32>
    %c3_97 = arith.constant 3 : index
    %c0_98 = arith.constant 0 : index
    %c0_99 = arith.constant 0 : index
    %125 = vector.load %arg3[%c3_97, %c0_98, %c0_99] : memref<26x10x60xf32, #tpu.memory_space<vmem>>, vector<1x10x60xf32>
    %126 = vector.shape_cast %125 : vector<1x10x60xf32> to vector<10x60xf32>
    %cst_100 = arith.constant dense<0.000000e+00> : vector<2x60xf32>
    %127 = tpu.matmul %124, %126, %cst_100 {dimension_numbers = #tpu.dot_dimension_numbers<[1], [0], [0], [1], [0, 0, 1, 1], [], []>} : vector<2x10xf32>, vector<10x60xf32>, vector<2x60xf32> -> vector<2x60xf32>
    %128 = arith.addf %123, %127 : vector<2x60xf32>
    %c8_101 = arith.constant 8 : index
    %c0_102 = arith.constant 0 : index
    %129 = vector.load %arg9[%c8_101, %c0_102] : memref<52x10xf32, #tpu.memory_space<vmem>>, vector<2x10xf32>
    %c4_103 = arith.constant 4 : index
    %c0_104 = arith.constant 0 : index
    %c0_105 = arith.constant 0 : index
    %130 = vector.load %arg3[%c4_103, %c0_104, %c0_105] : memref<26x10x60xf32, #tpu.memory_space<vmem>>, vector<1x10x60xf32>
    %131 = vector.shape_cast %130 : vector<1x10x60xf32> to vector<10x60xf32>
    %cst_106 = arith.constant dense<0.000000e+00> : vector<2x60xf32>
    %132 = tpu.matmul %129, %131, %cst_106 {dimension_numbers = #tpu.dot_dimension_numbers<[1], [0], [0], [1], [0, 0, 1, 1], [], []>} : vector<2x10xf32>, vector<10x60xf32>, vector<2x60xf32> -> vector<2x60xf32>
    %133 = arith.addf %128, %132 : vector<2x60xf32>
    %c10 = arith.constant 10 : index
    %c0_107 = arith.constant 0 : index
    %134 = vector.load %arg9[%c10, %c0_107] : memref<52x10xf32, #tpu.memory_space<vmem>>, vector<2x10xf32>
    %c5_108 = arith.constant 5 : index
    %c0_109 = arith.constant 0 : index
    %c0_110 = arith.constant 0 : index
    %135 = vector.load %arg3[%c5_108, %c0_109, %c0_110] : memref<26x10x60xf32, #tpu.memory_space<vmem>>, vector<1x10x60xf32>
    %136 = vector.shape_cast %135 : vector<1x10x60xf32> to vector<10x60xf32>
    %cst_111 = arith.constant dense<0.000000e+00> : vector<2x60xf32>
    %137 = tpu.matmul %134, %136, %cst_111 {dimension_numbers = #tpu.dot_dimension_numbers<[1], [0], [0], [1], [0, 0, 1, 1], [], []>} : vector<2x10xf32>, vector<10x60xf32>, vector<2x60xf32> -> vector<2x60xf32>
    %138 = arith.addf %133, %137 : vector<2x60xf32>
    %c12 = arith.constant 12 : index
    %c0_112 = arith.constant 0 : index
    %139 = vector.load %arg9[%c12, %c0_112] : memref<52x10xf32, #tpu.memory_space<vmem>>, vector<2x10xf32>
    %c6_113 = arith.constant 6 : index
    %c0_114 = arith.constant 0 : index
    %c0_115 = arith.constant 0 : index
    %140 = vector.load %arg3[%c6_113, %c0_114, %c0_115] : memref<26x10x60xf32, #tpu.memory_space<vmem>>, vector<1x10x60xf32>
    %141 = vector.shape_cast %140 : vector<1x10x60xf32> to vector<10x60xf32>
    %cst_116 = arith.constant dense<0.000000e+00> : vector<2x60xf32>
    %142 = tpu.matmul %139, %141, %cst_116 {dimension_numbers = #tpu.dot_dimension_numbers<[1], [0], [0], [1], [0, 0, 1, 1], [], []>} : vector<2x10xf32>, vector<10x60xf32>, vector<2x60xf32> -> vector<2x60xf32>
    %143 = arith.addf %138, %142 : vector<2x60xf32>
    %c14 = arith.constant 14 : index
    %c0_117 = arith.constant 0 : index
    %144 = vector.load %arg9[%c14, %c0_117] : memref<52x10xf32, #tpu.memory_space<vmem>>, vector<2x10xf32>
    %c7_118 = arith.constant 7 : index
    %c0_119 = arith.constant 0 : index
    %c0_120 = arith.constant 0 : index
    %145 = vector.load %arg3[%c7_118, %c0_119, %c0_120] : memref<26x10x60xf32, #tpu.memory_space<vmem>>, vector<1x10x60xf32>
    %146 = vector.shape_cast %145 : vector<1x10x60xf32> to vector<10x60xf32>
    %cst_121 = arith.constant dense<0.000000e+00> : vector<2x60xf32>
    %147 = tpu.matmul %144, %146, %cst_121 {dimension_numbers = #tpu.dot_dimension_numbers<[1], [0], [0], [1], [0, 0, 1, 1], [], []>} : vector<2x10xf32>, vector<10x60xf32>, vector<2x60xf32> -> vector<2x60xf32>
    %148 = arith.addf %143, %147 : vector<2x60xf32>
    %c16 = arith.constant 16 : index
    %c0_122 = arith.constant 0 : index
    %149 = vector.load %arg9[%c16, %c0_122] : memref<52x10xf32, #tpu.memory_space<vmem>>, vector<2x10xf32>
    %c8_123 = arith.constant 8 : index
    %c0_124 = arith.constant 0 : index
    %c0_125 = arith.constant 0 : index
    %150 = vector.load %arg3[%c8_123, %c0_124, %c0_125] : memref<26x10x60xf32, #tpu.memory_space<vmem>>, vector<1x10x60xf32>
    %151 = vector.shape_cast %150 : vector<1x10x60xf32> to vector<10x60xf32>
    %cst_126 = arith.constant dense<0.000000e+00> : vector<2x60xf32>
    %152 = tpu.matmul %149, %151, %cst_126 {dimension_numbers = #tpu.dot_dimension_numbers<[1], [0], [0], [1], [0, 0, 1, 1], [], []>} : vector<2x10xf32>, vector<10x60xf32>, vector<2x60xf32> -> vector<2x60xf32>
    %153 = arith.addf %148, %152 : vector<2x60xf32>
    %c18 = arith.constant 18 : index
    %c0_127 = arith.constant 0 : index
    %154 = vector.load %arg9[%c18, %c0_127] : memref<52x10xf32, #tpu.memory_space<vmem>>, vector<2x10xf32>
    %c9_128 = arith.constant 9 : index
    %c0_129 = arith.constant 0 : index
    %c0_130 = arith.constant 0 : index
    %155 = vector.load %arg3[%c9_128, %c0_129, %c0_130] : memref<26x10x60xf32, #tpu.memory_space<vmem>>, vector<1x10x60xf32>
    %156 = vector.shape_cast %155 : vector<1x10x60xf32> to vector<10x60xf32>
    %cst_131 = arith.constant dense<0.000000e+00> : vector<2x60xf32>
    %157 = tpu.matmul %154, %156, %cst_131 {dimension_numbers = #tpu.dot_dimension_numbers<[1], [0], [0], [1], [0, 0, 1, 1], [], []>} : vector<2x10xf32>, vector<10x60xf32>, vector<2x60xf32> -> vector<2x60xf32>
    %158 = arith.addf %153, %157 : vector<2x60xf32>
    %c20 = arith.constant 20 : index
    %c0_132 = arith.constant 0 : index
    %159 = vector.load %arg9[%c20, %c0_132] : memref<52x10xf32, #tpu.memory_space<vmem>>, vector<2x10xf32>
    %c10_133 = arith.constant 10 : index
    %c0_134 = arith.constant 0 : index
    %c0_135 = arith.constant 0 : index
    %160 = vector.load %arg3[%c10_133, %c0_134, %c0_135] : memref<26x10x60xf32, #tpu.memory_space<vmem>>, vector<1x10x60xf32>
    %161 = vector.shape_cast %160 : vector<1x10x60xf32> to vector<10x60xf32>
    %cst_136 = arith.constant dense<0.000000e+00> : vector<2x60xf32>
    %162 = tpu.matmul %159, %161, %cst_136 {dimension_numbers = #tpu.dot_dimension_numbers<[1], [0], [0], [1], [0, 0, 1, 1], [], []>} : vector<2x10xf32>, vector<10x60xf32>, vector<2x60xf32> -> vector<2x60xf32>
    %163 = arith.addf %158, %162 : vector<2x60xf32>
    %c22 = arith.constant 22 : index
    %c0_137 = arith.constant 0 : index
    %164 = vector.load %arg9[%c22, %c0_137] : memref<52x10xf32, #tpu.memory_space<vmem>>, vector<2x10xf32>
    %c11 = arith.constant 11 : index
    %c0_138 = arith.constant 0 : index
    %c0_139 = arith.constant 0 : index
    %165 = vector.load %arg3[%c11, %c0_138, %c0_139] : memref<26x10x60xf32, #tpu.memory_space<vmem>>, vector<1x10x60xf32>
    %166 = vector.shape_cast %165 : vector<1x10x60xf32> to vector<10x60xf32>
    %cst_140 = arith.constant dense<0.000000e+00> : vector<2x60xf32>
    %167 = tpu.matmul %164, %166, %cst_140 {dimension_numbers = #tpu.dot_dimension_numbers<[1], [0], [0], [1], [0, 0, 1, 1], [], []>} : vector<2x10xf32>, vector<10x60xf32>, vector<2x60xf32> -> vector<2x60xf32>
    %168 = arith.addf %163, %167 : vector<2x60xf32>
    %c24 = arith.constant 24 : index
    %c0_141 = arith.constant 0 : index
    %169 = vector.load %arg9[%c24, %c0_141] : memref<52x10xf32, #tpu.memory_space<vmem>>, vector<2x10xf32>
    %c12_142 = arith.constant 12 : index
    %c0_143 = arith.constant 0 : index
    %c0_144 = arith.constant 0 : index
    %170 = vector.load %arg3[%c12_142, %c0_143, %c0_144] : memref<26x10x60xf32, #tpu.memory_space<vmem>>, vector<1x10x60xf32>
    %171 = vector.shape_cast %170 : vector<1x10x60xf32> to vector<10x60xf32>
    %cst_145 = arith.constant dense<0.000000e+00> : vector<2x60xf32>
    %172 = tpu.matmul %169, %171, %cst_145 {dimension_numbers = #tpu.dot_dimension_numbers<[1], [0], [0], [1], [0, 0, 1, 1], [], []>} : vector<2x10xf32>, vector<10x60xf32>, vector<2x60xf32> -> vector<2x60xf32>
    %173 = arith.addf %168, %172 : vector<2x60xf32>
    %c26 = arith.constant 26 : index
    %c0_146 = arith.constant 0 : index
    %174 = vector.load %arg9[%c26, %c0_146] : memref<52x10xf32, #tpu.memory_space<vmem>>, vector<2x10xf32>
    %c13 = arith.constant 13 : index
    %c0_147 = arith.constant 0 : index
    %c0_148 = arith.constant 0 : index
    %175 = vector.load %arg3[%c13, %c0_147, %c0_148] : memref<26x10x60xf32, #tpu.memory_space<vmem>>, vector<1x10x60xf32>
    %176 = vector.shape_cast %175 : vector<1x10x60xf32> to vector<10x60xf32>
    %cst_149 = arith.constant dense<0.000000e+00> : vector<2x60xf32>
    %177 = tpu.matmul %174, %176, %cst_149 {dimension_numbers = #tpu.dot_dimension_numbers<[1], [0], [0], [1], [0, 0, 1, 1], [], []>} : vector<2x10xf32>, vector<10x60xf32>, vector<2x60xf32> -> vector<2x60xf32>
    %178 = arith.addf %173, %177 : vector<2x60xf32>
    %c28 = arith.constant 28 : index
    %c0_150 = arith.constant 0 : index
    %179 = vector.load %arg9[%c28, %c0_150] : memref<52x10xf32, #tpu.memory_space<vmem>>, vector<2x10xf32>
    %c14_151 = arith.constant 14 : index
    %c0_152 = arith.constant 0 : index
    %c0_153 = arith.constant 0 : index
    %180 = vector.load %arg3[%c14_151, %c0_152, %c0_153] : memref<26x10x60xf32, #tpu.memory_space<vmem>>, vector<1x10x60xf32>
    %181 = vector.shape_cast %180 : vector<1x10x60xf32> to vector<10x60xf32>
    %cst_154 = arith.constant dense<0.000000e+00> : vector<2x60xf32>
    %182 = tpu.matmul %179, %181, %cst_154 {dimension_numbers = #tpu.dot_dimension_numbers<[1], [0], [0], [1], [0, 0, 1, 1], [], []>} : vector<2x10xf32>, vector<10x60xf32>, vector<2x60xf32> -> vector<2x60xf32>
    %183 = arith.addf %178, %182 : vector<2x60xf32>
    %c30 = arith.constant 30 : index
    %c0_155 = arith.constant 0 : index
    %184 = vector.load %arg9[%c30, %c0_155] : memref<52x10xf32, #tpu.memory_space<vmem>>, vector<2x10xf32>
    %c15 = arith.constant 15 : index
    %c0_156 = arith.constant 0 : index
    %c0_157 = arith.constant 0 : index
    %185 = vector.load %arg3[%c15, %c0_156, %c0_157] : memref<26x10x60xf32, #tpu.memory_space<vmem>>, vector<1x10x60xf32>
    %186 = vector.shape_cast %185 : vector<1x10x60xf32> to vector<10x60xf32>
    %cst_158 = arith.constant dense<0.000000e+00> : vector<2x60xf32>
    %187 = tpu.matmul %184, %186, %cst_158 {dimension_numbers = #tpu.dot_dimension_numbers<[1], [0], [0], [1], [0, 0, 1, 1], [], []>} : vector<2x10xf32>, vector<10x60xf32>, vector<2x60xf32> -> vector<2x60xf32>
    %188 = arith.addf %183, %187 : vector<2x60xf32>
    %c32 = arith.constant 32 : index
    %c0_159 = arith.constant 0 : index
    %189 = vector.load %arg9[%c32, %c0_159] : memref<52x10xf32, #tpu.memory_space<vmem>>, vector<2x10xf32>
    %c16_160 = arith.constant 16 : index
    %c0_161 = arith.constant 0 : index
    %c0_162 = arith.constant 0 : index
    %190 = vector.load %arg3[%c16_160, %c0_161, %c0_162] : memref<26x10x60xf32, #tpu.memory_space<vmem>>, vector<1x10x60xf32>
    %191 = vector.shape_cast %190 : vector<1x10x60xf32> to vector<10x60xf32>
    %cst_163 = arith.constant dense<0.000000e+00> : vector<2x60xf32>
    %192 = tpu.matmul %189, %191, %cst_163 {dimension_numbers = #tpu.dot_dimension_numbers<[1], [0], [0], [1], [0, 0, 1, 1], [], []>} : vector<2x10xf32>, vector<10x60xf32>, vector<2x60xf32> -> vector<2x60xf32>
    %193 = arith.addf %188, %192 : vector<2x60xf32>
    %c34 = arith.constant 34 : index
    %c0_164 = arith.constant 0 : index
    %194 = vector.load %arg9[%c34, %c0_164] : memref<52x10xf32, #tpu.memory_space<vmem>>, vector<2x10xf32>
    %c17 = arith.constant 17 : index
    %c0_165 = arith.constant 0 : index
    %c0_166 = arith.constant 0 : index
    %195 = vector.load %arg3[%c17, %c0_165, %c0_166] : memref<26x10x60xf32, #tpu.memory_space<vmem>>, vector<1x10x60xf32>
    %196 = vector.shape_cast %195 : vector<1x10x60xf32> to vector<10x60xf32>
    %cst_167 = arith.constant dense<0.000000e+00> : vector<2x60xf32>
    %197 = tpu.matmul %194, %196, %cst_167 {dimension_numbers = #tpu.dot_dimension_numbers<[1], [0], [0], [1], [0, 0, 1, 1], [], []>} : vector<2x10xf32>, vector<10x60xf32>, vector<2x60xf32> -> vector<2x60xf32>
    %198 = arith.addf %193, %197 : vector<2x60xf32>
    %c36 = arith.constant 36 : index
    %c0_168 = arith.constant 0 : index
    %199 = vector.load %arg9[%c36, %c0_168] : memref<52x10xf32, #tpu.memory_space<vmem>>, vector<2x10xf32>
    %c18_169 = arith.constant 18 : index
    %c0_170 = arith.constant 0 : index
    %c0_171 = arith.constant 0 : index
    %200 = vector.load %arg3[%c18_169, %c0_170, %c0_171] : memref<26x10x60xf32, #tpu.memory_space<vmem>>, vector<1x10x60xf32>
    %201 = vector.shape_cast %200 : vector<1x10x60xf32> to vector<10x60xf32>
    %cst_172 = arith.constant dense<0.000000e+00> : vector<2x60xf32>
    %202 = tpu.matmul %199, %201, %cst_172 {dimension_numbers = #tpu.dot_dimension_numbers<[1], [0], [0], [1], [0, 0, 1, 1], [], []>} : vector<2x10xf32>, vector<10x60xf32>, vector<2x60xf32> -> vector<2x60xf32>
    %203 = arith.addf %198, %202 : vector<2x60xf32>
    %c38 = arith.constant 38 : index
    %c0_173 = arith.constant 0 : index
    %204 = vector.load %arg9[%c38, %c0_173] : memref<52x10xf32, #tpu.memory_space<vmem>>, vector<2x10xf32>
    %c19 = arith.constant 19 : index
    %c0_174 = arith.constant 0 : index
    %c0_175 = arith.constant 0 : index
    %205 = vector.load %arg3[%c19, %c0_174, %c0_175] : memref<26x10x60xf32, #tpu.memory_space<vmem>>, vector<1x10x60xf32>
    %206 = vector.shape_cast %205 : vector<1x10x60xf32> to vector<10x60xf32>
    %cst_176 = arith.constant dense<0.000000e+00> : vector<2x60xf32>
    %207 = tpu.matmul %204, %206, %cst_176 {dimension_numbers = #tpu.dot_dimension_numbers<[1], [0], [0], [1], [0, 0, 1, 1], [], []>} : vector<2x10xf32>, vector<10x60xf32>, vector<2x60xf32> -> vector<2x60xf32>
    %208 = arith.addf %203, %207 : vector<2x60xf32>
    %c40 = arith.constant 40 : index
    %c0_177 = arith.constant 0 : index
    %209 = vector.load %arg9[%c40, %c0_177] : memref<52x10xf32, #tpu.memory_space<vmem>>, vector<2x10xf32>
    %c20_178 = arith.constant 20 : index
    %c0_179 = arith.constant 0 : index
    %c0_180 = arith.constant 0 : index
    %210 = vector.load %arg3[%c20_178, %c0_179, %c0_180] : memref<26x10x60xf32, #tpu.memory_space<vmem>>, vector<1x10x60xf32>
    %211 = vector.shape_cast %210 : vector<1x10x60xf32> to vector<10x60xf32>
    %cst_181 = arith.constant dense<0.000000e+00> : vector<2x60xf32>
    %212 = tpu.matmul %209, %211, %cst_181 {dimension_numbers = #tpu.dot_dimension_numbers<[1], [0], [0], [1], [0, 0, 1, 1], [], []>} : vector<2x10xf32>, vector<10x60xf32>, vector<2x60xf32> -> vector<2x60xf32>
    %213 = arith.addf %208, %212 : vector<2x60xf32>
    %c42 = arith.constant 42 : index
    %c0_182 = arith.constant 0 : index
    %214 = vector.load %arg9[%c42, %c0_182] : memref<52x10xf32, #tpu.memory_space<vmem>>, vector<2x10xf32>
    %c21 = arith.constant 21 : index
    %c0_183 = arith.constant 0 : index
    %c0_184 = arith.constant 0 : index
    %215 = vector.load %arg3[%c21, %c0_183, %c0_184] : memref<26x10x60xf32, #tpu.memory_space<vmem>>, vector<1x10x60xf32>
    %216 = vector.shape_cast %215 : vector<1x10x60xf32> to vector<10x60xf32>
    %cst_185 = arith.constant dense<0.000000e+00> : vector<2x60xf32>
    %217 = tpu.matmul %214, %216, %cst_185 {dimension_numbers = #tpu.dot_dimension_numbers<[1], [0], [0], [1], [0, 0, 1, 1], [], []>} : vector<2x10xf32>, vector<10x60xf32>, vector<2x60xf32> -> vector<2x60xf32>
    %218 = arith.addf %213, %217 : vector<2x60xf32>
    %c44 = arith.constant 44 : index
    %c0_186 = arith.constant 0 : index
    %219 = vector.load %arg9[%c44, %c0_186] : memref<52x10xf32, #tpu.memory_space<vmem>>, vector<2x10xf32>
    %c22_187 = arith.constant 22 : index
    %c0_188 = arith.constant 0 : index
    %c0_189 = arith.constant 0 : index
    %220 = vector.load %arg3[%c22_187, %c0_188, %c0_189] : memref<26x10x60xf32, #tpu.memory_space<vmem>>, vector<1x10x60xf32>
    %221 = vector.shape_cast %220 : vector<1x10x60xf32> to vector<10x60xf32>
    %cst_190 = arith.constant dense<0.000000e+00> : vector<2x60xf32>
    %222 = tpu.matmul %219, %221, %cst_190 {dimension_numbers = #tpu.dot_dimension_numbers<[1], [0], [0], [1], [0, 0, 1, 1], [], []>} : vector<2x10xf32>, vector<10x60xf32>, vector<2x60xf32> -> vector<2x60xf32>
    %223 = arith.addf %218, %222 : vector<2x60xf32>
    %c46 = arith.constant 46 : index
    %c0_191 = arith.constant 0 : index
    %224 = vector.load %arg9[%c46, %c0_191] : memref<52x10xf32, #tpu.memory_space<vmem>>, vector<2x10xf32>
    %c23 = arith.constant 23 : index
    %c0_192 = arith.constant 0 : index
    %c0_193 = arith.constant 0 : index
    %225 = vector.load %arg3[%c23, %c0_192, %c0_193] : memref<26x10x60xf32, #tpu.memory_space<vmem>>, vector<1x10x60xf32>
    %226 = vector.shape_cast %225 : vector<1x10x60xf32> to vector<10x60xf32>
    %cst_194 = arith.constant dense<0.000000e+00> : vector<2x60xf32>
    %227 = tpu.matmul %224, %226, %cst_194 {dimension_numbers = #tpu.dot_dimension_numbers<[1], [0], [0], [1], [0, 0, 1, 1], [], []>} : vector<2x10xf32>, vector<10x60xf32>, vector<2x60xf32> -> vector<2x60xf32>
    %228 = arith.addf %223, %227 : vector<2x60xf32>
    %c48 = arith.constant 48 : index
    %c0_195 = arith.constant 0 : index
    %229 = vector.load %arg9[%c48, %c0_195] : memref<52x10xf32, #tpu.memory_space<vmem>>, vector<2x10xf32>
    %c24_196 = arith.constant 24 : index
    %c0_197 = arith.constant 0 : index
    %c0_198 = arith.constant 0 : index
    %230 = vector.load %arg3[%c24_196, %c0_197, %c0_198] : memref<26x10x60xf32, #tpu.memory_space<vmem>>, vector<1x10x60xf32>
    %231 = vector.shape_cast %230 : vector<1x10x60xf32> to vector<10x60xf32>
    %cst_199 = arith.constant dense<0.000000e+00> : vector<2x60xf32>
    %232 = tpu.matmul %229, %231, %cst_199 {dimension_numbers = #tpu.dot_dimension_numbers<[1], [0], [0], [1], [0, 0, 1, 1], [], []>} : vector<2x10xf32>, vector<10x60xf32>, vector<2x60xf32> -> vector<2x60xf32>
    %233 = arith.addf %228, %232 : vector<2x60xf32>
    %c50 = arith.constant 50 : index
    %c0_200 = arith.constant 0 : index
    %234 = vector.load %arg9[%c50, %c0_200] : memref<52x10xf32, #tpu.memory_space<vmem>>, vector<2x10xf32>
    %c25 = arith.constant 25 : index
    %c0_201 = arith.constant 0 : index
    %c0_202 = arith.constant 0 : index
    %235 = vector.load %arg3[%c25, %c0_201, %c0_202] : memref<26x10x60xf32, #tpu.memory_space<vmem>>, vector<1x10x60xf32>
    %236 = vector.shape_cast %235 : vector<1x10x60xf32> to vector<10x60xf32>
    %cst_203 = arith.constant dense<0.000000e+00> : vector<2x60xf32>
    %237 = tpu.matmul %234, %236, %cst_203 {dimension_numbers = #tpu.dot_dimension_numbers<[1], [0], [0], [1], [0, 0, 1, 1], [], []>} : vector<2x10xf32>, vector<10x60xf32>, vector<2x60xf32> -> vector<2x60xf32>
    %238 = arith.addf %233, %237 : vector<2x60xf32>
    %c0_204 = arith.constant 0 : index
    %c0_205 = arith.constant 0 : index
    %239 = vector.load %arg6[%c0_204, %c0_205] : memref<2x60xf32, #tpu.memory_space<vmem>>, vector<1x60xf32>
    %c1_206 = arith.constant 1 : index
    %c0_207 = arith.constant 0 : index
    %240 = vector.load %arg6[%c1_206, %c0_207] : memref<2x60xf32, #tpu.memory_space<vmem>>, vector<1x60xf32>
    %cst_208 = arith.constant dense<0.000000e+00> : vector<60xf32>
    %241 = vector.multi_reduction <add>, %238, %cst_208 [0] : vector<2x60xf32> to vector<60xf32>
    %242 = vector.shape_cast %241 : vector<60xf32> to vector<1x60xf32>
    %cst_209 = arith.constant 5.000000e-01 : f32
    %243 = vector.broadcast %cst_209 : f32 to vector<1x60xf32>
    %244 = arith.mulf %242, %243 : vector<1x60xf32>
    %245 = vector.broadcast %244 : vector<1x60xf32> to vector<2x60xf32>
    %246 = arith.subf %238, %245 : vector<2x60xf32>
    %247 = arith.mulf %246, %246 : vector<2x60xf32>
    %cst_210 = arith.constant dense<0.000000e+00> : vector<60xf32>
    %248 = vector.multi_reduction <add>, %247, %cst_210 [0] : vector<2x60xf32> to vector<60xf32>
    %249 = vector.shape_cast %248 : vector<60xf32> to vector<1x60xf32>
    %cst_211 = arith.constant 5.000000e-01 : f32
    %250 = vector.broadcast %cst_211 : f32 to vector<1x60xf32>
    %251 = arith.mulf %249, %250 : vector<1x60xf32>
    %cst_212 = arith.constant 9.99999974E-6 : f32
    %252 = vector.broadcast %cst_212 : f32 to vector<1x60xf32>
    %253 = arith.addf %251, %252 : vector<1x60xf32>
    %254 = math.rsqrt %253 : vector<1x60xf32>
    %255 = arith.mulf %239, %254 : vector<1x60xf32>
    %256 = vector.broadcast %255 : vector<1x60xf32> to vector<2x60xf32>
    %257 = arith.mulf %246, %256 : vector<2x60xf32>
    %258 = vector.broadcast %240 : vector<1x60xf32> to vector<2x60xf32>
    %259 = arith.addf %257, %258 : vector<2x60xf32>
    %cst_213 = arith.constant 0.000000e+00 : f32
    %260 = vector.broadcast %cst_213 : f32 to vector<2x60xf32>
    %261 = arith.cmpf oge, %259, %260 : vector<2x60xf32>
    %cst_214 = arith.constant 0.00999999977 : f32
    %262 = vector.broadcast %cst_214 : f32 to vector<2x60xf32>
    %263 = arith.mulf %262, %259 : vector<2x60xf32>
    %264 = arith.select %261, %259, %263 : vector<2x60xi1>, vector<2x60xf32>
    %c0_215 = arith.constant 0 : index
    %c0_216 = arith.constant 0 : index
    %265 = vector.load %arg7[%c0_215, %c0_216] : memref<2x60xf32, #tpu.memory_space<vmem>>, vector<2x60xf32>
    tpu.vector_store %arg7[%c0_215, %c0_216], %264 {strides = array<i32>} : memref<2x60xf32, #tpu.memory_space<vmem>>, vector<2x60xf32>,
    return
  }
}

</mosaic_0001>

<llo_original>
// kernel: adverserail_cnn_forward.1
$region0: #{adverserail_cnn_forward.1}
  #allocation0 [shape = 'u32[]', space=smem, size = 0x4, offset = 0x4, fixed_abs, tag = 'smem constant byte address 0x4 - core index']
  #allocation1 [shape = 'u32[144,128]{1,0:T(1,128)}', space=vmem, size = 0x12000, scoped, tag = 'internal scratch']
  #allocation2 [shape = 'f32[120,20]{1,0:T(8,128)}', space=vmem, size = 0xf000, scoped, tag = 'scratch operand']
  #allocation3 [shape = 'f32[52,10]{1,0:T(8,128)}', space=vmem, size = 0x7000, scoped, tag = 'scratch operand']
  %s0 = inlined_call_operand.vmem [shape: f32[120,10], index: 0, kind: input, shape index: {}]
  %s1 = inlined_call_operand.vmem [shape: f32[10,20], index: 1, kind: input, shape index: {}]
  %s2 = inlined_call_operand.vmem [shape: f32[10,20,10], index: 2, kind: input, shape index: {}]
  %s3 = inlined_call_operand.vmem [shape: f32[26,10,60], index: 3, kind: input, shape index: {}]
  %s4 = inlined_call_operand.vmem [shape: f32[2,20], index: 4, kind: input, shape index: {}]
  %s5 = inlined_call_operand.vmem [shape: f32[2,10], index: 5, kind: input, shape index: {}]
  %s6 = inlined_call_operand.vmem [shape: f32[2,60], index: 6, kind: input, shape index: {}]
  %s7 = inlined_call_operand.hbm [shape: f32[2,60], index: 7, kind: output, shape index: {}]
  %s8 = sld [smem:[#allocation0]]
  $region38: #{adverserail_cnn_forward.1} parent=0
    _
  %s10 = ssub.s32 1, %s8
  %s11 = scalar_select 0, %s10, %s8
  $region1: #{adverserail_cnn_forward.1} parent=0
    #allocation4 [shape = 'u8[1024]{0}', space=vmem, size = 0x400, scoped, tag = 'output window, operand 0, single buffered']
    #allocation5 [shape = 's32[1]{0}', space=sflag, size = 0x4, scoped, tag = 'scoped memory for adverserail_cnn_forward.1']
    %12 = vsyncpa [#allocation5], 0
    // Predicated region
    $region2: #{adverserail_cnn_forward.1} parent=1 // pred_check
      _
    $region3: #{adverserail_cnn_forward.1} parent=1 // pred_check_branch
      %14 = sbr.rel (0) target = $region5
    $region4: #{adverserail_cnn_forward.1} parent=1 // pred_region
      _
    $region5: #{adverserail_cnn_forward.1} parent=1 // pred_fallthru
      _
    // Predicated region
    $region6: #{adverserail_cnn_forward.1} parent=1 // pred_check
      _
    $region7: #{adverserail_cnn_forward.1} parent=1 // pred_check_branch
      %16 = sbr.rel (0) target = $region9
    $region8: #{adverserail_cnn_forward.1} parent=1 // pred_region
      _
    $region9: #{adverserail_cnn_forward.1} parent=1 // pred_fallthru
      _
    // Predicated region
    $region10: #{adverserail_cnn_forward.1} parent=1 // pred_check
      _
    $region11: #{adverserail_cnn_forward.1} parent=1 // pred_check_branch
      %18 = sbr.rel (0) target = $region13
    $region12: #{adverserail_cnn_forward.1} parent=1 // pred_region
      _
    $region13: #{adverserail_cnn_forward.1} parent=1 // pred_fallthru
      _
    // Predicated region
    $region14: #{adverserail_cnn_forward.1} parent=1 // pred_check
      _
    $region15: #{adverserail_cnn_forward.1} parent=1 // pred_check_branch
      %20 = sbr.rel (0) target = $region17
    $region16: #{adverserail_cnn_forward.1} parent=1 // pred_region
      _
    $region17: #{adverserail_cnn_forward.1} parent=1 // pred_fallthru
      _
    // Predicated region
    $region18: #{adverserail_cnn_forward.1} parent=1 // pred_check
      _
    $region19: #{adverserail_cnn_forward.1} parent=1 // pred_check_branch
      %22 = sbr.rel (0) target = $region21
    $region20: #{adverserail_cnn_forward.1} parent=1 // pred_region
      _
    $region21: #{adverserail_cnn_forward.1} parent=1 // pred_fallthru
      _
    // Predicated region
    $region22: #{adverserail_cnn_forward.1} parent=1 // pred_check
      _
    $region23: #{adverserail_cnn_forward.1} parent=1 // pred_check_branch
      %24 = sbr.rel (0) target = $region25
    $region24: #{adverserail_cnn_forward.1} parent=1 // pred_region
      _
    $region25: #{adverserail_cnn_forward.1} parent=1 // pred_fallthru
      _
    // Predicated region
    $region26: #{adverserail_cnn_forward.1} parent=1 // pred_check
      _
    $region27: #{adverserail_cnn_forward.1} parent=1 // pred_check_branch
      %26 = sbr.rel (0) target = $region29
    $region28: #{adverserail_cnn_forward.1} parent=1 // pred_region
      _
    $region29: #{adverserail_cnn_forward.1} parent=1 // pred_fallthru
      _
    %v27 = vld [vmem:[%s0] sm:$0xff]
    %v28 = vld [vmem:[%s0 + $0x8] sm:$0xff]
    %v29 = vld [vmem:[%s0 + $0x10] sm:$0xff]
    %v30 = vld [vmem:[%s0 + $0x18] sm:$0xff]
    %v31 = vld [vmem:[%s0 + $0x20] sm:$0xff]
    %v32 = vld [vmem:[%s0 + $0x28] sm:$0xff]
    %v33 = vld [vmem:[%s0 + $0x30] sm:$0xff]
    %v34 = vld [vmem:[%s0 + $0x38] sm:$0xff]
    %v35 = vld [vmem:[%s0 + $0x40] sm:$0xff]
    %v36 = vld [vmem:[%s0 + $0x48] sm:$0xff]
    %v37 = vld [vmem:[%s0 + $0x50] sm:$0xff]
    %v38 = vld [vmem:[%s0 + $0x58] sm:$0xff]
    %v39 = vld [vmem:[%s0 + $0x60] sm:$0xff]
    %v40 = vld [vmem:[%s0 + $0x68] sm:$0xff]
    %v41 = vld [vmem:[%s0 + $0x70] sm:$0xff]
    %v42 = vld [vmem:[%s1] sm:$0xff]
    %v43 = vld [vmem:[%s1 + $0x8] sm:$0x3]
    %vm44 = vcmask 80896
    %v46 = vsel %vm44, %v27, 0
    %v49 = vsel %vm44, %v28, 0
    %v52 = vsel %vm44, %v29, 0
    %v55 = vsel %vm44, %v30, 0
    %v58 = vsel %vm44, %v31, 0
    %v61 = vsel %vm44, %v32, 0
    %v64 = vsel %vm44, %v33, 0
    %v67 = vsel %vm44, %v34, 0
    %v70 = vsel %vm44, %v35, 0
    %v73 = vsel %vm44, %v36, 0
    %v76 = vsel %vm44, %v37, 0
    %v79 = vsel %vm44, %v38, 0
    %v82 = vsel %vm44, %v39, 0
    %v85 = vsel %vm44, %v40, 0
    %v88 = vsel %vm44, %v41, 0
    %vm90 = vcmask 1041408
    %v92 = vsel %vm90, %v43, 0
    %94 = vmatprep.subr.mxu0 0.0
    %95 = vmatpush1.msra.mxu0 %v42
    %96 = vmatprep.subr.mxu0 0.0
    %97 = vmatpush1.msra.mxu0 %v92
    %98 = vmatprep.subr.mxu0 0.0
    %99 = vmatpush1.msra.mxu0 0.0
    %100 = vmatprep.subr.mxu0 0.0
    %101 = vmatpush1.msra.mxu0 0.0
    %102 = vmatprep.subr.mxu0 0.0
    %103 = vmatpush1.msra.mxu0 0.0
    %104 = vmatprep.subr.mxu0 0.0
    %105 = vmatpush1.msra.mxu0 0.0
    %106 = vmatprep.subr.mxu0 0.0
    %107 = vmatpush1.msra.mxu0 0.0
    %108 = vmatprep.subr.mxu0 0.0
    %109 = vmatpush1.msra.mxu0 0.0
    %110 = vmatprep.subr.mxu0 0.0
    %111 = vmatpush1.msra.mxu0 0.0
    %112 = vmatprep.subr.mxu0 0.0
    %113 = vmatpush1.msra.mxu0 0.0
    %114 = vmatprep.subr.mxu0 0.0
    %115 = vmatpush1.msra.mxu0 0.0
    %116 = vmatprep.subr.mxu0 0.0
    %117 = vmatpush1.msra.mxu0 0.0
    %118 = vmatprep.subr.mxu0 0.0
    %119 = vmatpush1.msra.mxu0 0.0
    %120 = vmatprep.subr.mxu0 0.0
    %121 = vmatpush1.msra.mxu0 0.0
    %122 = vmatprep.subr.mxu0 0.0
    %123 = vmatpush1.msra.mxu0 0.0
    %124 = vmatprep.subr.mxu0 0.0
    %125 = vmatpush1.msra.mxu0 0.0
    %126 = vmatprep.subr.mxu0 0.0
    %127 = vmatpush1.msra.mxu0 0.0
    %128 = vmatprep.subr.mxu0 0.0
    %129 = vmatpush1.msra.mxu0 0.0
    %130 = vmatprep.subr.mxu0 0.0
    %131 = vmatpush1.msra.mxu0 0.0
    %132 = vmatprep.subr.mxu0 0.0
    %133 = vmatpush1.msra.mxu0 0.0
    %134 = vmatprep.subr.mxu0 0.0
    %135 = vmatpush1.msra.mxu0 0.0
    %136 = vmatprep.subr.mxu0 0.0
    %137 = vmatpush1.msra.mxu0 0.0
    %138 = vmatprep.subr.mxu0 0.0
    %139 = vmatpush1.msra.mxu0 0.0
    %140 = vmatprep.subr.mxu0 0.0
    %141 = vmatpush1.msra.mxu0 0.0
    %142 = vmatprep.subr.mxu0 0.0
    %143 = vmatpush1.msra.mxu0 0.0
    %144 = vmatprep.subr.mxu0 0.0
    %145 = vmatpush1.msra.mxu0 0.0
    %146 = vmatprep.subr.mxu0 0.0
    %147 = vmatpush1.msra.mxu0 0.0
    %148 = vmatprep.subr.mxu0 0.0
    %149 = vmatpush1.msra.mxu0 0.0
    %150 = vmatprep.subr.mxu0 0.0
    %151 = vmatpush1.msra.mxu0 0.0
    %152 = vmatprep.subr.mxu0 0.0
    %153 = vmatpush1.msra.mxu0 0.0
    %154 = vmatprep.subr.mxu0 0.0
    %155 = vmatpush1.msra.mxu0 0.0
    %156 = vmatprep.subr.mxu0 0.0
    %157 = vmatpush1.msra.mxu0 0.0
    %158 = vmatprep.mubr.f32.mxu0 0.0
    %159 = vmatmul.mubr.f32.gmra.mrb[0].mxu0 %v46
    %v160 = vpop.f32.mrb[0].mxu0
    %v161 = vadd.f32 0.0, %v160
    %v162 = vpop.f32.mrb[0].mxu0
    %163 = vmatprep.mubr.f32.mxu0 0.0
    %164 = vmatmul.mubr.f32.gmra.mrb[0].mxu0 %v49
    %v165 = vpop.f32.mrb[0].mxu0
    %v166 = vadd.f32 0.0, %v165
    %v167 = vpop.f32.mrb[0].mxu0
    %168 = vmatprep.mubr.f32.mxu0 0.0
    %169 = vmatmul.mubr.f32.gmra.mrb[0].mxu0 %v52
    %v170 = vpop.f32.mrb[0].mxu0
    %v171 = vadd.f32 0.0, %v170
    %v172 = vpop.f32.mrb[0].mxu0
    %173 = vmatprep.mubr.f32.mxu0 0.0
    %174 = vmatmul.mubr.f32.gmra.mrb[0].mxu0 %v55
    %v175 = vpop.f32.mrb[0].mxu0
    %v176 = vadd.f32 0.0, %v175
    %v177 = vpop.f32.mrb[0].mxu0
    %178 = vmatprep.mubr.f32.mxu0 0.0
    %179 = vmatmul.mubr.f32.gmra.mrb[0].mxu0 %v58
    %v180 = vpop.f32.mrb[0].mxu0
    %v181 = vadd.f32 0.0, %v180
    %v182 = vpop.f32.mrb[0].mxu0
    %183 = vmatprep.mubr.f32.mxu0 0.0
    %184 = vmatmul.mubr.f32.gmra.mrb[0].mxu0 %v61
    %v185 = vpop.f32.mrb[0].mxu0
    %v186 = vadd.f32 0.0, %v185
    %v187 = vpop.f32.mrb[0].mxu0
    %188 = vmatprep.mubr.f32.mxu0 0.0
    %189 = vmatmul.mubr.f32.gmra.mrb[0].mxu0 %v64
    %v190 = vpop.f32.mrb[0].mxu0
    %v191 = vadd.f32 0.0, %v190
    %v192 = vpop.f32.mrb[0].mxu0
    %193 = vmatprep.mubr.f32.mxu0 0.0
    %194 = vmatmul.mubr.f32.gmra.mrb[0].mxu0 %v67
    %v195 = vpop.f32.mrb[0].mxu0
    %v196 = vadd.f32 0.0, %v195
    %v197 = vpop.f32.mrb[0].mxu0
    %198 = vmatprep.mubr.f32.mxu0 0.0
    %199 = vmatmul.mubr.f32.gmra.mrb[0].mxu0 %v70
    %v200 = vpop.f32.mrb[0].mxu0
    %v201 = vadd.f32 0.0, %v200
    %v202 = vpop.f32.mrb[0].mxu0
    %203 = vmatprep.mubr.f32.mxu0 0.0
    %204 = vmatmul.mubr.f32.gmra.mrb[0].mxu0 %v73
    %v205 = vpop.f32.mrb[0].mxu0
    %v206 = vadd.f32 0.0, %v205
    %v207 = vpop.f32.mrb[0].mxu0
    %208 = vmatprep.mubr.f32.mxu0 0.0
    %209 = vmatmul.mubr.f32.gmra.mrb[0].mxu0 %v76
    %v210 = vpop.f32.mrb[0].mxu0
    %v211 = vadd.f32 0.0, %v210
    %v212 = vpop.f32.mrb[0].mxu0
    %213 = vmatprep.mubr.f32.mxu0 0.0
    %214 = vmatmul.mubr.f32.gmra.mrb[0].mxu0 %v79
    %v215 = vpop.f32.mrb[0].mxu0
    %v216 = vadd.f32 0.0, %v215
    %v217 = vpop.f32.mrb[0].mxu0
    %218 = vmatprep.mubr.f32.mxu0 0.0
    %219 = vmatmul.mubr.f32.gmra.mrb[0].mxu0 %v82
    %v220 = vpop.f32.mrb[0].mxu0
    %v221 = vadd.f32 0.0, %v220
    %v222 = vpop.f32.mrb[0].mxu0
    %223 = vmatprep.mubr.f32.mxu0 0.0
    %224 = vmatmul.mubr.f32.gmra.mrb[0].mxu0 %v85
    %v225 = vpop.f32.mrb[0].mxu0
    %v226 = vadd.f32 0.0, %v225
    %v227 = vpop.f32.mrb[0].mxu0
    %228 = vmatprep.mubr.f32.mxu0 0.0
    %229 = vmatmul.mubr.f32.gmra.mrb[0].mxu0 %v88
    %v230 = vpop.f32.mrb[0].mxu0
    %v231 = vadd.f32 0.0, %v230
    %v232 = vpop.f32.mrb[0].mxu0
    %233 = vdwg.mxu0
    %v234 = vld [vmem:[%s4] sm:$0x1]
    %v235 = vld [vmem:[%s4 + $0x1] sm:$0x1]
    %vm236 = vcmask 162816
    %v237 = vsel %vm236, %v161, 0.0
    %v238 = vsel %vm236, %v166, 0.0
    %v239 = vadd.f32 %v237, %v238
    %v240 = vsel %vm236, %v171, 0.0
    %v241 = vadd.f32 %v239, %v240
    %v242 = vsel %vm236, %v176, 0.0
    %v243 = vadd.f32 %v241, %v242
    %v244 = vsel %vm236, %v181, 0.0
    %v245 = vadd.f32 %v243, %v244
    %v246 = vsel %vm236, %v186, 0.0
    %v247 = vadd.f32 %v245, %v246
    %v248 = vsel %vm236, %v191, 0.0
    %v249 = vadd.f32 %v247, %v248
    %v250 = vsel %vm236, %v196, 0.0
    %v251 = vadd.f32 %v249, %v250
    %v252 = vsel %vm236, %v201, 0.0
    %v253 = vadd.f32 %v251, %v252
    %v254 = vsel %vm236, %v206, 0.0
    %v255 = vadd.f32 %v253, %v254
    %v256 = vsel %vm236, %v211, 0.0
    %v257 = vadd.f32 %v255, %v256
    %v258 = vsel %vm236, %v216, 0.0
    %v259 = vadd.f32 %v257, %v258
    %v260 = vsel %vm236, %v221, 0.0
    %v261 = vadd.f32 %v259, %v260
    %v262 = vsel %vm236, %v226, 0.0
    %v263 = vadd.f32 %v261, %v262
    %v264 = vsel %vm236, %v231, 0.0
    %v265 = vadd.f32 %v263, %v264
    %v266 = vrot.slane %v265, 4
    %v267 = vadd.f32 %v265, %v266
    %v268 = vrot.slane %v267, 2
    %v269 = vadd.f32 %v267, %v268
    %v270 = vrot.slane %v269, 1
    %v271 = vadd.f32 %v269, %v270
    %v272 = vmul.f32 %v271, 0.008333334
    %v273 = vsub.f32 %v161, %v272
    %v274 = vsub.f32 %v166, %v272
    %v275 = vsub.f32 %v171, %v272
    %v276 = vsub.f32 %v176, %v272
    %v277 = vsub.f32 %v181, %v272
    %v278 = vsub.f32 %v186, %v272
    %v279 = vsub.f32 %v191, %v272
    %v280 = vsub.f32 %v196, %v272
    %v281 = vsub.f32 %v201, %v272
    %v282 = vsub.f32 %v206, %v272
    %v283 = vsub.f32 %v211, %v272
    %v284 = vsub.f32 %v216, %v272
    %v285 = vsub.f32 %v221, %v272
    %v286 = vsub.f32 %v226, %v272
    %v287 = vsub.f32 %v231, %v272
    %v288 = vmul.f32 %v273, %v273
    %v289 = vmul.f32 %v274, %v274
    %v290 = vmul.f32 %v275, %v275
    %v291 = vmul.f32 %v276, %v276
    %v292 = vmul.f32 %v277, %v277
    %v293 = vmul.f32 %v278, %v278
    %v294 = vmul.f32 %v279, %v279
    %v295 = vmul.f32 %v280, %v280
    %v296 = vmul.f32 %v281, %v281
    %v297 = vmul.f32 %v282, %v282
    %v298 = vmul.f32 %v283, %v283
    %v299 = vmul.f32 %v284, %v284
    %v300 = vmul.f32 %v285, %v285
    %v301 = vmul.f32 %v286, %v286
    %v302 = vmul.f32 %v287, %v287
    %v303 = vsel %vm236, %v288, 0.0
    %v304 = vsel %vm236, %v289, 0.0
    %v305 = vadd.f32 %v303, %v304
    %v306 = vsel %vm236, %v290, 0.0
    %v307 = vadd.f32 %v305, %v306
    %v308 = vsel %vm236, %v291, 0.0
    %v309 = vadd.f32 %v307, %v308
    %v310 = vsel %vm236, %v292, 0.0
    %v311 = vadd.f32 %v309, %v310
    %v312 = vsel %vm236, %v293, 0.0
    %v313 = vadd.f32 %v311, %v312
    %v314 = vsel %vm236, %v294, 0.0
    %v315 = vadd.f32 %v313, %v314
    %v316 = vsel %vm236, %v295, 0.0
    %v317 = vadd.f32 %v315, %v316
    %v318 = vsel %vm236, %v296, 0.0
    %v319 = vadd.f32 %v317, %v318
    %v320 = vsel %vm236, %v297, 0.0
    %v321 = vadd.f32 %v319, %v320
    %v322 = vsel %vm236, %v298, 0.0
    %v323 = vadd.f32 %v321, %v322
    %v324 = vsel %vm236, %v299, 0.0
    %v325 = vadd.f32 %v323, %v324
    %v326 = vsel %vm236, %v300, 0.0
    %v327 = vadd.f32 %v325, %v326
    %v328 = vsel %vm236, %v301, 0.0
    %v329 = vadd.f32 %v327, %v328
    %v330 = vsel %vm236, %v302, 0.0
    %v331 = vadd.f32 %v329, %v330
    %v332 = vrot.slane %v331, 4
    %v333 = vadd.f32 %v331, %v332
    %v334 = vrot.slane %v333, 2
    %v335 = vadd.f32 %v333, %v334
    %v336 = vrot.slane %v335, 1
    %v337 = vadd.f32 %v335, %v336
    %v338 = vmul.f32 %v337, 0.008333334
    %v339 = vadd.f32 %v338, 1e-05
    %v340 = vrsqrt.pop %v339
    %v341 = vmul.f32 %v234, %v340
    %v342 = vlaneseq
    %v343 = vshrl.u32 %v342, 7
    %v344 = vsub.s32 0, %v343
    %v345 = vrot.slane %v341, %v344
    %v346 = vmul.f32 %v273, %v345
    %v347 = vmul.f32 %v274, %v345
    %v348 = vmul.f32 %v275, %v345
    %v349 = vmul.f32 %v276, %v345
    %v350 = vmul.f32 %v277, %v345
    %v351 = vmul.f32 %v278, %v345
    %v352 = vmul.f32 %v279, %v345
    %v353 = vmul.f32 %v280, %v345
    %v354 = vmul.f32 %v281, %v345
    %v355 = vmul.f32 %v282, %v345
    %v356 = vmul.f32 %v283, %v345
    %v357 = vmul.f32 %v284, %v345
    %v358 = vmul.f32 %v285, %v345
    %v359 = vmul.f32 %v286, %v345
    %v360 = vmul.f32 %v287, %v345
    %v361 = vlaneseq
    %v362 = vshrl.u32 %v361, 7
    %v363 = vsub.s32 0, %v362
    %v364 = vrot.slane %v235, %v363
    %v365 = vadd.f32 %v346, %v364
    %v366 = vadd.f32 %v347, %v364
    %v367 = vadd.f32 %v348, %v364
    %v368 = vadd.f32 %v349, %v364
    %v369 = vadd.f32 %v350, %v364
    %v370 = vadd.f32 %v351, %v364
    %v371 = vadd.f32 %v352, %v364
    %v372 = vadd.f32 %v353, %v364
    %v373 = vadd.f32 %v354, %v364
    %v374 = vadd.f32 %v355, %v364
    %v375 = vadd.f32 %v356, %v364
    %v376 = vadd.f32 %v357, %v364
    %v377 = vadd.f32 %v358, %v364
    %v378 = vadd.f32 %v359, %v364
    %v379 = vadd.f32 %v360, %v364
    %vm380 = vcmp.ge.f32.partialorder %v365, 0.0
    %vm381 = vcmp.ge.f32.partialorder %v366, 0.0
    %vm382 = vcmp.ge.f32.partialorder %v367, 0.0
    %vm383 = vcmp.ge.f32.partialorder %v368, 0.0
    %vm384 = vcmp.ge.f32.partialorder %v369, 0.0
    %vm385 = vcmp.ge.f32.partialorder %v370, 0.0
    %vm386 = vcmp.ge.f32.partialorder %v371, 0.0
    %vm387 = vcmp.ge.f32.partialorder %v372, 0.0
    %vm388 = vcmp.ge.f32.partialorder %v373, 0.0
    %vm389 = vcmp.ge.f32.partialorder %v374, 0.0
    %vm390 = vcmp.ge.f32.partialorder %v375, 0.0
    %vm391 = vcmp.ge.f32.partialorder %v376, 0.0
    %vm392 = vcmp.ge.f32.partialorder %v377, 0.0
    %vm393 = vcmp.ge.f32.partialorder %v378, 0.0
    %vm394 = vcmp.ge.f32.partialorder %v379, 0.0
    %v395 = vmul.f32 %v365, 0.01
    %v396 = vmul.f32 %v366, 0.01
    %v397 = vmul.f32 %v367, 0.01
    %v398 = vmul.f32 %v368, 0.01
    %v399 = vmul.f32 %v369, 0.01
    %v400 = vmul.f32 %v370, 0.01
    %v401 = vmul.f32 %v371, 0.01
    %v402 = vmul.f32 %v372, 0.01
    %v403 = vmul.f32 %v373, 0.01
    %v404 = vmul.f32 %v374, 0.01
    %v405 = vmul.f32 %v375, 0.01
    %v406 = vmul.f32 %v376, 0.01
    %v407 = vmul.f32 %v377, 0.01
    %v408 = vmul.f32 %v378, 0.01
    %v409 = vmul.f32 %v379, 0.01
    %v410 = vsel %vm380, %v365, %v395
    %v411 = vsel %vm381, %v366, %v396
    %v412 = vsel %vm382, %v367, %v397
    %v413 = vsel %vm383, %v368, %v398
    %v414 = vsel %vm384, %v369, %v399
    %v415 = vsel %vm385, %v370, %v400
    %v416 = vsel %vm386, %v371, %v401
    %v417 = vsel %vm387, %v372, %v402
    %v418 = vsel %vm388, %v373, %v403
    %v419 = vsel %vm389, %v374, %v404
    %v420 = vsel %vm390, %v375, %v405
    %v421 = vsel %vm391, %v376, %v406
    %v422 = vsel %vm392, %v377, %v407
    %v423 = vsel %vm393, %v378, %v408
    %v424 = vsel %vm394, %v379, %v409
    %425 = vst.msk [vmem:[#allocation2] sm:$0xff] %vm236, %v410
    %426 = vst.msk [vmem:[#allocation2 + $0x8] sm:$0xff] %vm236, %v411
    %427 = vst.msk [vmem:[#allocation2 + $0x10] sm:$0xff] %vm236, %v412
    %428 = vst.msk [vmem:[#allocation2 + $0x18] sm:$0xff] %vm236, %v413
    %429 = vst.msk [vmem:[#allocation2 + $0x20] sm:$0xff] %vm236, %v414
    %430 = vst.msk [vmem:[#allocation2 + $0x28] sm:$0xff] %vm236, %v415
    %431 = vst.msk [vmem:[#allocation2 + $0x30] sm:$0xff] %vm236, %v416
    %432 = vst.msk [vmem:[#allocation2 + $0x38] sm:$0xff] %vm236, %v417
    %433 = vst.msk [vmem:[#allocation2 + $0x40] sm:$0xff] %vm236, %v418
    %434 = vst.msk [vmem:[#allocation2 + $0x48] sm:$0xff] %vm236, %v419
    %435 = vst.msk [vmem:[#allocation2 + $0x50] sm:$0xff] %vm236, %v420
    %436 = vst.msk [vmem:[#allocation2 + $0x58] sm:$0xff] %vm236, %v421
    %437 = vst.msk [vmem:[#allocation2 + $0x60] sm:$0xff] %vm236, %v422
    %438 = vst.msk [vmem:[#allocation2 + $0x68] sm:$0xff] %vm236, %v423
    %439 = vst.msk [vmem:[#allocation2 + $0x70] sm:$0xff] %vm236, %v424
    %v440 = vld [vmem:[#allocation2] sm:$0xff]
    %v441 = vld [vmem:[#allocation2 + $0x8] sm:$0xff]
    %v442 = vld [vmem:[#allocation2 + $0x10] sm:$0xff]
    %v443 = vld [vmem:[#allocation2 + $0x18] sm:$0xff]
    %v444 = vld [vmem:[#allocation2 + $0x20] sm:$0xff]
    %v445 = vld [vmem:[#allocation2 + $0x28] sm:$0xff]
    %v446 = vld [vmem:[#allocation2 + $0x30] sm:$0xf]
    %v447 = vld [vmem:[%s2] sm:$0xff]
    %v448 = vld [vmem:[%s2 + $0x8] sm:$0xff]
    %v449 = vld [vmem:[%s2 + $0x10] sm:$0xf]
    %v450 = vld [vmem:[#allocation2 + $0x2] sm:$0xff]
    %v451 = vld [vmem:[#allocation2 + $0xa] sm:$0xff]
    %v452 = vld [vmem:[#allocation2 + $0x12] sm:$0xff]
    %v453 = vld [vmem:[#allocation2 + $0x1a] sm:$0xff]
    %v454 = vld [vmem:[#allocation2 + $0x22] sm:$0xff]
    %v455 = vld [vmem:[#allocation2 + $0x2a] sm:$0xff]
    %v456 = vld [vmem:[#allocation2 + $0x32] sm:$0xf]
    %s457 = scalar_lea.vmem %s2, 48
    %v458 = vld [vmem:[%s457] sm:$0xff]
    %v459 = vld [vmem:[%s457 + $0x8] sm:$0xff]
    %v460 = vld [vmem:[%s457 + $0x10] sm:$0xf]
    %v462 = vsel %vm236, %v450, 0
    %v465 = vsel %vm236, %v451, 0
    %v468 = vsel %vm236, %v452, 0
    %v471 = vsel %vm236, %v453, 0
    %v474 = vsel %vm236, %v454, 0
    %v477 = vsel %vm236, %v455, 0
    %v480 = vsel %vm236, %v456, 0
    %vm482 = vcmask 1043456
    %v484 = vsel %vm482, %v460, 0
    %486 = vmatprep.subr.mxu0 0.0
    %487 = vmatpush1.msra.mxu0 %v458
    %488 = vmatprep.subr.mxu0 0.0
    %489 = vmatpush1.msra.mxu0 %v459
    %490 = vmatprep.subr.mxu0 0.0
    %491 = vmatpush1.msra.mxu0 %v484
    %492 = vmatprep.subr.mxu0 0.0
    %493 = vmatpush1.msra.mxu0 0.0
    %494 = vmatprep.subr.mxu0 0.0
    %495 = vmatpush1.msra.mxu0 0.0
    %496 = vmatprep.subr.mxu0 0.0
    %497 = vmatpush1.msra.mxu0 0.0
    %498 = vmatprep.subr.mxu0 0.0
    %499 = vmatpush1.msra.mxu0 0.0
    %500 = vmatprep.subr.mxu0 0.0
    %501 = vmatpush1.msra.mxu0 0.0
    %502 = vmatprep.subr.mxu0 0.0
    %503 = vmatpush1.msra.mxu0 0.0
    %504 = vmatprep.subr.mxu0 0.0
    %505 = vmatpush1.msra.mxu0 0.0
    %506 = vmatprep.subr.mxu0 0.0
    %507 = vmatpush1.msra.mxu0 0.0
    %508 = vmatprep.subr.mxu0 0.0
    %509 = vmatpush1.msra.mxu0 0.0
    %510 = vmatprep.subr.mxu0 0.0
    %511 = vmatpush1.msra.mxu0 0.0
    %512 = vmatprep.subr.mxu0 0.0
    %513 = vmatpush1.msra.mxu0 0.0
    %514 = vmatprep.subr.mxu0 0.0
    %515 = vmatpush1.msra.mxu0 0.0
    %516 = vmatprep.subr.mxu0 0.0
    %517 = vmatpush1.msra.mxu0 0.0
    %518 = vmatprep.subr.mxu0 0.0
    %519 = vmatpush1.msra.mxu0 0.0
    %520 = vmatprep.subr.mxu0 0.0
    %521 = vmatpush1.msra.mxu0 0.0
    %522 = vmatprep.subr.mxu0 0.0
    %523 = vmatpush1.msra.mxu0 0.0
    %524 = vmatprep.subr.mxu0 0.0
    %525 = vmatpush1.msra.mxu0 0.0
    %526 = vmatprep.subr.mxu0 0.0
    %527 = vmatpush1.msra.mxu0 0.0
    %528 = vmatprep.subr.mxu0 0.0
    %529 = vmatpush1.msra.mxu0 0.0
    %530 = vmatprep.subr.mxu0 0.0
    %531 = vmatpush1.msra.mxu0 0.0
    %532 = vmatprep.subr.mxu0 0.0
    %533 = vmatpush1.msra.mxu0 0.0
    %534 = vmatprep.subr.mxu0 0.0
    %535 = vmatpush1.msra.mxu0 0.0
    %536 = vmatprep.subr.mxu0 0.0
    %537 = vmatpush1.msra.mxu0 0.0
    %538 = vmatprep.subr.mxu0 0.0
    %539 = vmatpush1.msra.mxu0 0.0
    %540 = vmatprep.subr.mxu0 0.0
    %541 = vmatpush1.msra.mxu0 0.0
    %542 = vmatprep.subr.mxu0 0.0
    %543 = vmatpush1.msra.mxu0 0.0
    %544 = vmatprep.subr.mxu0 0.0
    %545 = vmatpush1.msra.mxu0 0.0
    %546 = vmatprep.subr.mxu0 0.0
    %547 = vmatpush1.msra.mxu0 0.0
    %548 = vmatprep.subr.mxu0 0.0
    %549 = vmatpush1.msra.mxu0 0.0
    %550 = vmatprep.mubr.f32.mxu0 0.0
    %551 = vmatmul.mubr.f32.gmra.mrb[0].mxu0 %v462
    %v552 = vpop.f32.mrb[0].mxu0
    %v553 = vadd.f32 0.0, %v552
    %v554 = vpop.f32.mrb[0].mxu0
    %555 = vmatprep.mubr.f32.mxu0 0.0
    %556 = vmatmul.mubr.f32.gmra.mrb[0].mxu0 %v465
    %v557 = vpop.f32.mrb[0].mxu0
    %v558 = vadd.f32 0.0, %v557
    %v559 = vpop.f32.mrb[0].mxu0
    %560 = vmatprep.mubr.f32.mxu0 0.0
    %561 = vmatmul.mubr.f32.gmra.mrb[0].mxu0 %v468
    %v562 = vpop.f32.mrb[0].mxu0
    %v563 = vadd.f32 0.0, %v562
    %v564 = vpop.f32.mrb[0].mxu0
    %565 = vmatprep.mubr.f32.mxu0 0.0
    %566 = vmatmul.mubr.f32.gmra.mrb[0].mxu0 %v471
    %v567 = vpop.f32.mrb[0].mxu0
    %v568 = vadd.f32 0.0, %v567
    %v569 = vpop.f32.mrb[0].mxu0
    %570 = vmatprep.mubr.f32.mxu0 0.0
    %571 = vmatmul.mubr.f32.gmra.mrb[0].mxu0 %v474
    %v572 = vpop.f32.mrb[0].mxu0
    %v573 = vadd.f32 0.0, %v572
    %v574 = vpop.f32.mrb[0].mxu0
    %575 = vmatprep.mubr.f32.mxu0 0.0
    %576 = vmatmul.mubr.f32.gmra.mrb[0].mxu0 %v477
    %v577 = vpop.f32.mrb[0].mxu0
    %v578 = vadd.f32 0.0, %v577
    %v579 = vpop.f32.mrb[0].mxu0
    %580 = vmatprep.mubr.f32.mxu0 0.0
    %581 = vmatmul.mubr.f32.gmra.mrb[0].mxu0 %v480
    %v582 = vpop.f32.mrb[0].mxu0
    %v583 = vadd.f32 0.0, %v582
    %v584 = vpop.f32.mrb[0].mxu0
    %585 = vdwg.mxu0
    %v587 = vsel %vm236, %v440, 0
    %v590 = vsel %vm236, %v441, 0
    %v593 = vsel %vm236, %v442, 0
    %v596 = vsel %vm236, %v443, 0
    %v599 = vsel %vm236, %v444, 0
    %v602 = vsel %vm236, %v445, 0
    %v605 = vsel %vm236, %v446, 0
    %v608 = vsel %vm482, %v449, 0
    %610 = vmatprep.subr.mxu0 0.0
    %611 = vmatpush1.msra.mxu0 %v447
    %612 = vmatprep.subr.mxu0 0.0
    %613 = vmatpush1.msra.mxu0 %v448
    %614 = vmatprep.subr.mxu0 0.0
    %615 = vmatpush1.msra.mxu0 %v608
    %616 = vmatprep.subr.mxu0 0.0
    %617 = vmatpush1.msra.mxu0 0.0
    %618 = vmatprep.subr.mxu0 0.0
    %619 = vmatpush1.msra.mxu0 0.0
    %620 = vmatprep.subr.mxu0 0.0
    %621 = vmatpush1.msra.mxu0 0.0
    %622 = vmatprep.subr.mxu0 0.0
    %623 = vmatpush1.msra.mxu0 0.0
    %624 = vmatprep.subr.mxu0 0.0
    %625 = vmatpush1.msra.mxu0 0.0
    %626 = vmatprep.subr.mxu0 0.0
    %627 = vmatpush1.msra.mxu0 0.0
    %628 = vmatprep.subr.mxu0 0.0
    %629 = vmatpush1.msra.mxu0 0.0
    %630 = vmatprep.subr.mxu0 0.0
    %631 = vmatpush1.msra.mxu0 0.0
    %632 = vmatprep.subr.mxu0 0.0
    %633 = vmatpush1.msra.mxu0 0.0
    %634 = vmatprep.subr.mxu0 0.0
    %635 = vmatpush1.msra.mxu0 0.0
    %636 = vmatprep.subr.mxu0 0.0
    %637 = vmatpush1.msra.mxu0 0.0
    %638 = vmatprep.subr.mxu0 0.0
    %639 = vmatpush1.msra.mxu0 0.0
    %640 = vmatprep.subr.mxu0 0.0
    %641 = vmatpush1.msra.mxu0 0.0
    %642 = vmatprep.subr.mxu0 0.0
    %643 = vmatpush1.msra.mxu0 0.0
    %644 = vmatprep.subr.mxu0 0.0
    %645 = vmatpush1.msra.mxu0 0.0
    %646 = vmatprep.subr.mxu0 0.0
    %647 = vmatpush1.msra.mxu0 0.0
    %648 = vmatprep.subr.mxu0 0.0
    %649 = vmatpush1.msra.mxu0 0.0
    %650 = vmatprep.subr.mxu0 0.0
    %651 = vmatpush1.msra.mxu0 0.0
    %652 = vmatprep.subr.mxu0 0.0
    %653 = vmatpush1.msra.mxu0 0.0
    %654 = vmatprep.subr.mxu0 0.0
    %655 = vmatpush1.msra.mxu0 0.0
    %656 = vmatprep.subr.mxu0 0.0
    %657 = vmatpush1.msra.mxu0 0.0
    %658 = vmatprep.subr.mxu0 0.0
    %659 = vmatpush1.msra.mxu0 0.0
    %660 = vmatprep.subr.mxu0 0.0
    %661 = vmatpush1.msra.mxu0 0.0
    %662 = vmatprep.subr.mxu0 0.0
    %663 = vmatpush1.msra.mxu0 0.0
    %664 = vmatprep.subr.mxu0 0.0
    %665 = vmatpush1.msra.mxu0 0.0
    %666 = vmatprep.subr.mxu0 0.0
    %667 = vmatpush1.msra.mxu0 0.0
    %668 = vmatprep.subr.mxu0 0.0
    %669 = vmatpush1.msra.mxu0 0.0
    %670 = vmatprep.subr.mxu0 0.0
    %671 = vmatpush1.msra.mxu0 0.0
    %672 = vmatprep.subr.mxu0 0.0
    %673 = vmatpush1.msra.mxu0 0.0
    %674 = vmatprep.mubr.f32.mxu0 0.0
    %675 = vmatmul.mubr.f32.gmra.mrb[0].mxu0 %v587
    %v676 = vpop.f32.mrb[0].mxu0
    %v677 = vadd.f32 %v553, %v676
    %v678 = vpop.f32.mrb[0].mxu0
    %679 = vmatprep.mubr.f32.mxu0 0.0
    %680 = vmatmul.mubr.f32.gmra.mrb[0].mxu0 %v590
    %v681 = vpop.f32.mrb[0].mxu0
    %v682 = vadd.f32 %v558, %v681
    %v683 = vpop.f32.mrb[0].mxu0
    %684 = vmatprep.mubr.f32.mxu0 0.0
    %685 = vmatmul.mubr.f32.gmra.mrb[0].mxu0 %v593
    %v686 = vpop.f32.mrb[0].mxu0
    %v687 = vadd.f32 %v563, %v686
    %v688 = vpop.f32.mrb[0].mxu0
    %689 = vmatprep.mubr.f32.mxu0 0.0
    %690 = vmatmul.mubr.f32.gmra.mrb[0].mxu0 %v596
    %v691 = vpop.f32.mrb[0].mxu0
    %v692 = vadd.f32 %v568, %v691
    %v693 = vpop.f32.mrb[0].mxu0
    %694 = vmatprep.mubr.f32.mxu0 0.0
    %695 = vmatmul.mubr.f32.gmra.mrb[0].mxu0 %v599
    %v696 = vpop.f32.mrb[0].mxu0
    %v697 = vadd.f32 %v573, %v696
    %v698 = vpop.f32.mrb[0].mxu0
    %699 = vmatprep.mubr.f32.mxu0 0.0
    %700 = vmatmul.mubr.f32.gmra.mrb[0].mxu0 %v602
    %v701 = vpop.f32.mrb[0].mxu0
    %v702 = vadd.f32 %v578, %v701
    %v703 = vpop.f32.mrb[0].mxu0
    %704 = vmatprep.mubr.f32.mxu0 0.0
    %705 = vmatmul.mubr.f32.gmra.mrb[0].mxu0 %v605
    %v706 = vpop.f32.mrb[0].mxu0
    %v707 = vadd.f32 %v583, %v706
    %v708 = vpop.f32.mrb[0].mxu0
    %709 = vdwg.mxu0
    %v710 = vld [vmem:[#allocation2 + $0x4] sm:$0xff]
    %v711 = vld [vmem:[#allocation2 + $0xc] sm:$0xff]
    %v712 = vld [vmem:[#allocation2 + $0x14] sm:$0xff]
    %v713 = vld [vmem:[#allocation2 + $0x1c] sm:$0xff]
    %v714 = vld [vmem:[#allocation2 + $0x24] sm:$0xff]
    %v715 = vld [vmem:[#allocation2 + $0x2c] sm:$0xff]
    %v716 = vld [vmem:[#allocation2 + $0x34] sm:$0xf]
    %s717 = scalar_lea.vmem %s2, 96
    %v718 = vld [vmem:[%s717] sm:$0xff]
    %v719 = vld [vmem:[%s717 + $0x8] sm:$0xff]
    %v720 = vld [vmem:[%s717 + $0x10] sm:$0xf]
    %v722 = vsel %vm236, %v710, 0
    %v725 = vsel %vm236, %v711, 0
    %v728 = vsel %vm236, %v712, 0
    %v731 = vsel %vm236, %v713, 0
    %v734 = vsel %vm236, %v714, 0
    %v737 = vsel %vm236, %v715, 0
    %v740 = vsel %vm236, %v716, 0
    %v743 = vsel %vm482, %v720, 0
    %745 = vmatprep.subr.mxu0 0.0
    %746 = vmatpush1.msra.mxu0 %v718
    %747 = vmatprep.subr.mxu0 0.0
    %748 = vmatpush1.msra.mxu0 %v719
    %749 = vmatprep.subr.mxu0 0.0
    %750 = vmatpush1.msra.mxu0 %v743
    %751 = vmatprep.subr.mxu0 0.0
    %752 = vmatpush1.msra.mxu0 0.0
    %753 = vmatprep.subr.mxu0 0.0
    %754 = vmatpush1.msra.mxu0 0.0
    %755 = vmatprep.subr.mxu0 0.0
    %756 = vmatpush1.msra.mxu0 0.0
    %757 = vmatprep.subr.mxu0 0.0
    %758 = vmatpush1.msra.mxu0 0.0
    %759 = vmatprep.subr.mxu0 0.0
    %760 = vmatpush1.msra.mxu0 0.0
    %761 = vmatprep.subr.mxu0 0.0
    %762 = vmatpush1.msra.mxu0 0.0
    %763 = vmatprep.subr.mxu0 0.0
    %764 = vmatpush1.msra.mxu0 0.0
    %765 = vmatprep.subr.mxu0 0.0
    %766 = vmatpush1.msra.mxu0 0.0
    %767 = vmatprep.subr.mxu0 0.0
    %768 = vmatpush1.msra.mxu0 0.0
    %769 = vmatprep.subr.mxu0 0.0
    %770 = vmatpush1.msra.mxu0 0.0
    %771 = vmatprep.subr.mxu0 0.0
    %772 = vmatpush1.msra.mxu0 0.0
    %773 = vmatprep.subr.mxu0 0.0
    %774 = vmatpush1.msra.mxu0 0.0
    %775 = vmatprep.subr.mxu0 0.0
    %776 = vmatpush1.msra.mxu0 0.0
    %777 = vmatprep.subr.mxu0 0.0
    %778 = vmatpush1.msra.mxu0 0.0
    %779 = vmatprep.subr.mxu0 0.0
    %780 = vmatpush1.msra.mxu0 0.0
    %781 = vmatprep.subr.mxu0 0.0
    %782 = vmatpush1.msra.mxu0 0.0
    %783 = vmatprep.subr.mxu0 0.0
    %784 = vmatpush1.msra.mxu0 0.0
    %785 = vmatprep.subr.mxu0 0.0
    %786 = vmatpush1.msra.mxu0 0.0
    %787 = vmatprep.subr.mxu0 0.0
    %788 = vmatpush1.msra.mxu0 0.0
    %789 = vmatprep.subr.mxu0 0.0
    %790 = vmatpush1.msra.mxu0 0.0
    %791 = vmatprep.subr.mxu0 0.0
    %792 = vmatpush1.msra.mxu0 0.0
    %793 = vmatprep.subr.mxu0 0.0
    %794 = vmatpush1.msra.mxu0 0.0
    %795 = vmatprep.subr.mxu0 0.0
    %796 = vmatpush1.msra.mxu0 0.0
    %797 = vmatprep.subr.mxu0 0.0
    %798 = vmatpush1.msra.mxu0 0.0
    %799 = vmatprep.subr.mxu0 0.0
    %800 = vmatpush1.msra.mxu0 0.0
    %801 = vmatprep.subr.mxu0 0.0
    %802 = vmatpush1.msra.mxu0 0.0
    %803 = vmatprep.subr.mxu0 0.0
    %804 = vmatpush1.msra.mxu0 0.0
    %805 = vmatprep.subr.mxu0 0.0
    %806 = vmatpush1.msra.mxu0 0.0
    %807 = vmatprep.subr.mxu0 0.0
    %808 = vmatpush1.msra.mxu0 0.0
    %809 = vmatprep.mubr.f32.mxu0 0.0
    %810 = vmatmul.mubr.f32.gmra.mrb[0].mxu0 %v722
    %v811 = vpop.f32.mrb[0].mxu0
    %v812 = vadd.f32 0.0, %v811
    %v813 = vpop.f32.mrb[0].mxu0
    %814 = vmatprep.mubr.f32.mxu0 0.0
    %815 = vmatmul.mubr.f32.gmra.mrb[0].mxu0 %v725
    %v816 = vpop.f32.mrb[0].mxu0
    %v817 = vadd.f32 0.0, %v816
    %v818 = vpop.f32.mrb[0].mxu0
    %819 = vmatprep.mubr.f32.mxu0 0.0
    %820 = vmatmul.mubr.f32.gmra.mrb[0].mxu0 %v728
    %v821 = vpop.f32.mrb[0].mxu0
    %v822 = vadd.f32 0.0, %v821
    %v823 = vpop.f32.mrb[0].mxu0
    %824 = vmatprep.mubr.f32.mxu0 0.0
    %825 = vmatmul.mubr.f32.gmra.mrb[0].mxu0 %v731
    %v826 = vpop.f32.mrb[0].mxu0
    %v827 = vadd.f32 0.0, %v826
    %v828 = vpop.f32.mrb[0].mxu0
    %829 = vmatprep.mubr.f32.mxu0 0.0
    %830 = vmatmul.mubr.f32.gmra.mrb[0].mxu0 %v734
    %v831 = vpop.f32.mrb[0].mxu0
    %v832 = vadd.f32 0.0, %v831
    %v833 = vpop.f32.mrb[0].mxu0
    %834 = vmatprep.mubr.f32.mxu0 0.0
    %835 = vmatmul.mubr.f32.gmra.mrb[0].mxu0 %v737
    %v836 = vpop.f32.mrb[0].mxu0
    %v837 = vadd.f32 0.0, %v836
    %v838 = vpop.f32.mrb[0].mxu0
    %839 = vmatprep.mubr.f32.mxu0 0.0
    %840 = vmatmul.mubr.f32.gmra.mrb[0].mxu0 %v740
    %v841 = vpop.f32.mrb[0].mxu0
    %v842 = vadd.f32 0.0, %v841
    %v843 = vpop.f32.mrb[0].mxu0
    %844 = vdwg.mxu0
    %v845 = vadd.f32 %v677, %v812
    %v846 = vadd.f32 %v682, %v817
    %v847 = vadd.f32 %v687, %v822
    %v848 = vadd.f32 %v692, %v827
    %v849 = vadd.f32 %v697, %v832
    %v850 = vadd.f32 %v702, %v837
    %v851 = vadd.f32 %v707, %v842
    %v852 = vld [vmem:[#allocation2 + $0x6] sm:$0xff]
    %v853 = vld [vmem:[#allocation2 + $0xe] sm:$0xff]
    %v854 = vld [vmem:[#allocation2 + $0x16] sm:$0xff]
    %v855 = vld [vmem:[#allocation2 + $0x1e] sm:$0xff]
    %v856 = vld [vmem:[#allocation2 + $0x26] sm:$0xff]
    %v857 = vld [vmem:[#allocation2 + $0x2e] sm:$0xff]
    %v858 = vld [vmem:[#allocation2 + $0x36] sm:$0xf]
    %s859 = scalar_lea.vmem %s2, 144
    %v860 = vld [vmem:[%s859] sm:$0xff]
    %v861 = vld [vmem:[%s859 + $0x8] sm:$0xff]
    %v862 = vld [vmem:[%s859 + $0x10] sm:$0xf]
    %v864 = vsel %vm236, %v852, 0
    %v867 = vsel %vm236, %v853, 0
    %v870 = vsel %vm236, %v854, 0
    %v873 = vsel %vm236, %v855, 0
    %v876 = vsel %vm236, %v856, 0
    %v879 = vsel %vm236, %v857, 0
    %v882 = vsel %vm236, %v858, 0
    %v885 = vsel %vm482, %v862, 0
    %887 = vmatprep.subr.mxu0 0.0
    %888 = vmatpush1.msra.mxu0 %v860
    %889 = vmatprep.subr.mxu0 0.0
    %890 = vmatpush1.msra.mxu0 %v861
    %891 = vmatprep.subr.mxu0 0.0
    %892 = vmatpush1.msra.mxu0 %v885
    %893 = vmatprep.subr.mxu0 0.0
    %894 = vmatpush1.msra.mxu0 0.0
    %895 = vmatprep.subr.mxu0 0.0
    %896 = vmatpush1.msra.mxu0 0.0
    %897 = vmatprep.subr.mxu0 0.0
    %898 = vmatpush1.msra.mxu0 0.0
    %899 = vmatprep.subr.mxu0 0.0
    %900 = vmatpush1.msra.mxu0 0.0
    %901 = vmatprep.subr.mxu0 0.0
    %902 = vmatpush1.msra.mxu0 0.0
    %903 = vmatprep.subr.mxu0 0.0
    %904 = vmatpush1.msra.mxu0 0.0
    %905 = vmatprep.subr.mxu0 0.0
    %906 = vmatpush1.msra.mxu0 0.0
    %907 = vmatprep.subr.mxu0 0.0
    %908 = vmatpush1.msra.mxu0 0.0
    %909 = vmatprep.subr.mxu0 0.0
    %910 = vmatpush1.msra.mxu0 0.0
    %911 = vmatprep.subr.mxu0 0.0
    %912 = vmatpush1.msra.mxu0 0.0
    %913 = vmatprep.subr.mxu0 0.0
    %914 = vmatpush1.msra.mxu0 0.0
    %915 = vmatprep.subr.mxu0 0.0
    %916 = vmatpush1.msra.mxu0 0.0
    %917 = vmatprep.subr.mxu0 0.0
    %918 = vmatpush1.msra.mxu0 0.0
    %919 = vmatprep.subr.mxu0 0.0
    %920 = vmatpush1.msra.mxu0 0.0
    %921 = vmatprep.subr.mxu0 0.0
    %922 = vmatpush1.msra.mxu0 0.0
    %923 = vmatprep.subr.mxu0 0.0
    %924 = vmatpush1.msra.mxu0 0.0
    %925 = vmatprep.subr.mxu0 0.0
    %926 = vmatpush1.msra.mxu0 0.0
    %927 = vmatprep.subr.mxu0 0.0
    %928 = vmatpush1.msra.mxu0 0.0
    %929 = vmatprep.subr.mxu0 0.0
    %930 = vmatpush1.msra.mxu0 0.0
    %931 = vmatprep.subr.mxu0 0.0
    %932 = vmatpush1.msra.mxu0 0.0
    %933 = vmatprep.subr.mxu0 0.0
    %934 = vmatpush1.msra.mxu0 0.0
    %935 = vmatprep.subr.mxu0 0.0
    %936 = vmatpush1.msra.mxu0 0.0
    %937 = vmatprep.subr.mxu0 0.0
    %938 = vmatpush1.msra.mxu0 0.0
    %939 = vmatprep.subr.mxu0 0.0
    %940 = vmatpush1.msra.mxu0 0.0
    %941 = vmatprep.subr.mxu0 0.0
    %942 = vmatpush1.msra.mxu0 0.0
    %943 = vmatprep.subr.mxu0 0.0
    %944 = vmatpush1.msra.mxu0 0.0
    %945 = vmatprep.subr.mxu0 0.0
    %946 = vmatpush1.msra.mxu0 0.0
    %947 = vmatprep.subr.mxu0 0.0
    %948 = vmatpush1.msra.mxu0 0.0
    %949 = vmatprep.subr.mxu0 0.0
    %950 = vmatpush1.msra.mxu0 0.0
    %951 = vmatprep.mubr.f32.mxu0 0.0
    %952 = vmatmul.mubr.f32.gmra.mrb[0].mxu0 %v864
    %v953 = vpop.f32.mrb[0].mxu0
    %v954 = vadd.f32 0.0, %v953
    %v955 = vpop.f32.mrb[0].mxu0
    %956 = vmatprep.mubr.f32.mxu0 0.0
    %957 = vmatmul.mubr.f32.gmra.mrb[0].mxu0 %v867
    %v958 = vpop.f32.mrb[0].mxu0
    %v959 = vadd.f32 0.0, %v958
    %v960 = vpop.f32.mrb[0].mxu0
    %961 = vmatprep.mubr.f32.mxu0 0.0
    %962 = vmatmul.mubr.f32.gmra.mrb[0].mxu0 %v870
    %v963 = vpop.f32.mrb[0].mxu0
    %v964 = vadd.f32 0.0, %v963
    %v965 = vpop.f32.mrb[0].mxu0
    %966 = vmatprep.mubr.f32.mxu0 0.0
    %967 = vmatmul.mubr.f32.gmra.mrb[0].mxu0 %v873
    %v968 = vpop.f32.mrb[0].mxu0
    %v969 = vadd.f32 0.0, %v968
    %v970 = vpop.f32.mrb[0].mxu0
    %971 = vmatprep.mubr.f32.mxu0 0.0
    %972 = vmatmul.mubr.f32.gmra.mrb[0].mxu0 %v876
    %v973 = vpop.f32.mrb[0].mxu0
    %v974 = vadd.f32 0.0, %v973
    %v975 = vpop.f32.mrb[0].mxu0
    %976 = vmatprep.mubr.f32.mxu0 0.0
    %977 = vmatmul.mubr.f32.gmra.mrb[0].mxu0 %v879
    %v978 = vpop.f32.mrb[0].mxu0
    %v979 = vadd.f32 0.0, %v978
    %v980 = vpop.f32.mrb[0].mxu0
    %981 = vmatprep.mubr.f32.mxu0 0.0
    %982 = vmatmul.mubr.f32.gmra.mrb[0].mxu0 %v882
    %v983 = vpop.f32.mrb[0].mxu0
    %v984 = vadd.f32 0.0, %v983
    %v985 = vpop.f32.mrb[0].mxu0
    %986 = vdwg.mxu0
    %v987 = vadd.f32 %v845, %v954
    %v988 = vadd.f32 %v846, %v959
    %v989 = vadd.f32 %v847, %v964
    %v990 = vadd.f32 %v848, %v969
    %v991 = vadd.f32 %v849, %v974
    %v992 = vadd.f32 %v850, %v979
    %v993 = vadd.f32 %v851, %v984
    %v994 = vld [vmem:[#allocation2 + $0x8] sm:$0xff]
    %v995 = vld [vmem:[#allocation2 + $0x10] sm:$0xff]
    %v996 = vld [vmem:[#allocation2 + $0x18] sm:$0xff]
    %v997 = vld [vmem:[#allocation2 + $0x20] sm:$0xff]
    %v998 = vld [vmem:[#allocation2 + $0x28] sm:$0xff]
    %v999 = vld [vmem:[#allocation2 + $0x30] sm:$0xff]
    %v1000 = vld [vmem:[#allocation2 + $0x38] sm:$0xf]
    %s1001 = scalar_lea.vmem %s2, 192
    %v1002 = vld [vmem:[%s1001] sm:$0xff]
    %v1003 = vld [vmem:[%s1001 + $0x8] sm:$0xff]
    %v1004 = vld [vmem:[%s1001 + $0x10] sm:$0xf]
    %v1006 = vsel %vm236, %v994, 0
    %v1009 = vsel %vm236, %v995, 0
    %v1012 = vsel %vm236, %v996, 0
    %v1015 = vsel %vm236, %v997, 0
    %v1018 = vsel %vm236, %v998, 0
    %v1021 = vsel %vm236, %v999, 0
    %v1024 = vsel %vm236, %v1000, 0
    %v1027 = vsel %vm482, %v1004, 0
    %1029 = vmatprep.subr.mxu0 0.0
    %1030 = vmatpush1.msra.mxu0 %v1002
    %1031 = vmatprep.subr.mxu0 0.0
    %1032 = vmatpush1.msra.mxu0 %v1003
    %1033 = vmatprep.subr.mxu0 0.0
    %1034 = vmatpush1.msra.mxu0 %v1027
    %1035 = vmatprep.subr.mxu0 0.0
    %1036 = vmatpush1.msra.mxu0 0.0
    %1037 = vmatprep.subr.mxu0 0.0
    %1038 = vmatpush1.msra.mxu0 0.0
    %1039 = vmatprep.subr.mxu0 0.0
    %1040 = vmatpush1.msra.mxu0 0.0
    %1041 = vmatprep.subr.mxu0 0.0
    %1042 = vmatpush1.msra.mxu0 0.0
    %1043 = vmatprep.subr.mxu0 0.0
    %1044 = vmatpush1.msra.mxu0 0.0
    %1045 = vmatprep.subr.mxu0 0.0
    %1046 = vmatpush1.msra.mxu0 0.0
    %1047 = vmatprep.subr.mxu0 0.0
    %1048 = vmatpush1.msra.mxu0 0.0
    %1049 = vmatprep.subr.mxu0 0.0
    %1050 = vmatpush1.msra.mxu0 0.0
    %1051 = vmatprep.subr.mxu0 0.0
    %1052 = vmatpush1.msra.mxu0 0.0
    %1053 = vmatprep.subr.mxu0 0.0
    %1054 = vmatpush1.msra.mxu0 0.0
    %1055 = vmatprep.subr.mxu0 0.0
    %1056 = vmatpush1.msra.mxu0 0.0
    %1057 = vmatprep.subr.mxu0 0.0
    %1058 = vmatpush1.msra.mxu0 0.0
    %1059 = vmatprep.subr.mxu0 0.0
    %1060 = vmatpush1.msra.mxu0 0.0
    %1061 = vmatprep.subr.mxu0 0.0
    %1062 = vmatpush1.msra.mxu0 0.0
    %1063 = vmatprep.subr.mxu0 0.0
    %1064 = vmatpush1.msra.mxu0 0.0
    %1065 = vmatprep.subr.mxu0 0.0
    %1066 = vmatpush1.msra.mxu0 0.0
    %1067 = vmatprep.subr.mxu0 0.0
    %1068 = vmatpush1.msra.mxu0 0.0
    %1069 = vmatprep.subr.mxu0 0.0
    %1070 = vmatpush1.msra.mxu0 0.0
    %1071 = vmatprep.subr.mxu0 0.0
    %1072 = vmatpush1.msra.mxu0 0.0
    %1073 = vmatprep.subr.mxu0 0.0
    %1074 = vmatpush1.msra.mxu0 0.0
    %1075 = vmatprep.subr.mxu0 0.0
    %1076 = vmatpush1.msra.mxu0 0.0
    %1077 = vmatprep.subr.mxu0 0.0
    %1078 = vmatpush1.msra.mxu0 0.0
    %1079 = vmatprep.subr.mxu0 0.0
    %1080 = vmatpush1.msra.mxu0 0.0
    %1081 = vmatprep.subr.mxu0 0.0
    %1082 = vmatpush1.msra.mxu0 0.0
    %1083 = vmatprep.subr.mxu0 0.0
    %1084 = vmatpush1.msra.mxu0 0.0
    %1085 = vmatprep.subr.mxu0 0.0
    %1086 = vmatpush1.msra.mxu0 0.0
    %1087 = vmatprep.subr.mxu0 0.0
    %1088 = vmatpush1.msra.mxu0 0.0
    %1089 = vmatprep.subr.mxu0 0.0
    %1090 = vmatpush1.msra.mxu0 0.0
    %1091 = vmatprep.subr.mxu0 0.0
    %1092 = vmatpush1.msra.mxu0 0.0
    %1093 = vmatprep.mubr.f32.mxu0 0.0
    %1094 = vmatmul.mubr.f32.gmra.mrb[0].mxu0 %v1006
    %v1095 = vpop.f32.mrb[0].mxu0
    %v1096 = vadd.f32 0.0, %v1095
    %v1097 = vpop.f32.mrb[0].mxu0
    %1098 = vmatprep.mubr.f32.mxu0 0.0
    %1099 = vmatmul.mubr.f32.gmra.mrb[0].mxu0 %v1009
    %v1100 = vpop.f32.mrb[0].mxu0
    %v1101 = vadd.f32 0.0, %v1100
    %v1102 = vpop.f32.mrb[0].mxu0
    %1103 = vmatprep.mubr.f32.mxu0 0.0
    %1104 = vmatmul.mubr.f32.gmra.mrb[0].mxu0 %v1012
    %v1105 = vpop.f32.mrb[0].mxu0
    %v1106 = vadd.f32 0.0, %v1105
    %v1107 = vpop.f32.mrb[0].mxu0
    %1108 = vmatprep.mubr.f32.mxu0 0.0
    %1109 = vmatmul.mubr.f32.gmra.mrb[0].mxu0 %v1015
    %v1110 = vpop.f32.mrb[0].mxu0
    %v1111 = vadd.f32 0.0, %v1110
    %v1112 = vpop.f32.mrb[0].mxu0
    %1113 = vmatprep.mubr.f32.mxu0 0.0
    %1114 = vmatmul.mubr.f32.gmra.mrb[0].mxu0 %v1018
    %v1115 = vpop.f32.mrb[0].mxu0
    %v1116 = vadd.f32 0.0, %v1115
    %v1117 = vpop.f32.mrb[0].mxu0
    %1118 = vmatprep.mubr.f32.mxu0 0.0
    %1119 = vmatmul.mubr.f32.gmra.mrb[0].mxu0 %v1021
    %v1120 = vpop.f32.mrb[0].mxu0
    %v1121 = vadd.f32 0.0, %v1120
    %v1122 = vpop.f32.mrb[0].mxu0
    %1123 = vmatprep.mubr.f32.mxu0 0.0
    %1124 = vmatmul.mubr.f32.gmra.mrb[0].mxu0 %v1024
    %v1125 = vpop.f32.mrb[0].mxu0
    %v1126 = vadd.f32 0.0, %v1125
    %v1127 = vpop.f32.mrb[0].mxu0
    %1128 = vdwg.mxu0
    %v1129 = vadd.f32 %v987, %v1096
    %v1130 = vadd.f32 %v988, %v1101
    %v1131 = vadd.f32 %v989, %v1106
    %v1132 = vadd.f32 %v990, %v1111
    %v1133 = vadd.f32 %v991, %v1116
    %v1134 = vadd.f32 %v992, %v1121
    %v1135 = vadd.f32 %v993, %v1126
    %v1136 = vld [vmem:[#allocation2 + $0x3c] sm:$0xff]
    %v1137 = vld [vmem:[#allocation2 + $0x44] sm:$0xff]
    %v1138 = vld [vmem:[#allocation2 + $0x4c] sm:$0xff]
    %v1139 = vld [vmem:[#allocation2 + $0x54] sm:$0xff]
    %v1140 = vld [vmem:[#allocation2 + $0x5c] sm:$0xff]
    %v1141 = vld [vmem:[#allocation2 + $0x64] sm:$0xff]
    %v1142 = vld [vmem:[#allocation2 + $0x6c] sm:$0xf]
    %s1143 = scalar_lea.vmem %s2, 24
    %v1144 = vld [vmem:[%s1143] sm:$0xff]
    %v1145 = vld [vmem:[%s1143 + $0x8] sm:$0xff]
    %v1146 = vld [vmem:[%s1143 + $0x10] sm:$0xf]
    %v1148 = vsel %vm236, %v1136, 0
    %v1151 = vsel %vm236, %v1137, 0
    %v1154 = vsel %vm236, %v1138, 0
    %v1157 = vsel %vm236, %v1139, 0
    %v1160 = vsel %vm236, %v1140, 0
    %v1163 = vsel %vm236, %v1141, 0
    %v1166 = vsel %vm236, %v1142, 0
    %v1169 = vsel %vm482, %v1146, 0
    %1171 = vmatprep.subr.mxu0 0.0
    %1172 = vmatpush1.msra.mxu0 %v1144
    %1173 = vmatprep.subr.mxu0 0.0
    %1174 = vmatpush1.msra.mxu0 %v1145
    %1175 = vmatprep.subr.mxu0 0.0
    %1176 = vmatpush1.msra.mxu0 %v1169
    %1177 = vmatprep.subr.mxu0 0.0
    %1178 = vmatpush1.msra.mxu0 0.0
    %1179 = vmatprep.subr.mxu0 0.0
    %1180 = vmatpush1.msra.mxu0 0.0
    %1181 = vmatprep.subr.mxu0 0.0
    %1182 = vmatpush1.msra.mxu0 0.0
    %1183 = vmatprep.subr.mxu0 0.0
    %1184 = vmatpush1.msra.mxu0 0.0
    %1185 = vmatprep.subr.mxu0 0.0
    %1186 = vmatpush1.msra.mxu0 0.0
    %1187 = vmatprep.subr.mxu0 0.0
    %1188 = vmatpush1.msra.mxu0 0.0
    %1189 = vmatprep.subr.mxu0 0.0
    %1190 = vmatpush1.msra.mxu0 0.0
    %1191 = vmatprep.subr.mxu0 0.0
    %1192 = vmatpush1.msra.mxu0 0.0
    %1193 = vmatprep.subr.mxu0 0.0
    %1194 = vmatpush1.msra.mxu0 0.0
    %1195 = vmatprep.subr.mxu0 0.0
    %1196 = vmatpush1.msra.mxu0 0.0
    %1197 = vmatprep.subr.mxu0 0.0
    %1198 = vmatpush1.msra.mxu0 0.0
    %1199 = vmatprep.subr.mxu0 0.0
    %1200 = vmatpush1.msra.mxu0 0.0
    %1201 = vmatprep.subr.mxu0 0.0
    %1202 = vmatpush1.msra.mxu0 0.0
    %1203 = vmatprep.subr.mxu0 0.0
    %1204 = vmatpush1.msra.mxu0 0.0
    %1205 = vmatprep.subr.mxu0 0.0
    %1206 = vmatpush1.msra.mxu0 0.0
    %1207 = vmatprep.subr.mxu0 0.0
    %1208 = vmatpush1.msra.mxu0 0.0
    %1209 = vmatprep.subr.mxu0 0.0
    %1210 = vmatpush1.msra.mxu0 0.0
    %1211 = vmatprep.subr.mxu0 0.0
    %1212 = vmatpush1.msra.mxu0 0.0
    %1213 = vmatprep.subr.mxu0 0.0
    %1214 = vmatpush1.msra.mxu0 0.0
    %1215 = vmatprep.subr.mxu0 0.0
    %1216 = vmatpush1.msra.mxu0 0.0
    %1217 = vmatprep.subr.mxu0 0.0
    %1218 = vmatpush1.msra.mxu0 0.0
    %1219 = vmatprep.subr.mxu0 0.0
    %1220 = vmatpush1.msra.mxu0 0.0
    %1221 = vmatprep.subr.mxu0 0.0
    %1222 = vmatpush1.msra.mxu0 0.0
    %1223 = vmatprep.subr.mxu0 0.0
    %1224 = vmatpush1.msra.mxu0 0.0
    %1225 = vmatprep.subr.mxu0 0.0
    %1226 = vmatpush1.msra.mxu0 0.0
    %1227 = vmatprep.subr.mxu0 0.0
    %1228 = vmatpush1.msra.mxu0 0.0
    %1229 = vmatprep.subr.mxu0 0.0
    %1230 = vmatpush1.msra.mxu0 0.0
    %1231 = vmatprep.subr.mxu0 0.0
    %1232 = vmatpush1.msra.mxu0 0.0
    %1233 = vmatprep.subr.mxu0 0.0
    %1234 = vmatpush1.msra.mxu0 0.0
    %1235 = vmatprep.mubr.f32.mxu0 0.0
    %1236 = vmatmul.mubr.f32.gmra.mrb[0].mxu0 %v1148
    %v1237 = vpop.f32.mrb[0].mxu0
    %v1238 = vadd.f32 0.0, %v1237
    %v1239 = vpop.f32.mrb[0].mxu0
    %1240 = vmatprep.mubr.f32.mxu0 0.0
    %1241 = vmatmul.mubr.f32.gmra.mrb[0].mxu0 %v1151
    %v1242 = vpop.f32.mrb[0].mxu0
    %v1243 = vadd.f32 0.0, %v1242
    %v1244 = vpop.f32.mrb[0].mxu0
    %1245 = vmatprep.mubr.f32.mxu0 0.0
    %1246 = vmatmul.mubr.f32.gmra.mrb[0].mxu0 %v1154
    %v1247 = vpop.f32.mrb[0].mxu0
    %v1248 = vadd.f32 0.0, %v1247
    %v1249 = vpop.f32.mrb[0].mxu0
    %1250 = vmatprep.mubr.f32.mxu0 0.0
    %1251 = vmatmul.mubr.f32.gmra.mrb[0].mxu0 %v1157
    %v1252 = vpop.f32.mrb[0].mxu0
    %v1253 = vadd.f32 0.0, %v1252
    %v1254 = vpop.f32.mrb[0].mxu0
    %1255 = vmatprep.mubr.f32.mxu0 0.0
    %1256 = vmatmul.mubr.f32.gmra.mrb[0].mxu0 %v1160
    %v1257 = vpop.f32.mrb[0].mxu0
    %v1258 = vadd.f32 0.0, %v1257
    %v1259 = vpop.f32.mrb[0].mxu0
    %1260 = vmatprep.mubr.f32.mxu0 0.0
    %1261 = vmatmul.mubr.f32.gmra.mrb[0].mxu0 %v1163
    %v1262 = vpop.f32.mrb[0].mxu0
    %v1263 = vadd.f32 0.0, %v1262
    %v1264 = vpop.f32.mrb[0].mxu0
    %1265 = vmatprep.mubr.f32.mxu0 0.0
    %1266 = vmatmul.mubr.f32.gmra.mrb[0].mxu0 %v1166
    %v1267 = vpop.f32.mrb[0].mxu0
    %v1268 = vadd.f32 0.0, %v1267
    %v1269 = vpop.f32.mrb[0].mxu0
    %1270 = vdwg.mxu0
    %v1271 = vadd.f32 %v1129, %v1238
    %v1272 = vadd.f32 %v1130, %v1243
    %v1273 = vadd.f32 %v1131, %v1248
    %v1274 = vadd.f32 %v1132, %v1253
    %v1275 = vadd.f32 %v1133, %v1258
    %v1276 = vadd.f32 %v1134, %v1263
    %v1277 = vadd.f32 %v1135, %v1268
    %v1278 = vld [vmem:[#allocation2 + $0x3e] sm:$0xff]
    %v1279 = vld [vmem:[#allocation2 + $0x46] sm:$0xff]
    %v1280 = vld [vmem:[#allocation2 + $0x4e] sm:$0xff]
    %v1281 = vld [vmem:[#allocation2 + $0x56] sm:$0xff]
    %v1282 = vld [vmem:[#allocation2 + $0x5e] sm:$0xff]
    %v1283 = vld [vmem:[#allocation2 + $0x66] sm:$0xff]
    %v1284 = vld [vmem:[#allocation2 + $0x6e] sm:$0xf]
    %s1285 = scalar_lea.vmem %s2, 72
    %v1286 = vld [vmem:[%s1285] sm:$0xff]
    %v1287 = vld [vmem:[%s1285 + $0x8] sm:$0xff]
    %v1288 = vld [vmem:[%s1285 + $0x10] sm:$0xf]
    %v1290 = vsel %vm236, %v1278, 0
    %v1293 = vsel %vm236, %v1279, 0
    %v1296 = vsel %vm236, %v1280, 0
    %v1299 = vsel %vm236, %v1281, 0
    %v1302 = vsel %vm236, %v1282, 0
    %v1305 = vsel %vm236, %v1283, 0
    %v1308 = vsel %vm236, %v1284, 0
    %v1311 = vsel %vm482, %v1288, 0
    %1313 = vmatprep.subr.mxu0 0.0
    %1314 = vmatpush1.msra.mxu0 %v1286
    %1315 = vmatprep.subr.mxu0 0.0
    %1316 = vmatpush1.msra.mxu0 %v1287
    %1317 = vmatprep.subr.mxu0 0.0
    %1318 = vmatpush1.msra.mxu0 %v1311
    %1319 = vmatprep.subr.mxu0 0.0
    %1320 = vmatpush1.msra.mxu0 0.0
    %1321 = vmatprep.subr.mxu0 0.0
    %1322 = vmatpush1.msra.mxu0 0.0
    %1323 = vmatprep.subr.mxu0 0.0
    %1324 = vmatpush1.msra.mxu0 0.0
    %1325 = vmatprep.subr.mxu0 0.0
    %1326 = vmatpush1.msra.mxu0 0.0
    %1327 = vmatprep.subr.mxu0 0.0
    %1328 = vmatpush1.msra.mxu0 0.0
    %1329 = vmatprep.subr.mxu0 0.0
    %1330 = vmatpush1.msra.mxu0 0.0
    %1331 = vmatprep.subr.mxu0 0.0
    %1332 = vmatpush1.msra.mxu0 0.0
    %1333 = vmatprep.subr.mxu0 0.0
    %1334 = vmatpush1.msra.mxu0 0.0
    %1335 = vmatprep.subr.mxu0 0.0
    %1336 = vmatpush1.msra.mxu0 0.0
    %1337 = vmatprep.subr.mxu0 0.0
    %1338 = vmatpush1.msra.mxu0 0.0
    %1339 = vmatprep.subr.mxu0 0.0
    %1340 = vmatpush1.msra.mxu0 0.0
    %1341 = vmatprep.subr.mxu0 0.0
    %1342 = vmatpush1.msra.mxu0 0.0
    %1343 = vmatprep.subr.mxu0 0.0
    %1344 = vmatpush1.msra.mxu0 0.0
    %1345 = vmatprep.subr.mxu0 0.0
    %1346 = vmatpush1.msra.mxu0 0.0
    %1347 = vmatprep.subr.mxu0 0.0
    %1348 = vmatpush1.msra.mxu0 0.0
    %1349 = vmatprep.subr.mxu0 0.0
    %1350 = vmatpush1.msra.mxu0 0.0
    %1351 = vmatprep.subr.mxu0 0.0
    %1352 = vmatpush1.msra.mxu0 0.0
    %1353 = vmatprep.subr.mxu0 0.0
    %1354 = vmatpush1.msra.mxu0 0.0
    %1355 = vmatprep.subr.mxu0 0.0
    %1356 = vmatpush1.msra.mxu0 0.0
    %1357 = vmatprep.subr.mxu0 0.0
    %1358 = vmatpush1.msra.mxu0 0.0
    %1359 = vmatprep.subr.mxu0 0.0
    %1360 = vmatpush1.msra.mxu0 0.0
    %1361 = vmatprep.subr.mxu0 0.0
    %1362 = vmatpush1.msra.mxu0 0.0
    %1363 = vmatprep.subr.mxu0 0.0
    %1364 = vmatpush1.msra.mxu0 0.0
    %1365 = vmatprep.subr.mxu0 0.0
    %1366 = vmatpush1.msra.mxu0 0.0
    %1367 = vmatprep.subr.mxu0 0.0
    %1368 = vmatpush1.msra.mxu0 0.0
    %1369 = vmatprep.subr.mxu0 0.0
    %1370 = vmatpush1.msra.mxu0 0.0
    %1371 = vmatprep.subr.mxu0 0.0
    %1372 = vmatpush1.msra.mxu0 0.0
    %1373 = vmatprep.subr.mxu0 0.0
    %1374 = vmatpush1.msra.mxu0 0.0
    %1375 = vmatprep.subr.mxu0 0.0
    %1376 = vmatpush1.msra.mxu0 0.0
    %1377 = vmatprep.mubr.f32.mxu0 0.0
    %1378 = vmatmul.mubr.f32.gmra.mrb[0].mxu0 %v1290
    %v1379 = vpop.f32.mrb[0].mxu0
    %v1380 = vadd.f32 0.0, %v1379
    %v1381 = vpop.f32.mrb[0].mxu0
    %1382 = vmatprep.mubr.f32.mxu0 0.0
    %1383 = vmatmul.mubr.f32.gmra.mrb[0].mxu0 %v1293
    %v1384 = vpop.f32.mrb[0].mxu0
    %v1385 = vadd.f32 0.0, %v1384
    %v1386 = vpop.f32.mrb[0].mxu0
    %1387 = vmatprep.mubr.f32.mxu0 0.0
    %1388 = vmatmul.mubr.f32.gmra.mrb[0].mxu0 %v1296
    %v1389 = vpop.f32.mrb[0].mxu0
    %v1390 = vadd.f32 0.0, %v1389
    %v1391 = vpop.f32.mrb[0].mxu0
    %1392 = vmatprep.mubr.f32.mxu0 0.0
    %1393 = vmatmul.mubr.f32.gmra.mrb[0].mxu0 %v1299
    %v1394 = vpop.f32.mrb[0].mxu0
    %v1395 = vadd.f32 0.0, %v1394
    %v1396 = vpop.f32.mrb[0].mxu0
    %1397 = vmatprep.mubr.f32.mxu0 0.0
    %1398 = vmatmul.mubr.f32.gmra.mrb[0].mxu0 %v1302
    %v1399 = vpop.f32.mrb[0].mxu0
    %v1400 = vadd.f32 0.0, %v1399
    %v1401 = vpop.f32.mrb[0].mxu0
    %1402 = vmatprep.mubr.f32.mxu0 0.0
    %1403 = vmatmul.mubr.f32.gmra.mrb[0].mxu0 %v1305
    %v1404 = vpop.f32.mrb[0].mxu0
    %v1405 = vadd.f32 0.0, %v1404
    %v1406 = vpop.f32.mrb[0].mxu0
    %1407 = vmatprep.mubr.f32.mxu0 0.0
    %1408 = vmatmul.mubr.f32.gmra.mrb[0].mxu0 %v1308
    %v1409 = vpop.f32.mrb[0].mxu0
    %v1410 = vadd.f32 0.0, %v1409
    %v1411 = vpop.f32.mrb[0].mxu0
    %1412 = vdwg.mxu0
    %v1413 = vadd.f32 %v1271, %v1380
    %v1414 = vadd.f32 %v1272, %v1385
    %v1415 = vadd.f32 %v1273, %v1390
    %v1416 = vadd.f32 %v1274, %v1395
    %v1417 = vadd.f32 %v1275, %v1400
    %v1418 = vadd.f32 %v1276, %v1405
    %v1419 = vadd.f32 %v1277, %v1410
    %v1420 = vld [vmem:[#allocation2 + $0x40] sm:$0xff]
    %v1421 = vld [vmem:[#allocation2 + $0x48] sm:$0xff]
    %v1422 = vld [vmem:[#allocation2 + $0x50] sm:$0xff]
    %v1423 = vld [vmem:[#allocation2 + $0x58] sm:$0xff]
    %v1424 = vld [vmem:[#allocation2 + $0x60] sm:$0xff]
    %v1425 = vld [vmem:[#allocation2 + $0x68] sm:$0xff]
    %v1426 = vld [vmem:[#allocation2 + $0x70] sm:$0xf]
    %s1427 = scalar_lea.vmem %s2, 120
    %v1428 = vld [vmem:[%s1427] sm:$0xff]
    %v1429 = vld [vmem:[%s1427 + $0x8] sm:$0xff]
    %v1430 = vld [vmem:[%s1427 + $0x10] sm:$0xf]
    %v1432 = vsel %vm236, %v1420, 0
    %v1435 = vsel %vm236, %v1421, 0
    %v1438 = vsel %vm236, %v1422, 0
    %v1441 = vsel %vm236, %v1423, 0
    %v1444 = vsel %vm236, %v1424, 0
    %v1447 = vsel %vm236, %v1425, 0
    %v1450 = vsel %vm236, %v1426, 0
    %v1453 = vsel %vm482, %v1430, 0
    %1455 = vmatprep.subr.mxu0 0.0
    %1456 = vmatpush1.msra.mxu0 %v1428
    %1457 = vmatprep.subr.mxu0 0.0
    %1458 = vmatpush1.msra.mxu0 %v1429
    %1459 = vmatprep.subr.mxu0 0.0
    %1460 = vmatpush1.msra.mxu0 %v1453
    %1461 = vmatprep.subr.mxu0 0.0
    %1462 = vmatpush1.msra.mxu0 0.0
    %1463 = vmatprep.subr.mxu0 0.0
    %1464 = vmatpush1.msra.mxu0 0.0
    %1465 = vmatprep.subr.mxu0 0.0
    %1466 = vmatpush1.msra.mxu0 0.0
    %1467 = vmatprep.subr.mxu0 0.0
    %1468 = vmatpush1.msra.mxu0 0.0
    %1469 = vmatprep.subr.mxu0 0.0
    %1470 = vmatpush1.msra.mxu0 0.0
    %1471 = vmatprep.subr.mxu0 0.0
    %1472 = vmatpush1.msra.mxu0 0.0
    %1473 = vmatprep.subr.mxu0 0.0
    %1474 = vmatpush1.msra.mxu0 0.0
    %1475 = vmatprep.subr.mxu0 0.0
    %1476 = vmatpush1.msra.mxu0 0.0
    %1477 = vmatprep.subr.mxu0 0.0
    %1478 = vmatpush1.msra.mxu0 0.0
    %1479 = vmatprep.subr.mxu0 0.0
    %1480 = vmatpush1.msra.mxu0 0.0
    %1481 = vmatprep.subr.mxu0 0.0
    %1482 = vmatpush1.msra.mxu0 0.0
    %1483 = vmatprep.subr.mxu0 0.0
    %1484 = vmatpush1.msra.mxu0 0.0
    %1485 = vmatprep.subr.mxu0 0.0
    %1486 = vmatpush1.msra.mxu0 0.0
    %1487 = vmatprep.subr.mxu0 0.0
    %1488 = vmatpush1.msra.mxu0 0.0
    %1489 = vmatprep.subr.mxu0 0.0
    %1490 = vmatpush1.msra.mxu0 0.0
    %1491 = vmatprep.subr.mxu0 0.0
    %1492 = vmatpush1.msra.mxu0 0.0
    %1493 = vmatprep.subr.mxu0 0.0
    %1494 = vmatpush1.msra.mxu0 0.0
    %1495 = vmatprep.subr.mxu0 0.0
    %1496 = vmatpush1.msra.mxu0 0.0
    %1497 = vmatprep.subr.mxu0 0.0
    %1498 = vmatpush1.msra.mxu0 0.0
    %1499 = vmatprep.subr.mxu0 0.0
    %1500 = vmatpush1.msra.mxu0 0.0
    %1501 = vmatprep.subr.mxu0 0.0
    %1502 = vmatpush1.msra.mxu0 0.0
    %1503 = vmatprep.subr.mxu0 0.0
    %1504 = vmatpush1.msra.mxu0 0.0
    %1505 = vmatprep.subr.mxu0 0.0
    %1506 = vmatpush1.msra.mxu0 0.0
    %1507 = vmatprep.subr.mxu0 0.0
    %1508 = vmatpush1.msra.mxu0 0.0
    %1509 = vmatprep.subr.mxu0 0.0
    %1510 = vmatpush1.msra.mxu0 0.0
    %1511 = vmatprep.subr.mxu0 0.0
    %1512 = vmatpush1.msra.mxu0 0.0
    %1513 = vmatprep.subr.mxu0 0.0
    %1514 = vmatpush1.msra.mxu0 0.0
    %1515 = vmatprep.subr.mxu0 0.0
    %1516 = vmatpush1.msra.mxu0 0.0
    %1517 = vmatprep.subr.mxu0 0.0
    %1518 = vmatpush1.msra.mxu0 0.0
    %1519 = vmatprep.mubr.f32.mxu0 0.0
    %1520 = vmatmul.mubr.f32.gmra.mrb[0].mxu0 %v1432
    %v1521 = vpop.f32.mrb[0].mxu0
    %v1522 = vadd.f32 0.0, %v1521
    %v1523 = vpop.f32.mrb[0].mxu0
    %1524 = vmatprep.mubr.f32.mxu0 0.0
    %1525 = vmatmul.mubr.f32.gmra.mrb[0].mxu0 %v1435
    %v1526 = vpop.f32.mrb[0].mxu0
    %v1527 = vadd.f32 0.0, %v1526
    %v1528 = vpop.f32.mrb[0].mxu0
    %1529 = vmatprep.mubr.f32.mxu0 0.0
    %1530 = vmatmul.mubr.f32.gmra.mrb[0].mxu0 %v1438
    %v1531 = vpop.f32.mrb[0].mxu0
    %v1532 = vadd.f32 0.0, %v1531
    %v1533 = vpop.f32.mrb[0].mxu0
    %1534 = vmatprep.mubr.f32.mxu0 0.0
    %1535 = vmatmul.mubr.f32.gmra.mrb[0].mxu0 %v1441
    %v1536 = vpop.f32.mrb[0].mxu0
    %v1537 = vadd.f32 0.0, %v1536
    %v1538 = vpop.f32.mrb[0].mxu0
    %1539 = vmatprep.mubr.f32.mxu0 0.0
    %1540 = vmatmul.mubr.f32.gmra.mrb[0].mxu0 %v1444
    %v1541 = vpop.f32.mrb[0].mxu0
    %v1542 = vadd.f32 0.0, %v1541
    %v1543 = vpop.f32.mrb[0].mxu0
    %1544 = vmatprep.mubr.f32.mxu0 0.0
    %1545 = vmatmul.mubr.f32.gmra.mrb[0].mxu0 %v1447
    %v1546 = vpop.f32.mrb[0].mxu0
    %v1547 = vadd.f32 0.0, %v1546
    %v1548 = vpop.f32.mrb[0].mxu0
    %1549 = vmatprep.mubr.f32.mxu0 0.0
    %1550 = vmatmul.mubr.f32.gmra.mrb[0].mxu0 %v1450
    %v1551 = vpop.f32.mrb[0].mxu0
    %v1552 = vadd.f32 0.0, %v1551
    %v1553 = vpop.f32.mrb[0].mxu0
    %1554 = vdwg.mxu0
    %v1555 = vadd.f32 %v1413, %v1522
    %v1556 = vadd.f32 %v1414, %v1527
    %v1557 = vadd.f32 %v1415, %v1532
    %v1558 = vadd.f32 %v1416, %v1537
    %v1559 = vadd.f32 %v1417, %v1542
    %v1560 = vadd.f32 %v1418, %v1547
    %v1561 = vadd.f32 %v1419, %v1552
    %v1562 = vld [vmem:[#allocation2 + $0x42] sm:$0xff]
    %v1563 = vld [vmem:[#allocation2 + $0x4a] sm:$0xff]
    %v1564 = vld [vmem:[#allocation2 + $0x52] sm:$0xff]
    %v1565 = vld [vmem:[#allocation2 + $0x5a] sm:$0xff]
    %v1566 = vld [vmem:[#allocation2 + $0x62] sm:$0xff]
    %v1567 = vld [vmem:[#allocation2 + $0x6a] sm:$0xff]
    %v1568 = vld [vmem:[#allocation2 + $0x72] sm:$0xf]
    %s1569 = scalar_lea.vmem %s2, 168
    %v1570 = vld [vmem:[%s1569] sm:$0xff]
    %v1571 = vld [vmem:[%s1569 + $0x8] sm:$0xff]
    %v1572 = vld [vmem:[%s1569 + $0x10] sm:$0xf]
    %v1574 = vsel %vm236, %v1562, 0
    %v1577 = vsel %vm236, %v1563, 0
    %v1580 = vsel %vm236, %v1564, 0
    %v1583 = vsel %vm236, %v1565, 0
    %v1586 = vsel %vm236, %v1566, 0
    %v1589 = vsel %vm236, %v1567, 0
    %v1592 = vsel %vm236, %v1568, 0
    %v1595 = vsel %vm482, %v1572, 0
    %1597 = vmatprep.subr.mxu0 0.0
    %1598 = vmatpush1.msra.mxu0 %v1570
    %1599 = vmatprep.subr.mxu0 0.0
    %1600 = vmatpush1.msra.mxu0 %v1571
    %1601 = vmatprep.subr.mxu0 0.0
    %1602 = vmatpush1.msra.mxu0 %v1595
    %1603 = vmatprep.subr.mxu0 0.0
    %1604 = vmatpush1.msra.mxu0 0.0
    %1605 = vmatprep.subr.mxu0 0.0
    %1606 = vmatpush1.msra.mxu0 0.0
    %1607 = vmatprep.subr.mxu0 0.0
    %1608 = vmatpush1.msra.mxu0 0.0
    %1609 = vmatprep.subr.mxu0 0.0
    %1610 = vmatpush1.msra.mxu0 0.0
    %1611 = vmatprep.subr.mxu0 0.0
    %1612 = vmatpush1.msra.mxu0 0.0
    %1613 = vmatprep.subr.mxu0 0.0
    %1614 = vmatpush1.msra.mxu0 0.0
    %1615 = vmatprep.subr.mxu0 0.0
    %1616 = vmatpush1.msra.mxu0 0.0
    %1617 = vmatprep.subr.mxu0 0.0
    %1618 = vmatpush1.msra.mxu0 0.0
    %1619 = vmatprep.subr.mxu0 0.0
    %1620 = vmatpush1.msra.mxu0 0.0
    %1621 = vmatprep.subr.mxu0 0.0
    %1622 = vmatpush1.msra.mxu0 0.0
    %1623 = vmatprep.subr.mxu0 0.0
    %1624 = vmatpush1.msra.mxu0 0.0
    %1625 = vmatprep.subr.mxu0 0.0
    %1626 = vmatpush1.msra.mxu0 0.0
    %1627 = vmatprep.subr.mxu0 0.0
    %1628 = vmatpush1.msra.mxu0 0.0
    %1629 = vmatprep.subr.mxu0 0.0
    %1630 = vmatpush1.msra.mxu0 0.0
    %1631 = vmatprep.subr.mxu0 0.0
    %1632 = vmatpush1.msra.mxu0 0.0
    %1633 = vmatprep.subr.mxu0 0.0
    %1634 = vmatpush1.msra.mxu0 0.0
    %1635 = vmatprep.subr.mxu0 0.0
    %1636 = vmatpush1.msra.mxu0 0.0
    %1637 = vmatprep.subr.mxu0 0.0
    %1638 = vmatpush1.msra.mxu0 0.0
    %1639 = vmatprep.subr.mxu0 0.0
    %1640 = vmatpush1.msra.mxu0 0.0
    %1641 = vmatprep.subr.mxu0 0.0
    %1642 = vmatpush1.msra.mxu0 0.0
    %1643 = vmatprep.subr.mxu0 0.0
    %1644 = vmatpush1.msra.mxu0 0.0
    %1645 = vmatprep.subr.mxu0 0.0
    %1646 = vmatpush1.msra.mxu0 0.0
    %1647 = vmatprep.subr.mxu0 0.0
    %1648 = vmatpush1.msra.mxu0 0.0
    %1649 = vmatprep.subr.mxu0 0.0
    %1650 = vmatpush1.msra.mxu0 0.0
    %1651 = vmatprep.subr.mxu0 0.0
    %1652 = vmatpush1.msra.mxu0 0.0
    %1653 = vmatprep.subr.mxu0 0.0
    %1654 = vmatpush1.msra.mxu0 0.0
    %1655 = vmatprep.subr.mxu0 0.0
    %1656 = vmatpush1.msra.mxu0 0.0
    %1657 = vmatprep.subr.mxu0 0.0
    %1658 = vmatpush1.msra.mxu0 0.0
    %1659 = vmatprep.subr.mxu0 0.0
    %1660 = vmatpush1.msra.mxu0 0.0
    %1661 = vmatprep.mubr.f32.mxu0 0.0
    %1662 = vmatmul.mubr.f32.gmra.mrb[0].mxu0 %v1574
    %v1663 = vpop.f32.mrb[0].mxu0
    %v1664 = vadd.f32 0.0, %v1663
    %v1665 = vpop.f32.mrb[0].mxu0
    %1666 = vmatprep.mubr.f32.mxu0 0.0
    %1667 = vmatmul.mubr.f32.gmra.mrb[0].mxu0 %v1577
    %v1668 = vpop.f32.mrb[0].mxu0
    %v1669 = vadd.f32 0.0, %v1668
    %v1670 = vpop.f32.mrb[0].mxu0
    %1671 = vmatprep.mubr.f32.mxu0 0.0
    %1672 = vmatmul.mubr.f32.gmra.mrb[0].mxu0 %v1580
    %v1673 = vpop.f32.mrb[0].mxu0
    %v1674 = vadd.f32 0.0, %v1673
    %v1675 = vpop.f32.mrb[0].mxu0
    %1676 = vmatprep.mubr.f32.mxu0 0.0
    %1677 = vmatmul.mubr.f32.gmra.mrb[0].mxu0 %v1583
    %v1678 = vpop.f32.mrb[0].mxu0
    %v1679 = vadd.f32 0.0, %v1678
    %v1680 = vpop.f32.mrb[0].mxu0
    %1681 = vmatprep.mubr.f32.mxu0 0.0
    %1682 = vmatmul.mubr.f32.gmra.mrb[0].mxu0 %v1586
    %v1683 = vpop.f32.mrb[0].mxu0
    %v1684 = vadd.f32 0.0, %v1683
    %v1685 = vpop.f32.mrb[0].mxu0
    %1686 = vmatprep.mubr.f32.mxu0 0.0
    %1687 = vmatmul.mubr.f32.gmra.mrb[0].mxu0 %v1589
    %v1688 = vpop.f32.mrb[0].mxu0
    %v1689 = vadd.f32 0.0, %v1688
    %v1690 = vpop.f32.mrb[0].mxu0
    %1691 = vmatprep.mubr.f32.mxu0 0.0
    %1692 = vmatmul.mubr.f32.gmra.mrb[0].mxu0 %v1592
    %v1693 = vpop.f32.mrb[0].mxu0
    %v1694 = vadd.f32 0.0, %v1693
    %v1695 = vpop.f32.mrb[0].mxu0
    %1696 = vdwg.mxu0
    %v1697 = vadd.f32 %v1555, %v1664
    %v1698 = vadd.f32 %v1556, %v1669
    %v1699 = vadd.f32 %v1557, %v1674
    %v1700 = vadd.f32 %v1558, %v1679
    %v1701 = vadd.f32 %v1559, %v1684
    %v1702 = vadd.f32 %v1560, %v1689
    %v1703 = vadd.f32 %v1561, %v1694
    %v1704 = vld [vmem:[#allocation2 + $0x44] sm:$0xff]
    %v1705 = vld [vmem:[#allocation2 + $0x4c] sm:$0xff]
    %v1706 = vld [vmem:[#allocation2 + $0x54] sm:$0xff]
    %v1707 = vld [vmem:[#allocation2 + $0x5c] sm:$0xff]
    %v1708 = vld [vmem:[#allocation2 + $0x64] sm:$0xff]
    %v1709 = vld [vmem:[#allocation2 + $0x6c] sm:$0xff]
    %v1710 = vld [vmem:[#allocation2 + $0x74] sm:$0xf]
    %s1711 = scalar_lea.vmem %s2, 216
    %v1712 = vld [vmem:[%s1711] sm:$0xff]
    %v1713 = vld [vmem:[%s1711 + $0x8] sm:$0xff]
    %v1714 = vld [vmem:[%s1711 + $0x10] sm:$0xf]
    %v1716 = vsel %vm236, %v1704, 0
    %v1719 = vsel %vm236, %v1705, 0
    %v1722 = vsel %vm236, %v1706, 0
    %v1725 = vsel %vm236, %v1707, 0
    %v1728 = vsel %vm236, %v1708, 0
    %v1731 = vsel %vm236, %v1709, 0
    %v1734 = vsel %vm236, %v1710, 0
    %v1737 = vsel %vm482, %v1714, 0
    %1739 = vmatprep.subr.mxu0 0.0
    %1740 = vmatpush1.msra.mxu0 %v1712
    %1741 = vmatprep.subr.mxu0 0.0
    %1742 = vmatpush1.msra.mxu0 %v1713
    %1743 = vmatprep.subr.mxu0 0.0
    %1744 = vmatpush1.msra.mxu0 %v1737
    %1745 = vmatprep.subr.mxu0 0.0
    %1746 = vmatpush1.msra.mxu0 0.0
    %1747 = vmatprep.subr.mxu0 0.0
    %1748 = vmatpush1.msra.mxu0 0.0
    %1749 = vmatprep.subr.mxu0 0.0
    %1750 = vmatpush1.msra.mxu0 0.0
    %1751 = vmatprep.subr.mxu0 0.0
    %1752 = vmatpush1.msra.mxu0 0.0
    %1753 = vmatprep.subr.mxu0 0.0
    %1754 = vmatpush1.msra.mxu0 0.0
    %1755 = vmatprep.subr.mxu0 0.0
    %1756 = vmatpush1.msra.mxu0 0.0
    %1757 = vmatprep.subr.mxu0 0.0
    %1758 = vmatpush1.msra.mxu0 0.0
    %1759 = vmatprep.subr.mxu0 0.0
    %1760 = vmatpush1.msra.mxu0 0.0
    %1761 = vmatprep.subr.mxu0 0.0
    %1762 = vmatpush1.msra.mxu0 0.0
    %1763 = vmatprep.subr.mxu0 0.0
    %1764 = vmatpush1.msra.mxu0 0.0
    %1765 = vmatprep.subr.mxu0 0.0
    %1766 = vmatpush1.msra.mxu0 0.0
    %1767 = vmatprep.subr.mxu0 0.0
    %1768 = vmatpush1.msra.mxu0 0.0
    %1769 = vmatprep.subr.mxu0 0.0
    %1770 = vmatpush1.msra.mxu0 0.0
    %1771 = vmatprep.subr.mxu0 0.0
    %1772 = vmatpush1.msra.mxu0 0.0
    %1773 = vmatprep.subr.mxu0 0.0
    %1774 = vmatpush1.msra.mxu0 0.0
    %1775 = vmatprep.subr.mxu0 0.0
    %1776 = vmatpush1.msra.mxu0 0.0
    %1777 = vmatprep.subr.mxu0 0.0
    %1778 = vmatpush1.msra.mxu0 0.0
    %1779 = vmatprep.subr.mxu0 0.0
    %1780 = vmatpush1.msra.mxu0 0.0
    %1781 = vmatprep.subr.mxu0 0.0
    %1782 = vmatpush1.msra.mxu0 0.0
    %1783 = vmatprep.subr.mxu0 0.0
    %1784 = vmatpush1.msra.mxu0 0.0
    %1785 = vmatprep.subr.mxu0 0.0
    %1786 = vmatpush1.msra.mxu0 0.0
    %1787 = vmatprep.subr.mxu0 0.0
    %1788 = vmatpush1.msra.mxu0 0.0
    %1789 = vmatprep.subr.mxu0 0.0
    %1790 = vmatpush1.msra.mxu0 0.0
    %1791 = vmatprep.subr.mxu0 0.0
    %1792 = vmatpush1.msra.mxu0 0.0
    %1793 = vmatprep.subr.mxu0 0.0
    %1794 = vmatpush1.msra.mxu0 0.0
    %1795 = vmatprep.subr.mxu0 0.0
    %1796 = vmatpush1.msra.mxu0 0.0
    %1797 = vmatprep.subr.mxu0 0.0
    %1798 = vmatpush1.msra.mxu0 0.0
    %1799 = vmatprep.subr.mxu0 0.0
    %1800 = vmatpush1.msra.mxu0 0.0
    %1801 = vmatprep.subr.mxu0 0.0
    %1802 = vmatpush1.msra.mxu0 0.0
    %1803 = vmatprep.mubr.f32.mxu0 0.0
    %1804 = vmatmul.mubr.f32.gmra.mrb[0].mxu0 %v1716
    %v1805 = vpop.f32.mrb[0].mxu0
    %v1806 = vadd.f32 0.0, %v1805
    %v1807 = vpop.f32.mrb[0].mxu0
    %1808 = vmatprep.mubr.f32.mxu0 0.0
    %1809 = vmatmul.mubr.f32.gmra.mrb[0].mxu0 %v1719
    %v1810 = vpop.f32.mrb[0].mxu0
    %v1811 = vadd.f32 0.0, %v1810
    %v1812 = vpop.f32.mrb[0].mxu0
    %1813 = vmatprep.mubr.f32.mxu0 0.0
    %1814 = vmatmul.mubr.f32.gmra.mrb[0].mxu0 %v1722
    %v1815 = vpop.f32.mrb[0].mxu0
    %v1816 = vadd.f32 0.0, %v1815
    %v1817 = vpop.f32.mrb[0].mxu0
    %1818 = vmatprep.mubr.f32.mxu0 0.0
    %1819 = vmatmul.mubr.f32.gmra.mrb[0].mxu0 %v1725
    %v1820 = vpop.f32.mrb[0].mxu0
    %v1821 = vadd.f32 0.0, %v1820
    %v1822 = vpop.f32.mrb[0].mxu0
    %1823 = vmatprep.mubr.f32.mxu0 0.0
    %1824 = vmatmul.mubr.f32.gmra.mrb[0].mxu0 %v1728
    %v1825 = vpop.f32.mrb[0].mxu0
    %v1826 = vadd.f32 0.0, %v1825
    %v1827 = vpop.f32.mrb[0].mxu0
    %1828 = vmatprep.mubr.f32.mxu0 0.0
    %1829 = vmatmul.mubr.f32.gmra.mrb[0].mxu0 %v1731
    %v1830 = vpop.f32.mrb[0].mxu0
    %v1831 = vadd.f32 0.0, %v1830
    %v1832 = vpop.f32.mrb[0].mxu0
    %1833 = vmatprep.mubr.f32.mxu0 0.0
    %1834 = vmatmul.mubr.f32.gmra.mrb[0].mxu0 %v1734
    %v1835 = vpop.f32.mrb[0].mxu0
    %v1836 = vadd.f32 0.0, %v1835
    %v1837 = vpop.f32.mrb[0].mxu0
    %1838 = vdwg.mxu0
    %v1839 = vadd.f32 %v1697, %v1806
    %v1840 = vadd.f32 %v1698, %v1811
    %v1841 = vadd.f32 %v1699, %v1816
    %v1842 = vadd.f32 %v1700, %v1821
    %v1843 = vadd.f32 %v1701, %v1826
    %v1844 = vadd.f32 %v1702, %v1831
    %v1845 = vadd.f32 %v1703, %v1836
    %v1846 = vld [vmem:[%s5] sm:$0x1]
    %v1847 = vld [vmem:[%s5 + $0x1] sm:$0x1]
    %v1848 = vsel %vm44, %v1839, 0.0
    %v1849 = vsel %vm44, %v1840, 0.0
    %v1850 = vadd.f32 %v1848, %v1849
    %v1851 = vsel %vm44, %v1841, 0.0
    %v1852 = vadd.f32 %v1850, %v1851
    %v1853 = vsel %vm44, %v1842, 0.0
    %v1854 = vadd.f32 %v1852, %v1853
    %v1855 = vsel %vm44, %v1843, 0.0
    %v1856 = vadd.f32 %v1854, %v1855
    %v1857 = vsel %vm44, %v1844, 0.0
    %v1858 = vadd.f32 %v1856, %v1857
    %vm1859 = vcmask 76800
    %v1860 = vsel %vm1859, %v1845, 0.0
    %v1861 = vadd.f32 %v1858, %v1860
    %v1862 = vrot.slane %v1861, 4
    %v1863 = vadd.f32 %v1861, %v1862
    %v1864 = vrot.slane %v1863, 2
    %v1865 = vadd.f32 %v1863, %v1864
    %v1866 = vrot.slane %v1865, 1
    %v1867 = vadd.f32 %v1865, %v1866
    %v1868 = vmul.f32 %v1867, 0.01923077
    %v1869 = vsub.f32 %v1839, %v1868
    %v1870 = vsub.f32 %v1840, %v1868
    %v1871 = vsub.f32 %v1841, %v1868
    %v1872 = vsub.f32 %v1842, %v1868
    %v1873 = vsub.f32 %v1843, %v1868
    %v1874 = vsub.f32 %v1844, %v1868
    %v1875 = vsub.f32 %v1845, %v1868
    %v1876 = vmul.f32 %v1869, %v1869
    %v1877 = vmul.f32 %v1870, %v1870
    %v1878 = vmul.f32 %v1871, %v1871
    %v1879 = vmul.f32 %v1872, %v1872
    %v1880 = vmul.f32 %v1873, %v1873
    %v1881 = vmul.f32 %v1874, %v1874
    %v1882 = vmul.f32 %v1875, %v1875
    %v1883 = vsel %vm44, %v1876, 0.0
    %v1884 = vsel %vm44, %v1877, 0.0
    %v1885 = vadd.f32 %v1883, %v1884
    %v1886 = vsel %vm44, %v1878, 0.0
    %v1887 = vadd.f32 %v1885, %v1886
    %v1888 = vsel %vm44, %v1879, 0.0
    %v1889 = vadd.f32 %v1887, %v1888
    %v1890 = vsel %vm44, %v1880, 0.0
    %v1891 = vadd.f32 %v1889, %v1890
    %v1892 = vsel %vm44, %v1881, 0.0
    %v1893 = vadd.f32 %v1891, %v1892
    %v1894 = vsel %vm1859, %v1882, 0.0
    %v1895 = vadd.f32 %v1893, %v1894
    %v1896 = vrot.slane %v1895, 4
    %v1897 = vadd.f32 %v1895, %v1896
    %v1898 = vrot.slane %v1897, 2
    %v1899 = vadd.f32 %v1897, %v1898
    %v1900 = vrot.slane %v1899, 1
    %v1901 = vadd.f32 %v1899, %v1900
    %v1902 = vmul.f32 %v1901, 0.01923077
    %v1903 = vadd.f32 %v1902, 1e-05
    %v1904 = vrsqrt.pop %v1903
    %v1905 = vmul.f32 %v1846, %v1904
    %v1906 = vlaneseq
    %v1907 = vshrl.u32 %v1906, 7
    %v1908 = vsub.s32 0, %v1907
    %v1909 = vrot.slane %v1905, %v1908
    %v1910 = vmul.f32 %v1869, %v1909
    %v1911 = vmul.f32 %v1870, %v1909
    %v1912 = vmul.f32 %v1871, %v1909
    %v1913 = vmul.f32 %v1872, %v1909
    %v1914 = vmul.f32 %v1873, %v1909
    %v1915 = vmul.f32 %v1874, %v1909
    %v1916 = vmul.f32 %v1875, %v1909
    %v1917 = vlaneseq
    %v1918 = vshrl.u32 %v1917, 7
    %v1919 = vsub.s32 0, %v1918
    %v1920 = vrot.slane %v1847, %v1919
    %v1921 = vadd.f32 %v1910, %v1920
    %v1922 = vadd.f32 %v1911, %v1920
    %v1923 = vadd.f32 %v1912, %v1920
    %v1924 = vadd.f32 %v1913, %v1920
    %v1925 = vadd.f32 %v1914, %v1920
    %v1926 = vadd.f32 %v1915, %v1920
    %v1927 = vadd.f32 %v1916, %v1920
    %vm1928 = vcmp.ge.f32.partialorder %v1921, 0.0
    %vm1929 = vcmp.ge.f32.partialorder %v1922, 0.0
    %vm1930 = vcmp.ge.f32.partialorder %v1923, 0.0
    %vm1931 = vcmp.ge.f32.partialorder %v1924, 0.0
    %vm1932 = vcmp.ge.f32.partialorder %v1925, 0.0
    %vm1933 = vcmp.ge.f32.partialorder %v1926, 0.0
    %vm1934 = vcmp.ge.f32.partialorder %v1927, 0.0
    %v1935 = vmul.f32 %v1921, 0.01
    %v1936 = vmul.f32 %v1922, 0.01
    %v1937 = vmul.f32 %v1923, 0.01
    %v1938 = vmul.f32 %v1924, 0.01
    %v1939 = vmul.f32 %v1925, 0.01
    %v1940 = vmul.f32 %v1926, 0.01
    %v1941 = vmul.f32 %v1927, 0.01
    %v1942 = vsel %vm1928, %v1921, %v1935
    %v1943 = vsel %vm1929, %v1922, %v1936
    %v1944 = vsel %vm1930, %v1923, %v1937
    %v1945 = vsel %vm1931, %v1924, %v1938
    %v1946 = vsel %vm1932, %v1925, %v1939
    %v1947 = vsel %vm1933, %v1926, %v1940
    %v1948 = vsel %vm1934, %v1927, %v1941
    %1949 = vst.msk [vmem:[#allocation3] sm:$0xff] %vm44, %v1942
    %1950 = vst.msk [vmem:[#allocation3 + $0x8] sm:$0xff] %vm44, %v1943
    %1951 = vst.msk [vmem:[#allocation3 + $0x10] sm:$0xff] %vm44, %v1944
    %1952 = vst.msk [vmem:[#allocation3 + $0x18] sm:$0xff] %vm44, %v1945
    %1953 = vst.msk [vmem:[#allocation3 + $0x20] sm:$0xff] %vm44, %v1946
    %1954 = vst.msk [vmem:[#allocation3 + $0x28] sm:$0xff] %vm44, %v1947
    %1955 = vst.msk [vmem:[#allocation3 + $0x30] sm:$0xf] %vm1859, %v1948
    %v1956 = vld [vmem:[#allocation3] sm:$0x3]
    %v1957 = vld [vmem:[%s3] sm:$0xff]
    %v1958 = vld [vmem:[%s3 + $0x8] sm:$0x3]
    %v1959 = vld [vmem:[#allocation3 + $0x2] sm:$0x3]
    %s1960 = scalar_lea.vmem %s3, 16
    %v1961 = vld [vmem:[%s1960] sm:$0xff]
    %v1962 = vld [vmem:[%s1960 + $0x8] sm:$0x3]
    %v1964 = vsel %vm44, %v1959, 0
    %v1967 = vsel %vm90, %v1962, 0
    %1969 = vmatprep.subr.mxu0 0.0
    %1970 = vmatpush1.msra.mxu0 %v1961
    %1971 = vmatprep.subr.mxu0 0.0
    %1972 = vmatpush1.msra.mxu0 %v1967
    %1973 = vmatprep.subr.mxu0 0.0
    %1974 = vmatpush1.msra.mxu0 0.0
    %1975 = vmatprep.subr.mxu0 0.0
    %1976 = vmatpush1.msra.mxu0 0.0
    %1977 = vmatprep.subr.mxu0 0.0
    %1978 = vmatpush1.msra.mxu0 0.0
    %1979 = vmatprep.subr.mxu0 0.0
    %1980 = vmatpush1.msra.mxu0 0.0
    %1981 = vmatprep.subr.mxu0 0.0
    %1982 = vmatpush1.msra.mxu0 0.0
    %1983 = vmatprep.subr.mxu0 0.0
    %1984 = vmatpush1.msra.mxu0 0.0
    %1985 = vmatprep.subr.mxu0 0.0
    %1986 = vmatpush1.msra.mxu0 0.0
    %1987 = vmatprep.subr.mxu0 0.0
    %1988 = vmatpush1.msra.mxu0 0.0
    %1989 = vmatprep.subr.mxu0 0.0
    %1990 = vmatpush1.msra.mxu0 0.0
    %1991 = vmatprep.subr.mxu0 0.0
    %1992 = vmatpush1.msra.mxu0 0.0
    %1993 = vmatprep.subr.mxu0 0.0
    %1994 = vmatpush1.msra.mxu0 0.0
    %1995 = vmatprep.subr.mxu0 0.0
    %1996 = vmatpush1.msra.mxu0 0.0
    %1997 = vmatprep.subr.mxu0 0.0
    %1998 = vmatpush1.msra.mxu0 0.0
    %1999 = vmatprep.subr.mxu0 0.0
    %2000 = vmatpush1.msra.mxu0 0.0
    %2001 = vmatprep.subr.mxu0 0.0
    %2002 = vmatpush1.msra.mxu0 0.0
    %2003 = vmatprep.subr.mxu0 0.0
    %2004 = vmatpush1.msra.mxu0 0.0
    %2005 = vmatprep.subr.mxu0 0.0
    %2006 = vmatpush1.msra.mxu0 0.0
    %2007 = vmatprep.subr.mxu0 0.0
    %2008 = vmatpush1.msra.mxu0 0.0
    %2009 = vmatprep.subr.mxu0 0.0
    %2010 = vmatpush1.msra.mxu0 0.0
    %2011 = vmatprep.subr.mxu0 0.0
    %2012 = vmatpush1.msra.mxu0 0.0
    %2013 = vmatprep.subr.mxu0 0.0
    %2014 = vmatpush1.msra.mxu0 0.0
    %2015 = vmatprep.subr.mxu0 0.0
    %2016 = vmatpush1.msra.mxu0 0.0
    %2017 = vmatprep.subr.mxu0 0.0
    %2018 = vmatpush1.msra.mxu0 0.0
    %2019 = vmatprep.subr.mxu0 0.0
    %2020 = vmatpush1.msra.mxu0 0.0
    %2021 = vmatprep.subr.mxu0 0.0
    %2022 = vmatpush1.msra.mxu0 0.0
    %2023 = vmatprep.subr.mxu0 0.0
    %2024 = vmatpush1.msra.mxu0 0.0
    %2025 = vmatprep.subr.mxu0 0.0
    %2026 = vmatpush1.msra.mxu0 0.0
    %2027 = vmatprep.subr.mxu0 0.0
    %2028 = vmatpush1.msra.mxu0 0.0
    %2029 = vmatprep.subr.mxu0 0.0
    %2030 = vmatpush1.msra.mxu0 0.0
    %2031 = vmatprep.subr.mxu0 0.0
    %2032 = vmatpush1.msra.mxu0 0.0
    %2033 = vmatprep.mubr.f32.mxu0 0.0
    %2034 = vmatmul.mubr.f32.gmra.mrb[0].mxu0 %v1964
    %v2035 = vpop.f32.mrb[0].mxu0
    %v2036 = vadd.f32 0.0, %v2035
    %v2037 = vpop.f32.mrb[0].mxu0
    %2038 = vdwg.mxu0
    %v2040 = vsel %vm44, %v1956, 0
    %v2043 = vsel %vm90, %v1958, 0
    %2045 = vmatprep.subr.mxu0 0.0
    %2046 = vmatpush1.msra.mxu0 %v1957
    %2047 = vmatprep.subr.mxu0 0.0
    %2048 = vmatpush1.msra.mxu0 %v2043
    %2049 = vmatprep.subr.mxu0 0.0
    %2050 = vmatpush1.msra.mxu0 0.0
    %2051 = vmatprep.subr.mxu0 0.0
    %2052 = vmatpush1.msra.mxu0 0.0
    %2053 = vmatprep.subr.mxu0 0.0
    %2054 = vmatpush1.msra.mxu0 0.0
    %2055 = vmatprep.subr.mxu0 0.0
    %2056 = vmatpush1.msra.mxu0 0.0
    %2057 = vmatprep.subr.mxu0 0.0
    %2058 = vmatpush1.msra.mxu0 0.0
    %2059 = vmatprep.subr.mxu0 0.0
    %2060 = vmatpush1.msra.mxu0 0.0
    %2061 = vmatprep.subr.mxu0 0.0
    %2062 = vmatpush1.msra.mxu0 0.0
    %2063 = vmatprep.subr.mxu0 0.0
    %2064 = vmatpush1.msra.mxu0 0.0
    %2065 = vmatprep.subr.mxu0 0.0
    %2066 = vmatpush1.msra.mxu0 0.0
    %2067 = vmatprep.subr.mxu0 0.0
    %2068 = vmatpush1.msra.mxu0 0.0
    %2069 = vmatprep.subr.mxu0 0.0
    %2070 = vmatpush1.msra.mxu0 0.0
    %2071 = vmatprep.subr.mxu0 0.0
    %2072 = vmatpush1.msra.mxu0 0.0
    %2073 = vmatprep.subr.mxu0 0.0
    %2074 = vmatpush1.msra.mxu0 0.0
    %2075 = vmatprep.subr.mxu0 0.0
    %2076 = vmatpush1.msra.mxu0 0.0
    %2077 = vmatprep.subr.mxu0 0.0
    %2078 = vmatpush1.msra.mxu0 0.0
    %2079 = vmatprep.subr.mxu0 0.0
    %2080 = vmatpush1.msra.mxu0 0.0
    %2081 = vmatprep.subr.mxu0 0.0
    %2082 = vmatpush1.msra.mxu0 0.0
    %2083 = vmatprep.subr.mxu0 0.0
    %2084 = vmatpush1.msra.mxu0 0.0
    %2085 = vmatprep.subr.mxu0 0.0
    %2086 = vmatpush1.msra.mxu0 0.0
    %2087 = vmatprep.subr.mxu0 0.0
    %2088 = vmatpush1.msra.mxu0 0.0
    %2089 = vmatprep.subr.mxu0 0.0
    %2090 = vmatpush1.msra.mxu0 0.0
    %2091 = vmatprep.subr.mxu0 0.0
    %2092 = vmatpush1.msra.mxu0 0.0
    %2093 = vmatprep.subr.mxu0 0.0
    %2094 = vmatpush1.msra.mxu0 0.0
    %2095 = vmatprep.subr.mxu0 0.0
    %2096 = vmatpush1.msra.mxu0 0.0
    %2097 = vmatprep.subr.mxu0 0.0
    %2098 = vmatpush1.msra.mxu0 0.0
    %2099 = vmatprep.subr.mxu0 0.0
    %2100 = vmatpush1.msra.mxu0 0.0
    %2101 = vmatprep.subr.mxu0 0.0
    %2102 = vmatpush1.msra.mxu0 0.0
    %2103 = vmatprep.subr.mxu0 0.0
    %2104 = vmatpush1.msra.mxu0 0.0
    %2105 = vmatprep.subr.mxu0 0.0
    %2106 = vmatpush1.msra.mxu0 0.0
    %2107 = vmatprep.subr.mxu0 0.0
    %2108 = vmatpush1.msra.mxu0 0.0
    %2109 = vmatprep.mubr.f32.mxu0 0.0
    %2110 = vmatmul.mubr.f32.gmra.mrb[0].mxu0 %v2040
    %v2111 = vpop.f32.mrb[0].mxu0
    %v2112 = vadd.f32 %v2036, %v2111
    %v2113 = vpop.f32.mrb[0].mxu0
    %2114 = vdwg.mxu0
    %v2115 = vld [vmem:[#allocation3 + $0x4] sm:$0x3]
    %s2116 = scalar_lea.vmem %s3, 32
    %v2117 = vld [vmem:[%s2116] sm:$0xff]
    %v2118 = vld [vmem:[%s2116 + $0x8] sm:$0x3]
    %v2120 = vsel %vm44, %v2115, 0
    %v2123 = vsel %vm90, %v2118, 0
    %2125 = vmatprep.subr.mxu0 0.0
    %2126 = vmatpush1.msra.mxu0 %v2117
    %2127 = vmatprep.subr.mxu0 0.0
    %2128 = vmatpush1.msra.mxu0 %v2123
    %2129 = vmatprep.subr.mxu0 0.0
    %2130 = vmatpush1.msra.mxu0 0.0
    %2131 = vmatprep.subr.mxu0 0.0
    %2132 = vmatpush1.msra.mxu0 0.0
    %2133 = vmatprep.subr.mxu0 0.0
    %2134 = vmatpush1.msra.mxu0 0.0
    %2135 = vmatprep.subr.mxu0 0.0
    %2136 = vmatpush1.msra.mxu0 0.0
    %2137 = vmatprep.subr.mxu0 0.0
    %2138 = vmatpush1.msra.mxu0 0.0
    %2139 = vmatprep.subr.mxu0 0.0
    %2140 = vmatpush1.msra.mxu0 0.0
    %2141 = vmatprep.subr.mxu0 0.0
    %2142 = vmatpush1.msra.mxu0 0.0
    %2143 = vmatprep.subr.mxu0 0.0
    %2144 = vmatpush1.msra.mxu0 0.0
    %2145 = vmatprep.subr.mxu0 0.0
    %2146 = vmatpush1.msra.mxu0 0.0
    %2147 = vmatprep.subr.mxu0 0.0
    %2148 = vmatpush1.msra.mxu0 0.0
    %2149 = vmatprep.subr.mxu0 0.0
    %2150 = vmatpush1.msra.mxu0 0.0
    %2151 = vmatprep.subr.mxu0 0.0
    %2152 = vmatpush1.msra.mxu0 0.0
    %2153 = vmatprep.subr.mxu0 0.0
    %2154 = vmatpush1.msra.mxu0 0.0
    %2155 = vmatprep.subr.mxu0 0.0
    %2156 = vmatpush1.msra.mxu0 0.0
    %2157 = vmatprep.subr.mxu0 0.0
    %2158 = vmatpush1.msra.mxu0 0.0
    %2159 = vmatprep.subr.mxu0 0.0
    %2160 = vmatpush1.msra.mxu0 0.0
    %2161 = vmatprep.subr.mxu0 0.0
    %2162 = vmatpush1.msra.mxu0 0.0
    %2163 = vmatprep.subr.mxu0 0.0
    %2164 = vmatpush1.msra.mxu0 0.0
    %2165 = vmatprep.subr.mxu0 0.0
    %2166 = vmatpush1.msra.mxu0 0.0
    %2167 = vmatprep.subr.mxu0 0.0
    %2168 = vmatpush1.msra.mxu0 0.0
    %2169 = vmatprep.subr.mxu0 0.0
    %2170 = vmatpush1.msra.mxu0 0.0
    %2171 = vmatprep.subr.mxu0 0.0
    %2172 = vmatpush1.msra.mxu0 0.0
    %2173 = vmatprep.subr.mxu0 0.0
    %2174 = vmatpush1.msra.mxu0 0.0
    %2175 = vmatprep.subr.mxu0 0.0
    %2176 = vmatpush1.msra.mxu0 0.0
    %2177 = vmatprep.subr.mxu0 0.0
    %2178 = vmatpush1.msra.mxu0 0.0
    %2179 = vmatprep.subr.mxu0 0.0
    %2180 = vmatpush1.msra.mxu0 0.0
    %2181 = vmatprep.subr.mxu0 0.0
    %2182 = vmatpush1.msra.mxu0 0.0
    %2183 = vmatprep.subr.mxu0 0.0
    %2184 = vmatpush1.msra.mxu0 0.0
    %2185 = vmatprep.subr.mxu0 0.0
    %2186 = vmatpush1.msra.mxu0 0.0
    %2187 = vmatprep.subr.mxu0 0.0
    %2188 = vmatpush1.msra.mxu0 0.0
    %2189 = vmatprep.mubr.f32.mxu0 0.0
    %2190 = vmatmul.mubr.f32.gmra.mrb[0].mxu0 %v2120
    %v2191 = vpop.f32.mrb[0].mxu0
    %v2192 = vadd.f32 0.0, %v2191
    %v2193 = vpop.f32.mrb[0].mxu0
    %2194 = vdwg.mxu0
    %v2195 = vadd.f32 %v2112, %v2192
    %v2196 = vld [vmem:[#allocation3 + $0x6] sm:$0x3]
    %s2197 = scalar_lea.vmem %s3, 48
    %v2198 = vld [vmem:[%s2197] sm:$0xff]
    %v2199 = vld [vmem:[%s2197 + $0x8] sm:$0x3]
    %v2201 = vsel %vm44, %v2196, 0
    %v2204 = vsel %vm90, %v2199, 0
    %2206 = vmatprep.subr.mxu0 0.0
    %2207 = vmatpush1.msra.mxu0 %v2198
    %2208 = vmatprep.subr.mxu0 0.0
    %2209 = vmatpush1.msra.mxu0 %v2204
    %2210 = vmatprep.subr.mxu0 0.0
    %2211 = vmatpush1.msra.mxu0 0.0
    %2212 = vmatprep.subr.mxu0 0.0
    %2213 = vmatpush1.msra.mxu0 0.0
    %2214 = vmatprep.subr.mxu0 0.0
    %2215 = vmatpush1.msra.mxu0 0.0
    %2216 = vmatprep.subr.mxu0 0.0
    %2217 = vmatpush1.msra.mxu0 0.0
    %2218 = vmatprep.subr.mxu0 0.0
    %2219 = vmatpush1.msra.mxu0 0.0
    %2220 = vmatprep.subr.mxu0 0.0
    %2221 = vmatpush1.msra.mxu0 0.0
    %2222 = vmatprep.subr.mxu0 0.0
    %2223 = vmatpush1.msra.mxu0 0.0
    %2224 = vmatprep.subr.mxu0 0.0
    %2225 = vmatpush1.msra.mxu0 0.0
    %2226 = vmatprep.subr.mxu0 0.0
    %2227 = vmatpush1.msra.mxu0 0.0
    %2228 = vmatprep.subr.mxu0 0.0
    %2229 = vmatpush1.msra.mxu0 0.0
    %2230 = vmatprep.subr.mxu0 0.0
    %2231 = vmatpush1.msra.mxu0 0.0
    %2232 = vmatprep.subr.mxu0 0.0
    %2233 = vmatpush1.msra.mxu0 0.0
    %2234 = vmatprep.subr.mxu0 0.0
    %2235 = vmatpush1.msra.mxu0 0.0
    %2236 = vmatprep.subr.mxu0 0.0
    %2237 = vmatpush1.msra.mxu0 0.0
    %2238 = vmatprep.subr.mxu0 0.0
    %2239 = vmatpush1.msra.mxu0 0.0
    %2240 = vmatprep.subr.mxu0 0.0
    %2241 = vmatpush1.msra.mxu0 0.0
    %2242 = vmatprep.subr.mxu0 0.0
    %2243 = vmatpush1.msra.mxu0 0.0
    %2244 = vmatprep.subr.mxu0 0.0
    %2245 = vmatpush1.msra.mxu0 0.0
    %2246 = vmatprep.subr.mxu0 0.0
    %2247 = vmatpush1.msra.mxu0 0.0
    %2248 = vmatprep.subr.mxu0 0.0
    %2249 = vmatpush1.msra.mxu0 0.0
    %2250 = vmatprep.subr.mxu0 0.0
    %2251 = vmatpush1.msra.mxu0 0.0
    %2252 = vmatprep.subr.mxu0 0.0
    %2253 = vmatpush1.msra.mxu0 0.0
    %2254 = vmatprep.subr.mxu0 0.0
    %2255 = vmatpush1.msra.mxu0 0.0
    %2256 = vmatprep.subr.mxu0 0.0
    %2257 = vmatpush1.msra.mxu0 0.0
    %2258 = vmatprep.subr.mxu0 0.0
    %2259 = vmatpush1.msra.mxu0 0.0
    %2260 = vmatprep.subr.mxu0 0.0
    %2261 = vmatpush1.msra.mxu0 0.0
    %2262 = vmatprep.subr.mxu0 0.0
    %2263 = vmatpush1.msra.mxu0 0.0
    %2264 = vmatprep.subr.mxu0 0.0
    %2265 = vmatpush1.msra.mxu0 0.0
    %2266 = vmatprep.subr.mxu0 0.0
    %2267 = vmatpush1.msra.mxu0 0.0
    %2268 = vmatprep.subr.mxu0 0.0
    %2269 = vmatpush1.msra.mxu0 0.0
    %2270 = vmatprep.mubr.f32.mxu0 0.0
    %2271 = vmatmul.mubr.f32.gmra.mrb[0].mxu0 %v2201
    %v2272 = vpop.f32.mrb[0].mxu0
    %v2273 = vadd.f32 0.0, %v2272
    %v2274 = vpop.f32.mrb[0].mxu0
    %2275 = vdwg.mxu0
    %v2276 = vadd.f32 %v2195, %v2273
    %v2277 = vld [vmem:[#allocation3 + $0x8] sm:$0x3]
    %s2278 = scalar_lea.vmem %s3, 64
    %v2279 = vld [vmem:[%s2278] sm:$0xff]
    %v2280 = vld [vmem:[%s2278 + $0x8] sm:$0x3]
    %v2282 = vsel %vm44, %v2277, 0
    %v2285 = vsel %vm90, %v2280, 0
    %2287 = vmatprep.subr.mxu0 0.0
    %2288 = vmatpush1.msra.mxu0 %v2279
    %2289 = vmatprep.subr.mxu0 0.0
    %2290 = vmatpush1.msra.mxu0 %v2285
    %2291 = vmatprep.subr.mxu0 0.0
    %2292 = vmatpush1.msra.mxu0 0.0
    %2293 = vmatprep.subr.mxu0 0.0
    %2294 = vmatpush1.msra.mxu0 0.0
    %2295 = vmatprep.subr.mxu0 0.0
    %2296 = vmatpush1.msra.mxu0 0.0
    %2297 = vmatprep.subr.mxu0 0.0
    %2298 = vmatpush1.msra.mxu0 0.0
    %2299 = vmatprep.subr.mxu0 0.0
    %2300 = vmatpush1.msra.mxu0 0.0
    %2301 = vmatprep.subr.mxu0 0.0
    %2302 = vmatpush1.msra.mxu0 0.0
    %2303 = vmatprep.subr.mxu0 0.0
    %2304 = vmatpush1.msra.mxu0 0.0
    %2305 = vmatprep.subr.mxu0 0.0
    %2306 = vmatpush1.msra.mxu0 0.0
    %2307 = vmatprep.subr.mxu0 0.0
    %2308 = vmatpush1.msra.mxu0 0.0
    %2309 = vmatprep.subr.mxu0 0.0
    %2310 = vmatpush1.msra.mxu0 0.0
    %2311 = vmatprep.subr.mxu0 0.0
    %2312 = vmatpush1.msra.mxu0 0.0
    %2313 = vmatprep.subr.mxu0 0.0
    %2314 = vmatpush1.msra.mxu0 0.0
    %2315 = vmatprep.subr.mxu0 0.0
    %2316 = vmatpush1.msra.mxu0 0.0
    %2317 = vmatprep.subr.mxu0 0.0
    %2318 = vmatpush1.msra.mxu0 0.0
    %2319 = vmatprep.subr.mxu0 0.0
    %2320 = vmatpush1.msra.mxu0 0.0
    %2321 = vmatprep.subr.mxu0 0.0
    %2322 = vmatpush1.msra.mxu0 0.0
    %2323 = vmatprep.subr.mxu0 0.0
    %2324 = vmatpush1.msra.mxu0 0.0
    %2325 = vmatprep.subr.mxu0 0.0
    %2326 = vmatpush1.msra.mxu0 0.0
    %2327 = vmatprep.subr.mxu0 0.0
    %2328 = vmatpush1.msra.mxu0 0.0
    %2329 = vmatprep.subr.mxu0 0.0
    %2330 = vmatpush1.msra.mxu0 0.0
    %2331 = vmatprep.subr.mxu0 0.0
    %2332 = vmatpush1.msra.mxu0 0.0
    %2333 = vmatprep.subr.mxu0 0.0
    %2334 = vmatpush1.msra.mxu0 0.0
    %2335 = vmatprep.subr.mxu0 0.0
    %2336 = vmatpush1.msra.mxu0 0.0
    %2337 = vmatprep.subr.mxu0 0.0
    %2338 = vmatpush1.msra.mxu0 0.0
    %2339 = vmatprep.subr.mxu0 0.0
    %2340 = vmatpush1.msra.mxu0 0.0
    %2341 = vmatprep.subr.mxu0 0.0
    %2342 = vmatpush1.msra.mxu0 0.0
    %2343 = vmatprep.subr.mxu0 0.0
    %2344 = vmatpush1.msra.mxu0 0.0
    %2345 = vmatprep.subr.mxu0 0.0
    %2346 = vmatpush1.msra.mxu0 0.0
    %2347 = vmatprep.subr.mxu0 0.0
    %2348 = vmatpush1.msra.mxu0 0.0
    %2349 = vmatprep.subr.mxu0 0.0
    %2350 = vmatpush1.msra.mxu0 0.0
    %2351 = vmatprep.mubr.f32.mxu0 0.0
    %2352 = vmatmul.mubr.f32.gmra.mrb[0].mxu0 %v2282
    %v2353 = vpop.f32.mrb[0].mxu0
    %v2354 = vadd.f32 0.0, %v2353
    %v2355 = vpop.f32.mrb[0].mxu0
    %2356 = vdwg.mxu0
    %v2357 = vadd.f32 %v2276, %v2354
    %v2358 = vld [vmem:[#allocation3 + $0xa] sm:$0x3]
    %s2359 = scalar_lea.vmem %s3, 80
    %v2360 = vld [vmem:[%s2359] sm:$0xff]
    %v2361 = vld [vmem:[%s2359 + $0x8] sm:$0x3]
    %v2363 = vsel %vm44, %v2358, 0
    %v2366 = vsel %vm90, %v2361, 0
    %2368 = vmatprep.subr.mxu0 0.0
    %2369 = vmatpush1.msra.mxu0 %v2360
    %2370 = vmatprep.subr.mxu0 0.0
    %2371 = vmatpush1.msra.mxu0 %v2366
    %2372 = vmatprep.subr.mxu0 0.0
    %2373 = vmatpush1.msra.mxu0 0.0
    %2374 = vmatprep.subr.mxu0 0.0
    %2375 = vmatpush1.msra.mxu0 0.0
    %2376 = vmatprep.subr.mxu0 0.0
    %2377 = vmatpush1.msra.mxu0 0.0
    %2378 = vmatprep.subr.mxu0 0.0
    %2379 = vmatpush1.msra.mxu0 0.0
    %2380 = vmatprep.subr.mxu0 0.0
    %2381 = vmatpush1.msra.mxu0 0.0
    %2382 = vmatprep.subr.mxu0 0.0
    %2383 = vmatpush1.msra.mxu0 0.0
    %2384 = vmatprep.subr.mxu0 0.0
    %2385 = vmatpush1.msra.mxu0 0.0
    %2386 = vmatprep.subr.mxu0 0.0
    %2387 = vmatpush1.msra.mxu0 0.0
    %2388 = vmatprep.subr.mxu0 0.0
    %2389 = vmatpush1.msra.mxu0 0.0
    %2390 = vmatprep.subr.mxu0 0.0
    %2391 = vmatpush1.msra.mxu0 0.0
    %2392 = vmatprep.subr.mxu0 0.0
    %2393 = vmatpush1.msra.mxu0 0.0
    %2394 = vmatprep.subr.mxu0 0.0
    %2395 = vmatpush1.msra.mxu0 0.0
    %2396 = vmatprep.subr.mxu0 0.0
    %2397 = vmatpush1.msra.mxu0 0.0
    %2398 = vmatprep.subr.mxu0 0.0
    %2399 = vmatpush1.msra.mxu0 0.0
    %2400 = vmatprep.subr.mxu0 0.0
    %2401 = vmatpush1.msra.mxu0 0.0
    %2402 = vmatprep.subr.mxu0 0.0
    %2403 = vmatpush1.msra.mxu0 0.0
    %2404 = vmatprep.subr.mxu0 0.0
    %2405 = vmatpush1.msra.mxu0 0.0
    %2406 = vmatprep.subr.mxu0 0.0
    %2407 = vmatpush1.msra.mxu0 0.0
    %2408 = vmatprep.subr.mxu0 0.0
    %2409 = vmatpush1.msra.mxu0 0.0
    %2410 = vmatprep.subr.mxu0 0.0
    %2411 = vmatpush1.msra.mxu0 0.0
    %2412 = vmatprep.subr.mxu0 0.0
    %2413 = vmatpush1.msra.mxu0 0.0
    %2414 = vmatprep.subr.mxu0 0.0
    %2415 = vmatpush1.msra.mxu0 0.0
    %2416 = vmatprep.subr.mxu0 0.0
    %2417 = vmatpush1.msra.mxu0 0.0
    %2418 = vmatprep.subr.mxu0 0.0
    %2419 = vmatpush1.msra.mxu0 0.0
    %2420 = vmatprep.subr.mxu0 0.0
    %2421 = vmatpush1.msra.mxu0 0.0
    %2422 = vmatprep.subr.mxu0 0.0
    %2423 = vmatpush1.msra.mxu0 0.0
    %2424 = vmatprep.subr.mxu0 0.0
    %2425 = vmatpush1.msra.mxu0 0.0
    %2426 = vmatprep.subr.mxu0 0.0
    %2427 = vmatpush1.msra.mxu0 0.0
    %2428 = vmatprep.subr.mxu0 0.0
    %2429 = vmatpush1.msra.mxu0 0.0
    %2430 = vmatprep.subr.mxu0 0.0
    %2431 = vmatpush1.msra.mxu0 0.0
    %2432 = vmatprep.mubr.f32.mxu0 0.0
    %2433 = vmatmul.mubr.f32.gmra.mrb[0].mxu0 %v2363
    %v2434 = vpop.f32.mrb[0].mxu0
    %v2435 = vadd.f32 0.0, %v2434
    %v2436 = vpop.f32.mrb[0].mxu0
    %2437 = vdwg.mxu0
    %v2438 = vadd.f32 %v2357, %v2435
    %v2439 = vld [vmem:[#allocation3 + $0xc] sm:$0x3]
    %s2440 = scalar_lea.vmem %s3, 96
    %v2441 = vld [vmem:[%s2440] sm:$0xff]
    %v2442 = vld [vmem:[%s2440 + $0x8] sm:$0x3]
    %v2444 = vsel %vm44, %v2439, 0
    %v2447 = vsel %vm90, %v2442, 0
    %2449 = vmatprep.subr.mxu0 0.0
    %2450 = vmatpush1.msra.mxu0 %v2441
    %2451 = vmatprep.subr.mxu0 0.0
    %2452 = vmatpush1.msra.mxu0 %v2447
    %2453 = vmatprep.subr.mxu0 0.0
    %2454 = vmatpush1.msra.mxu0 0.0
    %2455 = vmatprep.subr.mxu0 0.0
    %2456 = vmatpush1.msra.mxu0 0.0
    %2457 = vmatprep.subr.mxu0 0.0
    %2458 = vmatpush1.msra.mxu0 0.0
    %2459 = vmatprep.subr.mxu0 0.0
    %2460 = vmatpush1.msra.mxu0 0.0
    %2461 = vmatprep.subr.mxu0 0.0
    %2462 = vmatpush1.msra.mxu0 0.0
    %2463 = vmatprep.subr.mxu0 0.0
    %2464 = vmatpush1.msra.mxu0 0.0
    %2465 = vmatprep.subr.mxu0 0.0
    %2466 = vmatpush1.msra.mxu0 0.0
    %2467 = vmatprep.subr.mxu0 0.0
    %2468 = vmatpush1.msra.mxu0 0.0
    %2469 = vmatprep.subr.mxu0 0.0
    %2470 = vmatpush1.msra.mxu0 0.0
    %2471 = vmatprep.subr.mxu0 0.0
    %2472 = vmatpush1.msra.mxu0 0.0
    %2473 = vmatprep.subr.mxu0 0.0
    %2474 = vmatpush1.msra.mxu0 0.0
    %2475 = vmatprep.subr.mxu0 0.0
    %2476 = vmatpush1.msra.mxu0 0.0
    %2477 = vmatprep.subr.mxu0 0.0
    %2478 = vmatpush1.msra.mxu0 0.0
    %2479 = vmatprep.subr.mxu0 0.0
    %2480 = vmatpush1.msra.mxu0 0.0
    %2481 = vmatprep.subr.mxu0 0.0
    %2482 = vmatpush1.msra.mxu0 0.0
    %2483 = vmatprep.subr.mxu0 0.0
    %2484 = vmatpush1.msra.mxu0 0.0
    %2485 = vmatprep.subr.mxu0 0.0
    %2486 = vmatpush1.msra.mxu0 0.0
    %2487 = vmatprep.subr.mxu0 0.0
    %2488 = vmatpush1.msra.mxu0 0.0
    %2489 = vmatprep.subr.mxu0 0.0
    %2490 = vmatpush1.msra.mxu0 0.0
    %2491 = vmatprep.subr.mxu0 0.0
    %2492 = vmatpush1.msra.mxu0 0.0
    %2493 = vmatprep.subr.mxu0 0.0
    %2494 = vmatpush1.msra.mxu0 0.0
    %2495 = vmatprep.subr.mxu0 0.0
    %2496 = vmatpush1.msra.mxu0 0.0
    %2497 = vmatprep.subr.mxu0 0.0
    %2498 = vmatpush1.msra.mxu0 0.0
    %2499 = vmatprep.subr.mxu0 0.0
    %2500 = vmatpush1.msra.mxu0 0.0
    %2501 = vmatprep.subr.mxu0 0.0
    %2502 = vmatpush1.msra.mxu0 0.0
    %2503 = vmatprep.subr.mxu0 0.0
    %2504 = vmatpush1.msra.mxu0 0.0
    %2505 = vmatprep.subr.mxu0 0.0
    %2506 = vmatpush1.msra.mxu0 0.0
    %2507 = vmatprep.subr.mxu0 0.0
    %2508 = vmatpush1.msra.mxu0 0.0
    %2509 = vmatprep.subr.mxu0 0.0
    %2510 = vmatpush1.msra.mxu0 0.0
    %2511 = vmatprep.subr.mxu0 0.0
    %2512 = vmatpush1.msra.mxu0 0.0
    %2513 = vmatprep.mubr.f32.mxu0 0.0
    %2514 = vmatmul.mubr.f32.gmra.mrb[0].mxu0 %v2444
    %v2515 = vpop.f32.mrb[0].mxu0
    %v2516 = vadd.f32 0.0, %v2515
    %v2517 = vpop.f32.mrb[0].mxu0
    %2518 = vdwg.mxu0
    %v2519 = vadd.f32 %v2438, %v2516
    %v2520 = vld [vmem:[#allocation3 + $0xe] sm:$0x3]
    %s2521 = scalar_lea.vmem %s3, 112
    %v2522 = vld [vmem:[%s2521] sm:$0xff]
    %v2523 = vld [vmem:[%s2521 + $0x8] sm:$0x3]
    %v2525 = vsel %vm44, %v2520, 0
    %v2528 = vsel %vm90, %v2523, 0
    %2530 = vmatprep.subr.mxu0 0.0
    %2531 = vmatpush1.msra.mxu0 %v2522
    %2532 = vmatprep.subr.mxu0 0.0
    %2533 = vmatpush1.msra.mxu0 %v2528
    %2534 = vmatprep.subr.mxu0 0.0
    %2535 = vmatpush1.msra.mxu0 0.0
    %2536 = vmatprep.subr.mxu0 0.0
    %2537 = vmatpush1.msra.mxu0 0.0
    %2538 = vmatprep.subr.mxu0 0.0
    %2539 = vmatpush1.msra.mxu0 0.0
    %2540 = vmatprep.subr.mxu0 0.0
    %2541 = vmatpush1.msra.mxu0 0.0
    %2542 = vmatprep.subr.mxu0 0.0
    %2543 = vmatpush1.msra.mxu0 0.0
    %2544 = vmatprep.subr.mxu0 0.0
    %2545 = vmatpush1.msra.mxu0 0.0
    %2546 = vmatprep.subr.mxu0 0.0
    %2547 = vmatpush1.msra.mxu0 0.0
    %2548 = vmatprep.subr.mxu0 0.0
    %2549 = vmatpush1.msra.mxu0 0.0
    %2550 = vmatprep.subr.mxu0 0.0
    %2551 = vmatpush1.msra.mxu0 0.0
    %2552 = vmatprep.subr.mxu0 0.0
    %2553 = vmatpush1.msra.mxu0 0.0
    %2554 = vmatprep.subr.mxu0 0.0
    %2555 = vmatpush1.msra.mxu0 0.0
    %2556 = vmatprep.subr.mxu0 0.0
    %2557 = vmatpush1.msra.mxu0 0.0
    %2558 = vmatprep.subr.mxu0 0.0
    %2559 = vmatpush1.msra.mxu0 0.0
    %2560 = vmatprep.subr.mxu0 0.0
    %2561 = vmatpush1.msra.mxu0 0.0
    %2562 = vmatprep.subr.mxu0 0.0
    %2563 = vmatpush1.msra.mxu0 0.0
    %2564 = vmatprep.subr.mxu0 0.0
    %2565 = vmatpush1.msra.mxu0 0.0
    %2566 = vmatprep.subr.mxu0 0.0
    %2567 = vmatpush1.msra.mxu0 0.0
    %2568 = vmatprep.subr.mxu0 0.0
    %2569 = vmatpush1.msra.mxu0 0.0
    %2570 = vmatprep.subr.mxu0 0.0
    %2571 = vmatpush1.msra.mxu0 0.0
    %2572 = vmatprep.subr.mxu0 0.0
    %2573 = vmatpush1.msra.mxu0 0.0
    %2574 = vmatprep.subr.mxu0 0.0
    %2575 = vmatpush1.msra.mxu0 0.0
    %2576 = vmatprep.subr.mxu0 0.0
    %2577 = vmatpush1.msra.mxu0 0.0
    %2578 = vmatprep.subr.mxu0 0.0
    %2579 = vmatpush1.msra.mxu0 0.0
    %2580 = vmatprep.subr.mxu0 0.0
    %2581 = vmatpush1.msra.mxu0 0.0
    %2582 = vmatprep.subr.mxu0 0.0
    %2583 = vmatpush1.msra.mxu0 0.0
    %2584 = vmatprep.subr.mxu0 0.0
    %2585 = vmatpush1.msra.mxu0 0.0
    %2586 = vmatprep.subr.mxu0 0.0
    %2587 = vmatpush1.msra.mxu0 0.0
    %2588 = vmatprep.subr.mxu0 0.0
    %2589 = vmatpush1.msra.mxu0 0.0
    %2590 = vmatprep.subr.mxu0 0.0
    %2591 = vmatpush1.msra.mxu0 0.0
    %2592 = vmatprep.subr.mxu0 0.0
    %2593 = vmatpush1.msra.mxu0 0.0
    %2594 = vmatprep.mubr.f32.mxu0 0.0
    %2595 = vmatmul.mubr.f32.gmra.mrb[0].mxu0 %v2525
    %v2596 = vpop.f32.mrb[0].mxu0
    %v2597 = vadd.f32 0.0, %v2596
    %v2598 = vpop.f32.mrb[0].mxu0
    %2599 = vdwg.mxu0
    %v2600 = vadd.f32 %v2519, %v2597
    %v2601 = vld [vmem:[#allocation3 + $0x10] sm:$0x3]
    %s2602 = scalar_lea.vmem %s3, 128
    %v2603 = vld [vmem:[%s2602] sm:$0xff]
    %v2604 = vld [vmem:[%s2602 + $0x8] sm:$0x3]
    %v2606 = vsel %vm44, %v2601, 0
    %v2609 = vsel %vm90, %v2604, 0
    %2611 = vmatprep.subr.mxu0 0.0
    %2612 = vmatpush1.msra.mxu0 %v2603
    %2613 = vmatprep.subr.mxu0 0.0
    %2614 = vmatpush1.msra.mxu0 %v2609
    %2615 = vmatprep.subr.mxu0 0.0
    %2616 = vmatpush1.msra.mxu0 0.0
    %2617 = vmatprep.subr.mxu0 0.0
    %2618 = vmatpush1.msra.mxu0 0.0
    %2619 = vmatprep.subr.mxu0 0.0
    %2620 = vmatpush1.msra.mxu0 0.0
    %2621 = vmatprep.subr.mxu0 0.0
    %2622 = vmatpush1.msra.mxu0 0.0
    %2623 = vmatprep.subr.mxu0 0.0
    %2624 = vmatpush1.msra.mxu0 0.0
    %2625 = vmatprep.subr.mxu0 0.0
    %2626 = vmatpush1.msra.mxu0 0.0
    %2627 = vmatprep.subr.mxu0 0.0
    %2628 = vmatpush1.msra.mxu0 0.0
    %2629 = vmatprep.subr.mxu0 0.0
    %2630 = vmatpush1.msra.mxu0 0.0
    %2631 = vmatprep.subr.mxu0 0.0
    %2632 = vmatpush1.msra.mxu0 0.0
    %2633 = vmatprep.subr.mxu0 0.0
    %2634 = vmatpush1.msra.mxu0 0.0
    %2635 = vmatprep.subr.mxu0 0.0
    %2636 = vmatpush1.msra.mxu0 0.0
    %2637 = vmatprep.subr.mxu0 0.0
    %2638 = vmatpush1.msra.mxu0 0.0
    %2639 = vmatprep.subr.mxu0 0.0
    %2640 = vmatpush1.msra.mxu0 0.0
    %2641 = vmatprep.subr.mxu0 0.0
    %2642 = vmatpush1.msra.mxu0 0.0
    %2643 = vmatprep.subr.mxu0 0.0
    %2644 = vmatpush1.msra.mxu0 0.0
    %2645 = vmatprep.subr.mxu0 0.0
    %2646 = vmatpush1.msra.mxu0 0.0
    %2647 = vmatprep.subr.mxu0 0.0
    %2648 = vmatpush1.msra.mxu0 0.0
    %2649 = vmatprep.subr.mxu0 0.0
    %2650 = vmatpush1.msra.mxu0 0.0
    %2651 = vmatprep.subr.mxu0 0.0
    %2652 = vmatpush1.msra.mxu0 0.0
    %2653 = vmatprep.subr.mxu0 0.0
    %2654 = vmatpush1.msra.mxu0 0.0
    %2655 = vmatprep.subr.mxu0 0.0
    %2656 = vmatpush1.msra.mxu0 0.0
    %2657 = vmatprep.subr.mxu0 0.0
    %2658 = vmatpush1.msra.mxu0 0.0
    %2659 = vmatprep.subr.mxu0 0.0
    %2660 = vmatpush1.msra.mxu0 0.0
    %2661 = vmatprep.subr.mxu0 0.0
    %2662 = vmatpush1.msra.mxu0 0.0
    %2663 = vmatprep.subr.mxu0 0.0
    %2664 = vmatpush1.msra.mxu0 0.0
    %2665 = vmatprep.subr.mxu0 0.0
    %2666 = vmatpush1.msra.mxu0 0.0
    %2667 = vmatprep.subr.mxu0 0.0
    %2668 = vmatpush1.msra.mxu0 0.0
    %2669 = vmatprep.subr.mxu0 0.0
    %2670 = vmatpush1.msra.mxu0 0.0
    %2671 = vmatprep.subr.mxu0 0.0
    %2672 = vmatpush1.msra.mxu0 0.0
    %2673 = vmatprep.subr.mxu0 0.0
    %2674 = vmatpush1.msra.mxu0 0.0
    %2675 = vmatprep.mubr.f32.mxu0 0.0
    %2676 = vmatmul.mubr.f32.gmra.mrb[0].mxu0 %v2606
    %v2677 = vpop.f32.mrb[0].mxu0
    %v2678 = vadd.f32 0.0, %v2677
    %v2679 = vpop.f32.mrb[0].mxu0
    %2680 = vdwg.mxu0
    %v2681 = vadd.f32 %v2600, %v2678
    %v2682 = vld [vmem:[#allocation3 + $0x12] sm:$0x3]
    %s2683 = scalar_lea.vmem %s3, 144
    %v2684 = vld [vmem:[%s2683] sm:$0xff]
    %v2685 = vld [vmem:[%s2683 + $0x8] sm:$0x3]
    %v2687 = vsel %vm44, %v2682, 0
    %v2690 = vsel %vm90, %v2685, 0
    %2692 = vmatprep.subr.mxu0 0.0
    %2693 = vmatpush1.msra.mxu0 %v2684
    %2694 = vmatprep.subr.mxu0 0.0
    %2695 = vmatpush1.msra.mxu0 %v2690
    %2696 = vmatprep.subr.mxu0 0.0
    %2697 = vmatpush1.msra.mxu0 0.0
    %2698 = vmatprep.subr.mxu0 0.0
    %2699 = vmatpush1.msra.mxu0 0.0
    %2700 = vmatprep.subr.mxu0 0.0
    %2701 = vmatpush1.msra.mxu0 0.0
    %2702 = vmatprep.subr.mxu0 0.0
    %2703 = vmatpush1.msra.mxu0 0.0
    %2704 = vmatprep.subr.mxu0 0.0
    %2705 = vmatpush1.msra.mxu0 0.0
    %2706 = vmatprep.subr.mxu0 0.0
    %2707 = vmatpush1.msra.mxu0 0.0
    %2708 = vmatprep.subr.mxu0 0.0
    %2709 = vmatpush1.msra.mxu0 0.0
    %2710 = vmatprep.subr.mxu0 0.0
    %2711 = vmatpush1.msra.mxu0 0.0
    %2712 = vmatprep.subr.mxu0 0.0
    %2713 = vmatpush1.msra.mxu0 0.0
    %2714 = vmatprep.subr.mxu0 0.0
    %2715 = vmatpush1.msra.mxu0 0.0
    %2716 = vmatprep.subr.mxu0 0.0
    %2717 = vmatpush1.msra.mxu0 0.0
    %2718 = vmatprep.subr.mxu0 0.0
    %2719 = vmatpush1.msra.mxu0 0.0
    %2720 = vmatprep.subr.mxu0 0.0
    %2721 = vmatpush1.msra.mxu0 0.0
    %2722 = vmatprep.subr.mxu0 0.0
    %2723 = vmatpush1.msra.mxu0 0.0
    %2724 = vmatprep.subr.mxu0 0.0
    %2725 = vmatpush1.msra.mxu0 0.0
    %2726 = vmatprep.subr.mxu0 0.0
    %2727 = vmatpush1.msra.mxu0 0.0
    %2728 = vmatprep.subr.mxu0 0.0
    %2729 = vmatpush1.msra.mxu0 0.0
    %2730 = vmatprep.subr.mxu0 0.0
    %2731 = vmatpush1.msra.mxu0 0.0
    %2732 = vmatprep.subr.mxu0 0.0
    %2733 = vmatpush1.msra.mxu0 0.0
    %2734 = vmatprep.subr.mxu0 0.0
    %2735 = vmatpush1.msra.mxu0 0.0
    %2736 = vmatprep.subr.mxu0 0.0
    %2737 = vmatpush1.msra.mxu0 0.0
    %2738 = vmatprep.subr.mxu0 0.0
    %2739 = vmatpush1.msra.mxu0 0.0
    %2740 = vmatprep.subr.mxu0 0.0
    %2741 = vmatpush1.msra.mxu0 0.0
    %2742 = vmatprep.subr.mxu0 0.0
    %2743 = vmatpush1.msra.mxu0 0.0
    %2744 = vmatprep.subr.mxu0 0.0
    %2745 = vmatpush1.msra.mxu0 0.0
    %2746 = vmatprep.subr.mxu0 0.0
    %2747 = vmatpush1.msra.mxu0 0.0
    %2748 = vmatprep.subr.mxu0 0.0
    %2749 = vmatpush1.msra.mxu0 0.0
    %2750 = vmatprep.subr.mxu0 0.0
    %2751 = vmatpush1.msra.mxu0 0.0
    %2752 = vmatprep.subr.mxu0 0.0
    %2753 = vmatpush1.msra.mxu0 0.0
    %2754 = vmatprep.subr.mxu0 0.0
    %2755 = vmatpush1.msra.mxu0 0.0
    %2756 = vmatprep.mubr.f32.mxu0 0.0
    %2757 = vmatmul.mubr.f32.gmra.mrb[0].mxu0 %v2687
    %v2758 = vpop.f32.mrb[0].mxu0
    %v2759 = vadd.f32 0.0, %v2758
    %v2760 = vpop.f32.mrb[0].mxu0
    %2761 = vdwg.mxu0
    %v2762 = vadd.f32 %v2681, %v2759
    %v2763 = vld [vmem:[#allocation3 + $0x14] sm:$0x3]
    %s2764 = scalar_lea.vmem %s3, 160
    %v2765 = vld [vmem:[%s2764] sm:$0xff]
    %v2766 = vld [vmem:[%s2764 + $0x8] sm:$0x3]
    %v2768 = vsel %vm44, %v2763, 0
    %v2771 = vsel %vm90, %v2766, 0
    %2773 = vmatprep.subr.mxu0 0.0
    %2774 = vmatpush1.msra.mxu0 %v2765
    %2775 = vmatprep.subr.mxu0 0.0
    %2776 = vmatpush1.msra.mxu0 %v2771
    %2777 = vmatprep.subr.mxu0 0.0
    %2778 = vmatpush1.msra.mxu0 0.0
    %2779 = vmatprep.subr.mxu0 0.0
    %2780 = vmatpush1.msra.mxu0 0.0
    %2781 = vmatprep.subr.mxu0 0.0
    %2782 = vmatpush1.msra.mxu0 0.0
    %2783 = vmatprep.subr.mxu0 0.0
    %2784 = vmatpush1.msra.mxu0 0.0
    %2785 = vmatprep.subr.mxu0 0.0
    %2786 = vmatpush1.msra.mxu0 0.0
    %2787 = vmatprep.subr.mxu0 0.0
    %2788 = vmatpush1.msra.mxu0 0.0
    %2789 = vmatprep.subr.mxu0 0.0
    %2790 = vmatpush1.msra.mxu0 0.0
    %2791 = vmatprep.subr.mxu0 0.0
    %2792 = vmatpush1.msra.mxu0 0.0
    %2793 = vmatprep.subr.mxu0 0.0
    %2794 = vmatpush1.msra.mxu0 0.0
    %2795 = vmatprep.subr.mxu0 0.0
    %2796 = vmatpush1.msra.mxu0 0.0
    %2797 = vmatprep.subr.mxu0 0.0
    %2798 = vmatpush1.msra.mxu0 0.0
    %2799 = vmatprep.subr.mxu0 0.0
    %2800 = vmatpush1.msra.mxu0 0.0
    %2801 = vmatprep.subr.mxu0 0.0
    %2802 = vmatpush1.msra.mxu0 0.0
    %2803 = vmatprep.subr.mxu0 0.0
    %2804 = vmatpush1.msra.mxu0 0.0
    %2805 = vmatprep.subr.mxu0 0.0
    %2806 = vmatpush1.msra.mxu0 0.0
    %2807 = vmatprep.subr.mxu0 0.0
    %2808 = vmatpush1.msra.mxu0 0.0
    %2809 = vmatprep.subr.mxu0 0.0
    %2810 = vmatpush1.msra.mxu0 0.0
    %2811 = vmatprep.subr.mxu0 0.0
    %2812 = vmatpush1.msra.mxu0 0.0
    %2813 = vmatprep.subr.mxu0 0.0
    %2814 = vmatpush1.msra.mxu0 0.0
    %2815 = vmatprep.subr.mxu0 0.0
    %2816 = vmatpush1.msra.mxu0 0.0
    %2817 = vmatprep.subr.mxu0 0.0
    %2818 = vmatpush1.msra.mxu0 0.0
    %2819 = vmatprep.subr.mxu0 0.0
    %2820 = vmatpush1.msra.mxu0 0.0
    %2821 = vmatprep.subr.mxu0 0.0
    %2822 = vmatpush1.msra.mxu0 0.0
    %2823 = vmatprep.subr.mxu0 0.0
    %2824 = vmatpush1.msra.mxu0 0.0
    %2825 = vmatprep.subr.mxu0 0.0
    %2826 = vmatpush1.msra.mxu0 0.0
    %2827 = vmatprep.subr.mxu0 0.0
    %2828 = vmatpush1.msra.mxu0 0.0
    %2829 = vmatprep.subr.mxu0 0.0
    %2830 = vmatpush1.msra.mxu0 0.0
    %2831 = vmatprep.subr.mxu0 0.0
    %2832 = vmatpush1.msra.mxu0 0.0
    %2833 = vmatprep.subr.mxu0 0.0
    %2834 = vmatpush1.msra.mxu0 0.0
    %2835 = vmatprep.subr.mxu0 0.0
    %2836 = vmatpush1.msra.mxu0 0.0
    %2837 = vmatprep.mubr.f32.mxu0 0.0
    %2838 = vmatmul.mubr.f32.gmra.mrb[0].mxu0 %v2768
    %v2839 = vpop.f32.mrb[0].mxu0
    %v2840 = vadd.f32 0.0, %v2839
    %v2841 = vpop.f32.mrb[0].mxu0
    %2842 = vdwg.mxu0
    %v2843 = vadd.f32 %v2762, %v2840
    %v2844 = vld [vmem:[#allocation3 + $0x16] sm:$0x3]
    %s2845 = scalar_lea.vmem %s3, 176
    %v2846 = vld [vmem:[%s2845] sm:$0xff]
    %v2847 = vld [vmem:[%s2845 + $0x8] sm:$0x3]
    %v2849 = vsel %vm44, %v2844, 0
    %v2852 = vsel %vm90, %v2847, 0
    %2854 = vmatprep.subr.mxu0 0.0
    %2855 = vmatpush1.msra.mxu0 %v2846
    %2856 = vmatprep.subr.mxu0 0.0
    %2857 = vmatpush1.msra.mxu0 %v2852
    %2858 = vmatprep.subr.mxu0 0.0
    %2859 = vmatpush1.msra.mxu0 0.0
    %2860 = vmatprep.subr.mxu0 0.0
    %2861 = vmatpush1.msra.mxu0 0.0
    %2862 = vmatprep.subr.mxu0 0.0
    %2863 = vmatpush1.msra.mxu0 0.0
    %2864 = vmatprep.subr.mxu0 0.0
    %2865 = vmatpush1.msra.mxu0 0.0
    %2866 = vmatprep.subr.mxu0 0.0
    %2867 = vmatpush1.msra.mxu0 0.0
    %2868 = vmatprep.subr.mxu0 0.0
    %2869 = vmatpush1.msra.mxu0 0.0
    %2870 = vmatprep.subr.mxu0 0.0
    %2871 = vmatpush1.msra.mxu0 0.0
    %2872 = vmatprep.subr.mxu0 0.0
    %2873 = vmatpush1.msra.mxu0 0.0
    %2874 = vmatprep.subr.mxu0 0.0
    %2875 = vmatpush1.msra.mxu0 0.0
    %2876 = vmatprep.subr.mxu0 0.0
    %2877 = vmatpush1.msra.mxu0 0.0
    %2878 = vmatprep.subr.mxu0 0.0
    %2879 = vmatpush1.msra.mxu0 0.0
    %2880 = vmatprep.subr.mxu0 0.0
    %2881 = vmatpush1.msra.mxu0 0.0
    %2882 = vmatprep.subr.mxu0 0.0
    %2883 = vmatpush1.msra.mxu0 0.0
    %2884 = vmatprep.subr.mxu0 0.0
    %2885 = vmatpush1.msra.mxu0 0.0
    %2886 = vmatprep.subr.mxu0 0.0
    %2887 = vmatpush1.msra.mxu0 0.0
    %2888 = vmatprep.subr.mxu0 0.0
    %2889 = vmatpush1.msra.mxu0 0.0
    %2890 = vmatprep.subr.mxu0 0.0
    %2891 = vmatpush1.msra.mxu0 0.0
    %2892 = vmatprep.subr.mxu0 0.0
    %2893 = vmatpush1.msra.mxu0 0.0
    %2894 = vmatprep.subr.mxu0 0.0
    %2895 = vmatpush1.msra.mxu0 0.0
    %2896 = vmatprep.subr.mxu0 0.0
    %2897 = vmatpush1.msra.mxu0 0.0
    %2898 = vmatprep.subr.mxu0 0.0
    %2899 = vmatpush1.msra.mxu0 0.0
    %2900 = vmatprep.subr.mxu0 0.0
    %2901 = vmatpush1.msra.mxu0 0.0
    %2902 = vmatprep.subr.mxu0 0.0
    %2903 = vmatpush1.msra.mxu0 0.0
    %2904 = vmatprep.subr.mxu0 0.0
    %2905 = vmatpush1.msra.mxu0 0.0
    %2906 = vmatprep.subr.mxu0 0.0
    %2907 = vmatpush1.msra.mxu0 0.0
    %2908 = vmatprep.subr.mxu0 0.0
    %2909 = vmatpush1.msra.mxu0 0.0
    %2910 = vmatprep.subr.mxu0 0.0
    %2911 = vmatpush1.msra.mxu0 0.0
    %2912 = vmatprep.subr.mxu0 0.0
    %2913 = vmatpush1.msra.mxu0 0.0
    %2914 = vmatprep.subr.mxu0 0.0
    %2915 = vmatpush1.msra.mxu0 0.0
    %2916 = vmatprep.subr.mxu0 0.0
    %2917 = vmatpush1.msra.mxu0 0.0
    %2918 = vmatprep.mubr.f32.mxu0 0.0
    %2919 = vmatmul.mubr.f32.gmra.mrb[0].mxu0 %v2849
    %v2920 = vpop.f32.mrb[0].mxu0
    %v2921 = vadd.f32 0.0, %v2920
    %v2922 = vpop.f32.mrb[0].mxu0
    %2923 = vdwg.mxu0
    %v2924 = vadd.f32 %v2843, %v2921
    %v2925 = vld [vmem:[#allocation3 + $0x18] sm:$0x3]
    %s2926 = scalar_lea.vmem %s3, 192
    %v2927 = vld [vmem:[%s2926] sm:$0xff]
    %v2928 = vld [vmem:[%s2926 + $0x8] sm:$0x3]
    %v2930 = vsel %vm44, %v2925, 0
    %v2933 = vsel %vm90, %v2928, 0
    %2935 = vmatprep.subr.mxu0 0.0
    %2936 = vmatpush1.msra.mxu0 %v2927
    %2937 = vmatprep.subr.mxu0 0.0
    %2938 = vmatpush1.msra.mxu0 %v2933
    %2939 = vmatprep.subr.mxu0 0.0
    %2940 = vmatpush1.msra.mxu0 0.0
    %2941 = vmatprep.subr.mxu0 0.0
    %2942 = vmatpush1.msra.mxu0 0.0
    %2943 = vmatprep.subr.mxu0 0.0
    %2944 = vmatpush1.msra.mxu0 0.0
    %2945 = vmatprep.subr.mxu0 0.0
    %2946 = vmatpush1.msra.mxu0 0.0
    %2947 = vmatprep.subr.mxu0 0.0
    %2948 = vmatpush1.msra.mxu0 0.0
    %2949 = vmatprep.subr.mxu0 0.0
    %2950 = vmatpush1.msra.mxu0 0.0
    %2951 = vmatprep.subr.mxu0 0.0
    %2952 = vmatpush1.msra.mxu0 0.0
    %2953 = vmatprep.subr.mxu0 0.0
    %2954 = vmatpush1.msra.mxu0 0.0
    %2955 = vmatprep.subr.mxu0 0.0
    %2956 = vmatpush1.msra.mxu0 0.0
    %2957 = vmatprep.subr.mxu0 0.0
    %2958 = vmatpush1.msra.mxu0 0.0
    %2959 = vmatprep.subr.mxu0 0.0
    %2960 = vmatpush1.msra.mxu0 0.0
    %2961 = vmatprep.subr.mxu0 0.0
    %2962 = vmatpush1.msra.mxu0 0.0
    %2963 = vmatprep.subr.mxu0 0.0
    %2964 = vmatpush1.msra.mxu0 0.0
    %2965 = vmatprep.subr.mxu0 0.0
    %2966 = vmatpush1.msra.mxu0 0.0
    %2967 = vmatprep.subr.mxu0 0.0
    %2968 = vmatpush1.msra.mxu0 0.0
    %2969 = vmatprep.subr.mxu0 0.0
    %2970 = vmatpush1.msra.mxu0 0.0
    %2971 = vmatprep.subr.mxu0 0.0
    %2972 = vmatpush1.msra.mxu0 0.0
    %2973 = vmatprep.subr.mxu0 0.0
    %2974 = vmatpush1.msra.mxu0 0.0
    %2975 = vmatprep.subr.mxu0 0.0
    %2976 = vmatpush1.msra.mxu0 0.0
    %2977 = vmatprep.subr.mxu0 0.0
    %2978 = vmatpush1.msra.mxu0 0.0
    %2979 = vmatprep.subr.mxu0 0.0
    %2980 = vmatpush1.msra.mxu0 0.0
    %2981 = vmatprep.subr.mxu0 0.0
    %2982 = vmatpush1.msra.mxu0 0.0
    %2983 = vmatprep.subr.mxu0 0.0
    %2984 = vmatpush1.msra.mxu0 0.0
    %2985 = vmatprep.subr.mxu0 0.0
    %2986 = vmatpush1.msra.mxu0 0.0
    %2987 = vmatprep.subr.mxu0 0.0
    %2988 = vmatpush1.msra.mxu0 0.0
    %2989 = vmatprep.subr.mxu0 0.0
    %2990 = vmatpush1.msra.mxu0 0.0
    %2991 = vmatprep.subr.mxu0 0.0
    %2992 = vmatpush1.msra.mxu0 0.0
    %2993 = vmatprep.subr.mxu0 0.0
    %2994 = vmatpush1.msra.mxu0 0.0
    %2995 = vmatprep.subr.mxu0 0.0
    %2996 = vmatpush1.msra.mxu0 0.0
    %2997 = vmatprep.subr.mxu0 0.0
    %2998 = vmatpush1.msra.mxu0 0.0
    %2999 = vmatprep.mubr.f32.mxu0 0.0
    %3000 = vmatmul.mubr.f32.gmra.mrb[0].mxu0 %v2930
    %v3001 = vpop.f32.mrb[0].mxu0
    %v3002 = vadd.f32 0.0, %v3001
    %v3003 = vpop.f32.mrb[0].mxu0
    %3004 = vdwg.mxu0
    %v3005 = vadd.f32 %v2924, %v3002
    %v3006 = vld [vmem:[#allocation3 + $0x1a] sm:$0x3]
    %s3007 = scalar_lea.vmem %s3, 208
    %v3008 = vld [vmem:[%s3007] sm:$0xff]
    %v3009 = vld [vmem:[%s3007 + $0x8] sm:$0x3]
    %v3011 = vsel %vm44, %v3006, 0
    %v3014 = vsel %vm90, %v3009, 0
    %3016 = vmatprep.subr.mxu0 0.0
    %3017 = vmatpush1.msra.mxu0 %v3008
    %3018 = vmatprep.subr.mxu0 0.0
    %3019 = vmatpush1.msra.mxu0 %v3014
    %3020 = vmatprep.subr.mxu0 0.0
    %3021 = vmatpush1.msra.mxu0 0.0
    %3022 = vmatprep.subr.mxu0 0.0
    %3023 = vmatpush1.msra.mxu0 0.0
    %3024 = vmatprep.subr.mxu0 0.0
    %3025 = vmatpush1.msra.mxu0 0.0
    %3026 = vmatprep.subr.mxu0 0.0
    %3027 = vmatpush1.msra.mxu0 0.0
    %3028 = vmatprep.subr.mxu0 0.0
    %3029 = vmatpush1.msra.mxu0 0.0
    %3030 = vmatprep.subr.mxu0 0.0
    %3031 = vmatpush1.msra.mxu0 0.0
    %3032 = vmatprep.subr.mxu0 0.0
    %3033 = vmatpush1.msra.mxu0 0.0
    %3034 = vmatprep.subr.mxu0 0.0
    %3035 = vmatpush1.msra.mxu0 0.0
    %3036 = vmatprep.subr.mxu0 0.0
    %3037 = vmatpush1.msra.mxu0 0.0
    %3038 = vmatprep.subr.mxu0 0.0
    %3039 = vmatpush1.msra.mxu0 0.0
    %3040 = vmatprep.subr.mxu0 0.0
    %3041 = vmatpush1.msra.mxu0 0.0
    %3042 = vmatprep.subr.mxu0 0.0
    %3043 = vmatpush1.msra.mxu0 0.0
    %3044 = vmatprep.subr.mxu0 0.0
    %3045 = vmatpush1.msra.mxu0 0.0
    %3046 = vmatprep.subr.mxu0 0.0
    %3047 = vmatpush1.msra.mxu0 0.0
    %3048 = vmatprep.subr.mxu0 0.0
    %3049 = vmatpush1.msra.mxu0 0.0
    %3050 = vmatprep.subr.mxu0 0.0
    %3051 = vmatpush1.msra.mxu0 0.0
    %3052 = vmatprep.subr.mxu0 0.0
    %3053 = vmatpush1.msra.mxu0 0.0
    %3054 = vmatprep.subr.mxu0 0.0
    %3055 = vmatpush1.msra.mxu0 0.0
    %3056 = vmatprep.subr.mxu0 0.0
    %3057 = vmatpush1.msra.mxu0 0.0
    %3058 = vmatprep.subr.mxu0 0.0
    %3059 = vmatpush1.msra.mxu0 0.0
    %3060 = vmatprep.subr.mxu0 0.0
    %3061 = vmatpush1.msra.mxu0 0.0
    %3062 = vmatprep.subr.mxu0 0.0
    %3063 = vmatpush1.msra.mxu0 0.0
    %3064 = vmatprep.subr.mxu0 0.0
    %3065 = vmatpush1.msra.mxu0 0.0
    %3066 = vmatprep.subr.mxu0 0.0
    %3067 = vmatpush1.msra.mxu0 0.0
    %3068 = vmatprep.subr.mxu0 0.0
    %3069 = vmatpush1.msra.mxu0 0.0
    %3070 = vmatprep.subr.mxu0 0.0
    %3071 = vmatpush1.msra.mxu0 0.0
    %3072 = vmatprep.subr.mxu0 0.0
    %3073 = vmatpush1.msra.mxu0 0.0
    %3074 = vmatprep.subr.mxu0 0.0
    %3075 = vmatpush1.msra.mxu0 0.0
    %3076 = vmatprep.subr.mxu0 0.0
    %3077 = vmatpush1.msra.mxu0 0.0
    %3078 = vmatprep.subr.mxu0 0.0
    %3079 = vmatpush1.msra.mxu0 0.0
    %3080 = vmatprep.mubr.f32.mxu0 0.0
    %3081 = vmatmul.mubr.f32.gmra.mrb[0].mxu0 %v3011
    %v3082 = vpop.f32.mrb[0].mxu0
    %v3083 = vadd.f32 0.0, %v3082
    %v3084 = vpop.f32.mrb[0].mxu0
    %3085 = vdwg.mxu0
    %v3086 = vadd.f32 %v3005, %v3083
    %v3087 = vld [vmem:[#allocation3 + $0x1c] sm:$0x3]
    %s3088 = scalar_lea.vmem %s3, 224
    %v3089 = vld [vmem:[%s3088] sm:$0xff]
    %v3090 = vld [vmem:[%s3088 + $0x8] sm:$0x3]
    %v3092 = vsel %vm44, %v3087, 0
    %v3095 = vsel %vm90, %v3090, 0
    %3097 = vmatprep.subr.mxu0 0.0
    %3098 = vmatpush1.msra.mxu0 %v3089
    %3099 = vmatprep.subr.mxu0 0.0
    %3100 = vmatpush1.msra.mxu0 %v3095
    %3101 = vmatprep.subr.mxu0 0.0
    %3102 = vmatpush1.msra.mxu0 0.0
    %3103 = vmatprep.subr.mxu0 0.0
    %3104 = vmatpush1.msra.mxu0 0.0
    %3105 = vmatprep.subr.mxu0 0.0
    %3106 = vmatpush1.msra.mxu0 0.0
    %3107 = vmatprep.subr.mxu0 0.0
    %3108 = vmatpush1.msra.mxu0 0.0
    %3109 = vmatprep.subr.mxu0 0.0
    %3110 = vmatpush1.msra.mxu0 0.0
    %3111 = vmatprep.subr.mxu0 0.0
    %3112 = vmatpush1.msra.mxu0 0.0
    %3113 = vmatprep.subr.mxu0 0.0
    %3114 = vmatpush1.msra.mxu0 0.0
    %3115 = vmatprep.subr.mxu0 0.0
    %3116 = vmatpush1.msra.mxu0 0.0
    %3117 = vmatprep.subr.mxu0 0.0
    %3118 = vmatpush1.msra.mxu0 0.0
    %3119 = vmatprep.subr.mxu0 0.0
    %3120 = vmatpush1.msra.mxu0 0.0
    %3121 = vmatprep.subr.mxu0 0.0
    %3122 = vmatpush1.msra.mxu0 0.0
    %3123 = vmatprep.subr.mxu0 0.0
    %3124 = vmatpush1.msra.mxu0 0.0
    %3125 = vmatprep.subr.mxu0 0.0
    %3126 = vmatpush1.msra.mxu0 0.0
    %3127 = vmatprep.subr.mxu0 0.0
    %3128 = vmatpush1.msra.mxu0 0.0
    %3129 = vmatprep.subr.mxu0 0.0
    %3130 = vmatpush1.msra.mxu0 0.0
    %3131 = vmatprep.subr.mxu0 0.0
    %3132 = vmatpush1.msra.mxu0 0.0
    %3133 = vmatprep.subr.mxu0 0.0
    %3134 = vmatpush1.msra.mxu0 0.0
    %3135 = vmatprep.subr.mxu0 0.0
    %3136 = vmatpush1.msra.mxu0 0.0
    %3137 = vmatprep.subr.mxu0 0.0
    %3138 = vmatpush1.msra.mxu0 0.0
    %3139 = vmatprep.subr.mxu0 0.0
    %3140 = vmatpush1.msra.mxu0 0.0
    %3141 = vmatprep.subr.mxu0 0.0
    %3142 = vmatpush1.msra.mxu0 0.0
    %3143 = vmatprep.subr.mxu0 0.0
    %3144 = vmatpush1.msra.mxu0 0.0
    %3145 = vmatprep.subr.mxu0 0.0
    %3146 = vmatpush1.msra.mxu0 0.0
    %3147 = vmatprep.subr.mxu0 0.0
    %3148 = vmatpush1.msra.mxu0 0.0
    %3149 = vmatprep.subr.mxu0 0.0
    %3150 = vmatpush1.msra.mxu0 0.0
    %3151 = vmatprep.subr.mxu0 0.0
    %3152 = vmatpush1.msra.mxu0 0.0
    %3153 = vmatprep.subr.mxu0 0.0
    %3154 = vmatpush1.msra.mxu0 0.0
    %3155 = vmatprep.subr.mxu0 0.0
    %3156 = vmatpush1.msra.mxu0 0.0
    %3157 = vmatprep.subr.mxu0 0.0
    %3158 = vmatpush1.msra.mxu0 0.0
    %3159 = vmatprep.subr.mxu0 0.0
    %3160 = vmatpush1.msra.mxu0 0.0
    %3161 = vmatprep.mubr.f32.mxu0 0.0
    %3162 = vmatmul.mubr.f32.gmra.mrb[0].mxu0 %v3092
    %v3163 = vpop.f32.mrb[0].mxu0
    %v3164 = vadd.f32 0.0, %v3163
    %v3165 = vpop.f32.mrb[0].mxu0
    %3166 = vdwg.mxu0
    %v3167 = vadd.f32 %v3086, %v3164
    %v3168 = vld [vmem:[#allocation3 + $0x1e] sm:$0x3]
    %s3169 = scalar_lea.vmem %s3, 240
    %v3170 = vld [vmem:[%s3169] sm:$0xff]
    %v3171 = vld [vmem:[%s3169 + $0x8] sm:$0x3]
    %v3173 = vsel %vm44, %v3168, 0
    %v3176 = vsel %vm90, %v3171, 0
    %3178 = vmatprep.subr.mxu0 0.0
    %3179 = vmatpush1.msra.mxu0 %v3170
    %3180 = vmatprep.subr.mxu0 0.0
    %3181 = vmatpush1.msra.mxu0 %v3176
    %3182 = vmatprep.subr.mxu0 0.0
    %3183 = vmatpush1.msra.mxu0 0.0
    %3184 = vmatprep.subr.mxu0 0.0
    %3185 = vmatpush1.msra.mxu0 0.0
    %3186 = vmatprep.subr.mxu0 0.0
    %3187 = vmatpush1.msra.mxu0 0.0
    %3188 = vmatprep.subr.mxu0 0.0
    %3189 = vmatpush1.msra.mxu0 0.0
    %3190 = vmatprep.subr.mxu0 0.0
    %3191 = vmatpush1.msra.mxu0 0.0
    %3192 = vmatprep.subr.mxu0 0.0
    %3193 = vmatpush1.msra.mxu0 0.0
    %3194 = vmatprep.subr.mxu0 0.0
    %3195 = vmatpush1.msra.mxu0 0.0
    %3196 = vmatprep.subr.mxu0 0.0
    %3197 = vmatpush1.msra.mxu0 0.0
    %3198 = vmatprep.subr.mxu0 0.0
    %3199 = vmatpush1.msra.mxu0 0.0
    %3200 = vmatprep.subr.mxu0 0.0
    %3201 = vmatpush1.msra.mxu0 0.0
    %3202 = vmatprep.subr.mxu0 0.0
    %3203 = vmatpush1.msra.mxu0 0.0
    %3204 = vmatprep.subr.mxu0 0.0
    %3205 = vmatpush1.msra.mxu0 0.0
    %3206 = vmatprep.subr.mxu0 0.0
    %3207 = vmatpush1.msra.mxu0 0.0
    %3208 = vmatprep.subr.mxu0 0.0
    %3209 = vmatpush1.msra.mxu0 0.0
    %3210 = vmatprep.subr.mxu0 0.0
    %3211 = vmatpush1.msra.mxu0 0.0
    %3212 = vmatprep.subr.mxu0 0.0
    %3213 = vmatpush1.msra.mxu0 0.0
    %3214 = vmatprep.subr.mxu0 0.0
    %3215 = vmatpush1.msra.mxu0 0.0
    %3216 = vmatprep.subr.mxu0 0.0
    %3217 = vmatpush1.msra.mxu0 0.0
    %3218 = vmatprep.subr.mxu0 0.0
    %3219 = vmatpush1.msra.mxu0 0.0
    %3220 = vmatprep.subr.mxu0 0.0
    %3221 = vmatpush1.msra.mxu0 0.0
    %3222 = vmatprep.subr.mxu0 0.0
    %3223 = vmatpush1.msra.mxu0 0.0
    %3224 = vmatprep.subr.mxu0 0.0
    %3225 = vmatpush1.msra.mxu0 0.0
    %3226 = vmatprep.subr.mxu0 0.0
    %3227 = vmatpush1.msra.mxu0 0.0
    %3228 = vmatprep.subr.mxu0 0.0
    %3229 = vmatpush1.msra.mxu0 0.0
    %3230 = vmatprep.subr.mxu0 0.0
    %3231 = vmatpush1.msra.mxu0 0.0
    %3232 = vmatprep.subr.mxu0 0.0
    %3233 = vmatpush1.msra.mxu0 0.0
    %3234 = vmatprep.subr.mxu0 0.0
    %3235 = vmatpush1.msra.mxu0 0.0
    %3236 = vmatprep.subr.mxu0 0.0
    %3237 = vmatpush1.msra.mxu0 0.0
    %3238 = vmatprep.subr.mxu0 0.0
    %3239 = vmatpush1.msra.mxu0 0.0
    %3240 = vmatprep.subr.mxu0 0.0
    %3241 = vmatpush1.msra.mxu0 0.0
    %3242 = vmatprep.mubr.f32.mxu0 0.0
    %3243 = vmatmul.mubr.f32.gmra.mrb[0].mxu0 %v3173
    %v3244 = vpop.f32.mrb[0].mxu0
    %v3245 = vadd.f32 0.0, %v3244
    %v3246 = vpop.f32.mrb[0].mxu0
    %3247 = vdwg.mxu0
    %v3248 = vadd.f32 %v3167, %v3245
    %v3249 = vld [vmem:[#allocation3 + $0x20] sm:$0x3]
    %s3250 = scalar_lea.vmem %s3, 256
    %v3251 = vld [vmem:[%s3250] sm:$0xff]
    %v3252 = vld [vmem:[%s3250 + $0x8] sm:$0x3]
    %v3254 = vsel %vm44, %v3249, 0
    %v3257 = vsel %vm90, %v3252, 0
    %3259 = vmatprep.subr.mxu0 0.0
    %3260 = vmatpush1.msra.mxu0 %v3251
    %3261 = vmatprep.subr.mxu0 0.0
    %3262 = vmatpush1.msra.mxu0 %v3257
    %3263 = vmatprep.subr.mxu0 0.0
    %3264 = vmatpush1.msra.mxu0 0.0
    %3265 = vmatprep.subr.mxu0 0.0
    %3266 = vmatpush1.msra.mxu0 0.0
    %3267 = vmatprep.subr.mxu0 0.0
    %3268 = vmatpush1.msra.mxu0 0.0
    %3269 = vmatprep.subr.mxu0 0.0
    %3270 = vmatpush1.msra.mxu0 0.0
    %3271 = vmatprep.subr.mxu0 0.0
    %3272 = vmatpush1.msra.mxu0 0.0
    %3273 = vmatprep.subr.mxu0 0.0
    %3274 = vmatpush1.msra.mxu0 0.0
    %3275 = vmatprep.subr.mxu0 0.0
    %3276 = vmatpush1.msra.mxu0 0.0
    %3277 = vmatprep.subr.mxu0 0.0
    %3278 = vmatpush1.msra.mxu0 0.0
    %3279 = vmatprep.subr.mxu0 0.0
    %3280 = vmatpush1.msra.mxu0 0.0
    %3281 = vmatprep.subr.mxu0 0.0
    %3282 = vmatpush1.msra.mxu0 0.0
    %3283 = vmatprep.subr.mxu0 0.0
    %3284 = vmatpush1.msra.mxu0 0.0
    %3285 = vmatprep.subr.mxu0 0.0
    %3286 = vmatpush1.msra.mxu0 0.0
    %3287 = vmatprep.subr.mxu0 0.0
    %3288 = vmatpush1.msra.mxu0 0.0
    %3289 = vmatprep.subr.mxu0 0.0
    %3290 = vmatpush1.msra.mxu0 0.0
    %3291 = vmatprep.subr.mxu0 0.0
    %3292 = vmatpush1.msra.mxu0 0.0
    %3293 = vmatprep.subr.mxu0 0.0
    %3294 = vmatpush1.msra.mxu0 0.0
    %3295 = vmatprep.subr.mxu0 0.0
    %3296 = vmatpush1.msra.mxu0 0.0
    %3297 = vmatprep.subr.mxu0 0.0
    %3298 = vmatpush1.msra.mxu0 0.0
    %3299 = vmatprep.subr.mxu0 0.0
    %3300 = vmatpush1.msra.mxu0 0.0
    %3301 = vmatprep.subr.mxu0 0.0
    %3302 = vmatpush1.msra.mxu0 0.0
    %3303 = vmatprep.subr.mxu0 0.0
    %3304 = vmatpush1.msra.mxu0 0.0
    %3305 = vmatprep.subr.mxu0 0.0
    %3306 = vmatpush1.msra.mxu0 0.0
    %3307 = vmatprep.subr.mxu0 0.0
    %3308 = vmatpush1.msra.mxu0 0.0
    %3309 = vmatprep.subr.mxu0 0.0
    %3310 = vmatpush1.msra.mxu0 0.0
    %3311 = vmatprep.subr.mxu0 0.0
    %3312 = vmatpush1.msra.mxu0 0.0
    %3313 = vmatprep.subr.mxu0 0.0
    %3314 = vmatpush1.msra.mxu0 0.0
    %3315 = vmatprep.subr.mxu0 0.0
    %3316 = vmatpush1.msra.mxu0 0.0
    %3317 = vmatprep.subr.mxu0 0.0
    %3318 = vmatpush1.msra.mxu0 0.0
    %3319 = vmatprep.subr.mxu0 0.0
    %3320 = vmatpush1.msra.mxu0 0.0
    %3321 = vmatprep.subr.mxu0 0.0
    %3322 = vmatpush1.msra.mxu0 0.0
    %3323 = vmatprep.mubr.f32.mxu0 0.0
    %3324 = vmatmul.mubr.f32.gmra.mrb[0].mxu0 %v3254
    %v3325 = vpop.f32.mrb[0].mxu0
    %v3326 = vadd.f32 0.0, %v3325
    %v3327 = vpop.f32.mrb[0].mxu0
    %3328 = vdwg.mxu0
    %v3329 = vadd.f32 %v3248, %v3326
    %v3330 = vld [vmem:[#allocation3 + $0x22] sm:$0x3]
    %s3331 = scalar_lea.vmem %s3, 272
    %v3332 = vld [vmem:[%s3331] sm:$0xff]
    %v3333 = vld [vmem:[%s3331 + $0x8] sm:$0x3]
    %v3335 = vsel %vm44, %v3330, 0
    %v3338 = vsel %vm90, %v3333, 0
    %3340 = vmatprep.subr.mxu0 0.0
    %3341 = vmatpush1.msra.mxu0 %v3332
    %3342 = vmatprep.subr.mxu0 0.0
    %3343 = vmatpush1.msra.mxu0 %v3338
    %3344 = vmatprep.subr.mxu0 0.0
    %3345 = vmatpush1.msra.mxu0 0.0
    %3346 = vmatprep.subr.mxu0 0.0
    %3347 = vmatpush1.msra.mxu0 0.0
    %3348 = vmatprep.subr.mxu0 0.0
    %3349 = vmatpush1.msra.mxu0 0.0
    %3350 = vmatprep.subr.mxu0 0.0
    %3351 = vmatpush1.msra.mxu0 0.0
    %3352 = vmatprep.subr.mxu0 0.0
    %3353 = vmatpush1.msra.mxu0 0.0
    %3354 = vmatprep.subr.mxu0 0.0
    %3355 = vmatpush1.msra.mxu0 0.0
    %3356 = vmatprep.subr.mxu0 0.0
    %3357 = vmatpush1.msra.mxu0 0.0
    %3358 = vmatprep.subr.mxu0 0.0
    %3359 = vmatpush1.msra.mxu0 0.0
    %3360 = vmatprep.subr.mxu0 0.0
    %3361 = vmatpush1.msra.mxu0 0.0
    %3362 = vmatprep.subr.mxu0 0.0
    %3363 = vmatpush1.msra.mxu0 0.0
    %3364 = vmatprep.subr.mxu0 0.0
    %3365 = vmatpush1.msra.mxu0 0.0
    %3366 = vmatprep.subr.mxu0 0.0
    %3367 = vmatpush1.msra.mxu0 0.0
    %3368 = vmatprep.subr.mxu0 0.0
    %3369 = vmatpush1.msra.mxu0 0.0
    %3370 = vmatprep.subr.mxu0 0.0
    %3371 = vmatpush1.msra.mxu0 0.0
    %3372 = vmatprep.subr.mxu0 0.0
    %3373 = vmatpush1.msra.mxu0 0.0
    %3374 = vmatprep.subr.mxu0 0.0
    %3375 = vmatpush1.msra.mxu0 0.0
    %3376 = vmatprep.subr.mxu0 0.0
    %3377 = vmatpush1.msra.mxu0 0.0
    %3378 = vmatprep.subr.mxu0 0.0
    %3379 = vmatpush1.msra.mxu0 0.0
    %3380 = vmatprep.subr.mxu0 0.0
    %3381 = vmatpush1.msra.mxu0 0.0
    %3382 = vmatprep.subr.mxu0 0.0
    %3383 = vmatpush1.msra.mxu0 0.0
    %3384 = vmatprep.subr.mxu0 0.0
    %3385 = vmatpush1.msra.mxu0 0.0
    %3386 = vmatprep.subr.mxu0 0.0
    %3387 = vmatpush1.msra.mxu0 0.0
    %3388 = vmatprep.subr.mxu0 0.0
    %3389 = vmatpush1.msra.mxu0 0.0
    %3390 = vmatprep.subr.mxu0 0.0
    %3391 = vmatpush1.msra.mxu0 0.0
    %3392 = vmatprep.subr.mxu0 0.0
    %3393 = vmatpush1.msra.mxu0 0.0
    %3394 = vmatprep.subr.mxu0 0.0
    %3395 = vmatpush1.msra.mxu0 0.0
    %3396 = vmatprep.subr.mxu0 0.0
    %3397 = vmatpush1.msra.mxu0 0.0
    %3398 = vmatprep.subr.mxu0 0.0
    %3399 = vmatpush1.msra.mxu0 0.0
    %3400 = vmatprep.subr.mxu0 0.0
    %3401 = vmatpush1.msra.mxu0 0.0
    %3402 = vmatprep.subr.mxu0 0.0
    %3403 = vmatpush1.msra.mxu0 0.0
    %3404 = vmatprep.mubr.f32.mxu0 0.0
    %3405 = vmatmul.mubr.f32.gmra.mrb[0].mxu0 %v3335
    %v3406 = vpop.f32.mrb[0].mxu0
    %v3407 = vadd.f32 0.0, %v3406
    %v3408 = vpop.f32.mrb[0].mxu0
    %3409 = vdwg.mxu0
    %v3410 = vadd.f32 %v3329, %v3407
    %v3411 = vld [vmem:[#allocation3 + $0x24] sm:$0x3]
    %s3412 = scalar_lea.vmem %s3, 288
    %v3413 = vld [vmem:[%s3412] sm:$0xff]
    %v3414 = vld [vmem:[%s3412 + $0x8] sm:$0x3]
    %v3416 = vsel %vm44, %v3411, 0
    %v3419 = vsel %vm90, %v3414, 0
    %3421 = vmatprep.subr.mxu0 0.0
    %3422 = vmatpush1.msra.mxu0 %v3413
    %3423 = vmatprep.subr.mxu0 0.0
    %3424 = vmatpush1.msra.mxu0 %v3419
    %3425 = vmatprep.subr.mxu0 0.0
    %3426 = vmatpush1.msra.mxu0 0.0
    %3427 = vmatprep.subr.mxu0 0.0
    %3428 = vmatpush1.msra.mxu0 0.0
    %3429 = vmatprep.subr.mxu0 0.0
    %3430 = vmatpush1.msra.mxu0 0.0
    %3431 = vmatprep.subr.mxu0 0.0
    %3432 = vmatpush1.msra.mxu0 0.0
    %3433 = vmatprep.subr.mxu0 0.0
    %3434 = vmatpush1.msra.mxu0 0.0
    %3435 = vmatprep.subr.mxu0 0.0
    %3436 = vmatpush1.msra.mxu0 0.0
    %3437 = vmatprep.subr.mxu0 0.0
    %3438 = vmatpush1.msra.mxu0 0.0
    %3439 = vmatprep.subr.mxu0 0.0
    %3440 = vmatpush1.msra.mxu0 0.0
    %3441 = vmatprep.subr.mxu0 0.0
    %3442 = vmatpush1.msra.mxu0 0.0
    %3443 = vmatprep.subr.mxu0 0.0
    %3444 = vmatpush1.msra.mxu0 0.0
    %3445 = vmatprep.subr.mxu0 0.0
    %3446 = vmatpush1.msra.mxu0 0.0
    %3447 = vmatprep.subr.mxu0 0.0
    %3448 = vmatpush1.msra.mxu0 0.0
    %3449 = vmatprep.subr.mxu0 0.0
    %3450 = vmatpush1.msra.mxu0 0.0
    %3451 = vmatprep.subr.mxu0 0.0
    %3452 = vmatpush1.msra.mxu0 0.0
    %3453 = vmatprep.subr.mxu0 0.0
    %3454 = vmatpush1.msra.mxu0 0.0
    %3455 = vmatprep.subr.mxu0 0.0
    %3456 = vmatpush1.msra.mxu0 0.0
    %3457 = vmatprep.subr.mxu0 0.0
    %3458 = vmatpush1.msra.mxu0 0.0
    %3459 = vmatprep.subr.mxu0 0.0
    %3460 = vmatpush1.msra.mxu0 0.0
    %3461 = vmatprep.subr.mxu0 0.0
    %3462 = vmatpush1.msra.mxu0 0.0
    %3463 = vmatprep.subr.mxu0 0.0
    %3464 = vmatpush1.msra.mxu0 0.0
    %3465 = vmatprep.subr.mxu0 0.0
    %3466 = vmatpush1.msra.mxu0 0.0
    %3467 = vmatprep.subr.mxu0 0.0
    %3468 = vmatpush1.msra.mxu0 0.0
    %3469 = vmatprep.subr.mxu0 0.0
    %3470 = vmatpush1.msra.mxu0 0.0
    %3471 = vmatprep.subr.mxu0 0.0
    %3472 = vmatpush1.msra.mxu0 0.0
    %3473 = vmatprep.subr.mxu0 0.0
    %3474 = vmatpush1.msra.mxu0 0.0
    %3475 = vmatprep.subr.mxu0 0.0
    %3476 = vmatpush1.msra.mxu0 0.0
    %3477 = vmatprep.subr.mxu0 0.0
    %3478 = vmatpush1.msra.mxu0 0.0
    %3479 = vmatprep.subr.mxu0 0.0
    %3480 = vmatpush1.msra.mxu0 0.0
    %3481 = vmatprep.subr.mxu0 0.0
    %3482 = vmatpush1.msra.mxu0 0.0
    %3483 = vmatprep.subr.mxu0 0.0
    %3484 = vmatpush1.msra.mxu0 0.0
    %3485 = vmatprep.mubr.f32.mxu0 0.0
    %3486 = vmatmul.mubr.f32.gmra.mrb[0].mxu0 %v3416
    %v3487 = vpop.f32.mrb[0].mxu0
    %v3488 = vadd.f32 0.0, %v3487
    %v3489 = vpop.f32.mrb[0].mxu0
    %3490 = vdwg.mxu0
    %v3491 = vadd.f32 %v3410, %v3488
    %v3492 = vld [vmem:[#allocation3 + $0x26] sm:$0x3]
    %s3493 = scalar_lea.vmem %s3, 304
    %v3494 = vld [vmem:[%s3493] sm:$0xff]
    %v3495 = vld [vmem:[%s3493 + $0x8] sm:$0x3]
    %v3497 = vsel %vm44, %v3492, 0
    %v3500 = vsel %vm90, %v3495, 0
    %3502 = vmatprep.subr.mxu0 0.0
    %3503 = vmatpush1.msra.mxu0 %v3494
    %3504 = vmatprep.subr.mxu0 0.0
    %3505 = vmatpush1.msra.mxu0 %v3500
    %3506 = vmatprep.subr.mxu0 0.0
    %3507 = vmatpush1.msra.mxu0 0.0
    %3508 = vmatprep.subr.mxu0 0.0
    %3509 = vmatpush1.msra.mxu0 0.0
    %3510 = vmatprep.subr.mxu0 0.0
    %3511 = vmatpush1.msra.mxu0 0.0
    %3512 = vmatprep.subr.mxu0 0.0
    %3513 = vmatpush1.msra.mxu0 0.0
    %3514 = vmatprep.subr.mxu0 0.0
    %3515 = vmatpush1.msra.mxu0 0.0
    %3516 = vmatprep.subr.mxu0 0.0
    %3517 = vmatpush1.msra.mxu0 0.0
    %3518 = vmatprep.subr.mxu0 0.0
    %3519 = vmatpush1.msra.mxu0 0.0
    %3520 = vmatprep.subr.mxu0 0.0
    %3521 = vmatpush1.msra.mxu0 0.0
    %3522 = vmatprep.subr.mxu0 0.0
    %3523 = vmatpush1.msra.mxu0 0.0
    %3524 = vmatprep.subr.mxu0 0.0
    %3525 = vmatpush1.msra.mxu0 0.0
    %3526 = vmatprep.subr.mxu0 0.0
    %3527 = vmatpush1.msra.mxu0 0.0
    %3528 = vmatprep.subr.mxu0 0.0
    %3529 = vmatpush1.msra.mxu0 0.0
    %3530 = vmatprep.subr.mxu0 0.0
    %3531 = vmatpush1.msra.mxu0 0.0
    %3532 = vmatprep.subr.mxu0 0.0
    %3533 = vmatpush1.msra.mxu0 0.0
    %3534 = vmatprep.subr.mxu0 0.0
    %3535 = vmatpush1.msra.mxu0 0.0
    %3536 = vmatprep.subr.mxu0 0.0
    %3537 = vmatpush1.msra.mxu0 0.0
    %3538 = vmatprep.subr.mxu0 0.0
    %3539 = vmatpush1.msra.mxu0 0.0
    %3540 = vmatprep.subr.mxu0 0.0
    %3541 = vmatpush1.msra.mxu0 0.0
    %3542 = vmatprep.subr.mxu0 0.0
    %3543 = vmatpush1.msra.mxu0 0.0
    %3544 = vmatprep.subr.mxu0 0.0
    %3545 = vmatpush1.msra.mxu0 0.0
    %3546 = vmatprep.subr.mxu0 0.0
    %3547 = vmatpush1.msra.mxu0 0.0
    %3548 = vmatprep.subr.mxu0 0.0
    %3549 = vmatpush1.msra.mxu0 0.0
    %3550 = vmatprep.subr.mxu0 0.0
    %3551 = vmatpush1.msra.mxu0 0.0
    %3552 = vmatprep.subr.mxu0 0.0
    %3553 = vmatpush1.msra.mxu0 0.0
    %3554 = vmatprep.subr.mxu0 0.0
    %3555 = vmatpush1.msra.mxu0 0.0
    %3556 = vmatprep.subr.mxu0 0.0
    %3557 = vmatpush1.msra.mxu0 0.0
    %3558 = vmatprep.subr.mxu0 0.0
    %3559 = vmatpush1.msra.mxu0 0.0
    %3560 = vmatprep.subr.mxu0 0.0
    %3561 = vmatpush1.msra.mxu0 0.0
    %3562 = vmatprep.subr.mxu0 0.0
    %3563 = vmatpush1.msra.mxu0 0.0
    %3564 = vmatprep.subr.mxu0 0.0
    %3565 = vmatpush1.msra.mxu0 0.0
    %3566 = vmatprep.mubr.f32.mxu0 0.0
    %3567 = vmatmul.mubr.f32.gmra.mrb[0].mxu0 %v3497
    %v3568 = vpop.f32.mrb[0].mxu0
    %v3569 = vadd.f32 0.0, %v3568
    %v3570 = vpop.f32.mrb[0].mxu0
    %3571 = vdwg.mxu0
    %v3572 = vadd.f32 %v3491, %v3569
    %v3573 = vld [vmem:[#allocation3 + $0x28] sm:$0x3]
    %s3574 = scalar_lea.vmem %s3, 320
    %v3575 = vld [vmem:[%s3574] sm:$0xff]
    %v3576 = vld [vmem:[%s3574 + $0x8] sm:$0x3]
    %v3578 = vsel %vm44, %v3573, 0
    %v3581 = vsel %vm90, %v3576, 0
    %3583 = vmatprep.subr.mxu0 0.0
    %3584 = vmatpush1.msra.mxu0 %v3575
    %3585 = vmatprep.subr.mxu0 0.0
    %3586 = vmatpush1.msra.mxu0 %v3581
    %3587 = vmatprep.subr.mxu0 0.0
    %3588 = vmatpush1.msra.mxu0 0.0
    %3589 = vmatprep.subr.mxu0 0.0
    %3590 = vmatpush1.msra.mxu0 0.0
    %3591 = vmatprep.subr.mxu0 0.0
    %3592 = vmatpush1.msra.mxu0 0.0
    %3593 = vmatprep.subr.mxu0 0.0
    %3594 = vmatpush1.msra.mxu0 0.0
    %3595 = vmatprep.subr.mxu0 0.0
    %3596 = vmatpush1.msra.mxu0 0.0
    %3597 = vmatprep.subr.mxu0 0.0
    %3598 = vmatpush1.msra.mxu0 0.0
    %3599 = vmatprep.subr.mxu0 0.0
    %3600 = vmatpush1.msra.mxu0 0.0
    %3601 = vmatprep.subr.mxu0 0.0
    %3602 = vmatpush1.msra.mxu0 0.0
    %3603 = vmatprep.subr.mxu0 0.0
    %3604 = vmatpush1.msra.mxu0 0.0
    %3605 = vmatprep.subr.mxu0 0.0
    %3606 = vmatpush1.msra.mxu0 0.0
    %3607 = vmatprep.subr.mxu0 0.0
    %3608 = vmatpush1.msra.mxu0 0.0
    %3609 = vmatprep.subr.mxu0 0.0
    %3610 = vmatpush1.msra.mxu0 0.0
    %3611 = vmatprep.subr.mxu0 0.0
    %3612 = vmatpush1.msra.mxu0 0.0
    %3613 = vmatprep.subr.mxu0 0.0
    %3614 = vmatpush1.msra.mxu0 0.0
    %3615 = vmatprep.subr.mxu0 0.0
    %3616 = vmatpush1.msra.mxu0 0.0
    %3617 = vmatprep.subr.mxu0 0.0
    %3618 = vmatpush1.msra.mxu0 0.0
    %3619 = vmatprep.subr.mxu0 0.0
    %3620 = vmatpush1.msra.mxu0 0.0
    %3621 = vmatprep.subr.mxu0 0.0
    %3622 = vmatpush1.msra.mxu0 0.0
    %3623 = vmatprep.subr.mxu0 0.0
    %3624 = vmatpush1.msra.mxu0 0.0
    %3625 = vmatprep.subr.mxu0 0.0
    %3626 = vmatpush1.msra.mxu0 0.0
    %3627 = vmatprep.subr.mxu0 0.0
    %3628 = vmatpush1.msra.mxu0 0.0
    %3629 = vmatprep.subr.mxu0 0.0
    %3630 = vmatpush1.msra.mxu0 0.0
    %3631 = vmatprep.subr.mxu0 0.0
    %3632 = vmatpush1.msra.mxu0 0.0
    %3633 = vmatprep.subr.mxu0 0.0
    %3634 = vmatpush1.msra.mxu0 0.0
    %3635 = vmatprep.subr.mxu0 0.0
    %3636 = vmatpush1.msra.mxu0 0.0
    %3637 = vmatprep.subr.mxu0 0.0
    %3638 = vmatpush1.msra.mxu0 0.0
    %3639 = vmatprep.subr.mxu0 0.0
    %3640 = vmatpush1.msra.mxu0 0.0
    %3641 = vmatprep.subr.mxu0 0.0
    %3642 = vmatpush1.msra.mxu0 0.0
    %3643 = vmatprep.subr.mxu0 0.0
    %3644 = vmatpush1.msra.mxu0 0.0
    %3645 = vmatprep.subr.mxu0 0.0
    %3646 = vmatpush1.msra.mxu0 0.0
    %3647 = vmatprep.mubr.f32.mxu0 0.0
    %3648 = vmatmul.mubr.f32.gmra.mrb[0].mxu0 %v3578
    %v3649 = vpop.f32.mrb[0].mxu0
    %v3650 = vadd.f32 0.0, %v3649
    %v3651 = vpop.f32.mrb[0].mxu0
    %3652 = vdwg.mxu0
    %v3653 = vadd.f32 %v3572, %v3650
    %v3654 = vld [vmem:[#allocation3 + $0x2a] sm:$0x3]
    %s3655 = scalar_lea.vmem %s3, 336
    %v3656 = vld [vmem:[%s3655] sm:$0xff]
    %v3657 = vld [vmem:[%s3655 + $0x8] sm:$0x3]
    %v3659 = vsel %vm44, %v3654, 0
    %v3662 = vsel %vm90, %v3657, 0
    %3664 = vmatprep.subr.mxu0 0.0
    %3665 = vmatpush1.msra.mxu0 %v3656
    %3666 = vmatprep.subr.mxu0 0.0
    %3667 = vmatpush1.msra.mxu0 %v3662
    %3668 = vmatprep.subr.mxu0 0.0
    %3669 = vmatpush1.msra.mxu0 0.0
    %3670 = vmatprep.subr.mxu0 0.0
    %3671 = vmatpush1.msra.mxu0 0.0
    %3672 = vmatprep.subr.mxu0 0.0
    %3673 = vmatpush1.msra.mxu0 0.0
    %3674 = vmatprep.subr.mxu0 0.0
    %3675 = vmatpush1.msra.mxu0 0.0
    %3676 = vmatprep.subr.mxu0 0.0
    %3677 = vmatpush1.msra.mxu0 0.0
    %3678 = vmatprep.subr.mxu0 0.0
    %3679 = vmatpush1.msra.mxu0 0.0
    %3680 = vmatprep.subr.mxu0 0.0
    %3681 = vmatpush1.msra.mxu0 0.0
    %3682 = vmatprep.subr.mxu0 0.0
    %3683 = vmatpush1.msra.mxu0 0.0
    %3684 = vmatprep.subr.mxu0 0.0
    %3685 = vmatpush1.msra.mxu0 0.0
    %3686 = vmatprep.subr.mxu0 0.0
    %3687 = vmatpush1.msra.mxu0 0.0
    %3688 = vmatprep.subr.mxu0 0.0
    %3689 = vmatpush1.msra.mxu0 0.0
    %3690 = vmatprep.subr.mxu0 0.0
    %3691 = vmatpush1.msra.mxu0 0.0
    %3692 = vmatprep.subr.mxu0 0.0
    %3693 = vmatpush1.msra.mxu0 0.0
    %3694 = vmatprep.subr.mxu0 0.0
    %3695 = vmatpush1.msra.mxu0 0.0
    %3696 = vmatprep.subr.mxu0 0.0
    %3697 = vmatpush1.msra.mxu0 0.0
    %3698 = vmatprep.subr.mxu0 0.0
    %3699 = vmatpush1.msra.mxu0 0.0
    %3700 = vmatprep.subr.mxu0 0.0
    %3701 = vmatpush1.msra.mxu0 0.0
    %3702 = vmatprep.subr.mxu0 0.0
    %3703 = vmatpush1.msra.mxu0 0.0
    %3704 = vmatprep.subr.mxu0 0.0
    %3705 = vmatpush1.msra.mxu0 0.0
    %3706 = vmatprep.subr.mxu0 0.0
    %3707 = vmatpush1.msra.mxu0 0.0
    %3708 = vmatprep.subr.mxu0 0.0
    %3709 = vmatpush1.msra.mxu0 0.0
    %3710 = vmatprep.subr.mxu0 0.0
    %3711 = vmatpush1.msra.mxu0 0.0
    %3712 = vmatprep.subr.mxu0 0.0
    %3713 = vmatpush1.msra.mxu0 0.0
    %3714 = vmatprep.subr.mxu0 0.0
    %3715 = vmatpush1.msra.mxu0 0.0
    %3716 = vmatprep.subr.mxu0 0.0
    %3717 = vmatpush1.msra.mxu0 0.0
    %3718 = vmatprep.subr.mxu0 0.0
    %3719 = vmatpush1.msra.mxu0 0.0
    %3720 = vmatprep.subr.mxu0 0.0
    %3721 = vmatpush1.msra.mxu0 0.0
    %3722 = vmatprep.subr.mxu0 0.0
    %3723 = vmatpush1.msra.mxu0 0.0
    %3724 = vmatprep.subr.mxu0 0.0
    %3725 = vmatpush1.msra.mxu0 0.0
    %3726 = vmatprep.subr.mxu0 0.0
    %3727 = vmatpush1.msra.mxu0 0.0
    %3728 = vmatprep.mubr.f32.mxu0 0.0
    %3729 = vmatmul.mubr.f32.gmra.mrb[0].mxu0 %v3659
    %v3730 = vpop.f32.mrb[0].mxu0
    %v3731 = vadd.f32 0.0, %v3730
    %v3732 = vpop.f32.mrb[0].mxu0
    %3733 = vdwg.mxu0
    %v3734 = vadd.f32 %v3653, %v3731
    %v3735 = vld [vmem:[#allocation3 + $0x2c] sm:$0x3]
    %s3736 = scalar_lea.vmem %s3, 352
    %v3737 = vld [vmem:[%s3736] sm:$0xff]
    %v3738 = vld [vmem:[%s3736 + $0x8] sm:$0x3]
    %v3740 = vsel %vm44, %v3735, 0
    %v3743 = vsel %vm90, %v3738, 0
    %3745 = vmatprep.subr.mxu0 0.0
    %3746 = vmatpush1.msra.mxu0 %v3737
    %3747 = vmatprep.subr.mxu0 0.0
    %3748 = vmatpush1.msra.mxu0 %v3743
    %3749 = vmatprep.subr.mxu0 0.0
    %3750 = vmatpush1.msra.mxu0 0.0
    %3751 = vmatprep.subr.mxu0 0.0
    %3752 = vmatpush1.msra.mxu0 0.0
    %3753 = vmatprep.subr.mxu0 0.0
    %3754 = vmatpush1.msra.mxu0 0.0
    %3755 = vmatprep.subr.mxu0 0.0
    %3756 = vmatpush1.msra.mxu0 0.0
    %3757 = vmatprep.subr.mxu0 0.0
    %3758 = vmatpush1.msra.mxu0 0.0
    %3759 = vmatprep.subr.mxu0 0.0
    %3760 = vmatpush1.msra.mxu0 0.0
    %3761 = vmatprep.subr.mxu0 0.0
    %3762 = vmatpush1.msra.mxu0 0.0
    %3763 = vmatprep.subr.mxu0 0.0
    %3764 = vmatpush1.msra.mxu0 0.0
    %3765 = vmatprep.subr.mxu0 0.0
    %3766 = vmatpush1.msra.mxu0 0.0
    %3767 = vmatprep.subr.mxu0 0.0
    %3768 = vmatpush1.msra.mxu0 0.0
    %3769 = vmatprep.subr.mxu0 0.0
    %3770 = vmatpush1.msra.mxu0 0.0
    %3771 = vmatprep.subr.mxu0 0.0
    %3772 = vmatpush1.msra.mxu0 0.0
    %3773 = vmatprep.subr.mxu0 0.0
    %3774 = vmatpush1.msra.mxu0 0.0
    %3775 = vmatprep.subr.mxu0 0.0
    %3776 = vmatpush1.msra.mxu0 0.0
    %3777 = vmatprep.subr.mxu0 0.0
    %3778 = vmatpush1.msra.mxu0 0.0
    %3779 = vmatprep.subr.mxu0 0.0
    %3780 = vmatpush1.msra.mxu0 0.0
    %3781 = vmatprep.subr.mxu0 0.0
    %3782 = vmatpush1.msra.mxu0 0.0
    %3783 = vmatprep.subr.mxu0 0.0
    %3784 = vmatpush1.msra.mxu0 0.0
    %3785 = vmatprep.subr.mxu0 0.0
    %3786 = vmatpush1.msra.mxu0 0.0
    %3787 = vmatprep.subr.mxu0 0.0
    %3788 = vmatpush1.msra.mxu0 0.0
    %3789 = vmatprep.subr.mxu0 0.0
    %3790 = vmatpush1.msra.mxu0 0.0
    %3791 = vmatprep.subr.mxu0 0.0
    %3792 = vmatpush1.msra.mxu0 0.0
    %3793 = vmatprep.subr.mxu0 0.0
    %3794 = vmatpush1.msra.mxu0 0.0
    %3795 = vmatprep.subr.mxu0 0.0
    %3796 = vmatpush1.msra.mxu0 0.0
    %3797 = vmatprep.subr.mxu0 0.0
    %3798 = vmatpush1.msra.mxu0 0.0
    %3799 = vmatprep.subr.mxu0 0.0
    %3800 = vmatpush1.msra.mxu0 0.0
    %3801 = vmatprep.subr.mxu0 0.0
    %3802 = vmatpush1.msra.mxu0 0.0
    %3803 = vmatprep.subr.mxu0 0.0
    %3804 = vmatpush1.msra.mxu0 0.0
    %3805 = vmatprep.subr.mxu0 0.0
    %3806 = vmatpush1.msra.mxu0 0.0
    %3807 = vmatprep.subr.mxu0 0.0
    %3808 = vmatpush1.msra.mxu0 0.0
    %3809 = vmatprep.mubr.f32.mxu0 0.0
    %3810 = vmatmul.mubr.f32.gmra.mrb[0].mxu0 %v3740
    %v3811 = vpop.f32.mrb[0].mxu0
    %v3812 = vadd.f32 0.0, %v3811
    %v3813 = vpop.f32.mrb[0].mxu0
    %3814 = vdwg.mxu0
    %v3815 = vadd.f32 %v3734, %v3812
    %v3816 = vld [vmem:[#allocation3 + $0x2e] sm:$0x3]
    %s3817 = scalar_lea.vmem %s3, 368
    %v3818 = vld [vmem:[%s3817] sm:$0xff]
    %v3819 = vld [vmem:[%s3817 + $0x8] sm:$0x3]
    %v3821 = vsel %vm44, %v3816, 0
    %v3824 = vsel %vm90, %v3819, 0
    %3826 = vmatprep.subr.mxu0 0.0
    %3827 = vmatpush1.msra.mxu0 %v3818
    %3828 = vmatprep.subr.mxu0 0.0
    %3829 = vmatpush1.msra.mxu0 %v3824
    %3830 = vmatprep.subr.mxu0 0.0
    %3831 = vmatpush1.msra.mxu0 0.0
    %3832 = vmatprep.subr.mxu0 0.0
    %3833 = vmatpush1.msra.mxu0 0.0
    %3834 = vmatprep.subr.mxu0 0.0
    %3835 = vmatpush1.msra.mxu0 0.0
    %3836 = vmatprep.subr.mxu0 0.0
    %3837 = vmatpush1.msra.mxu0 0.0
    %3838 = vmatprep.subr.mxu0 0.0
    %3839 = vmatpush1.msra.mxu0 0.0
    %3840 = vmatprep.subr.mxu0 0.0
    %3841 = vmatpush1.msra.mxu0 0.0
    %3842 = vmatprep.subr.mxu0 0.0
    %3843 = vmatpush1.msra.mxu0 0.0
    %3844 = vmatprep.subr.mxu0 0.0
    %3845 = vmatpush1.msra.mxu0 0.0
    %3846 = vmatprep.subr.mxu0 0.0
    %3847 = vmatpush1.msra.mxu0 0.0
    %3848 = vmatprep.subr.mxu0 0.0
    %3849 = vmatpush1.msra.mxu0 0.0
    %3850 = vmatprep.subr.mxu0 0.0
    %3851 = vmatpush1.msra.mxu0 0.0
    %3852 = vmatprep.subr.mxu0 0.0
    %3853 = vmatpush1.msra.mxu0 0.0
    %3854 = vmatprep.subr.mxu0 0.0
    %3855 = vmatpush1.msra.mxu0 0.0
    %3856 = vmatprep.subr.mxu0 0.0
    %3857 = vmatpush1.msra.mxu0 0.0
    %3858 = vmatprep.subr.mxu0 0.0
    %3859 = vmatpush1.msra.mxu0 0.0
    %3860 = vmatprep.subr.mxu0 0.0
    %3861 = vmatpush1.msra.mxu0 0.0
    %3862 = vmatprep.subr.mxu0 0.0
    %3863 = vmatpush1.msra.mxu0 0.0
    %3864 = vmatprep.subr.mxu0 0.0
    %3865 = vmatpush1.msra.mxu0 0.0
    %3866 = vmatprep.subr.mxu0 0.0
    %3867 = vmatpush1.msra.mxu0 0.0
    %3868 = vmatprep.subr.mxu0 0.0
    %3869 = vmatpush1.msra.mxu0 0.0
    %3870 = vmatprep.subr.mxu0 0.0
    %3871 = vmatpush1.msra.mxu0 0.0
    %3872 = vmatprep.subr.mxu0 0.0
    %3873 = vmatpush1.msra.mxu0 0.0
    %3874 = vmatprep.subr.mxu0 0.0
    %3875 = vmatpush1.msra.mxu0 0.0
    %3876 = vmatprep.subr.mxu0 0.0
    %3877 = vmatpush1.msra.mxu0 0.0
    %3878 = vmatprep.subr.mxu0 0.0
    %3879 = vmatpush1.msra.mxu0 0.0
    %3880 = vmatprep.subr.mxu0 0.0
    %3881 = vmatpush1.msra.mxu0 0.0
    %3882 = vmatprep.subr.mxu0 0.0
    %3883 = vmatpush1.msra.mxu0 0.0
    %3884 = vmatprep.subr.mxu0 0.0
    %3885 = vmatpush1.msra.mxu0 0.0
    %3886 = vmatprep.subr.mxu0 0.0
    %3887 = vmatpush1.msra.mxu0 0.0
    %3888 = vmatprep.subr.mxu0 0.0
    %3889 = vmatpush1.msra.mxu0 0.0
    %3890 = vmatprep.mubr.f32.mxu0 0.0
    %3891 = vmatmul.mubr.f32.gmra.mrb[0].mxu0 %v3821
    %v3892 = vpop.f32.mrb[0].mxu0
    %v3893 = vadd.f32 0.0, %v3892
    %v3894 = vpop.f32.mrb[0].mxu0
    %3895 = vdwg.mxu0
    %v3896 = vadd.f32 %v3815, %v3893
    %v3897 = vld [vmem:[#allocation3 + $0x30] sm:$0x3]
    %s3898 = scalar_lea.vmem %s3, 384
    %v3899 = vld [vmem:[%s3898] sm:$0xff]
    %v3900 = vld [vmem:[%s3898 + $0x8] sm:$0x3]
    %v3902 = vsel %vm44, %v3897, 0
    %v3905 = vsel %vm90, %v3900, 0
    %3907 = vmatprep.subr.mxu0 0.0
    %3908 = vmatpush1.msra.mxu0 %v3899
    %3909 = vmatprep.subr.mxu0 0.0
    %3910 = vmatpush1.msra.mxu0 %v3905
    %3911 = vmatprep.subr.mxu0 0.0
    %3912 = vmatpush1.msra.mxu0 0.0
    %3913 = vmatprep.subr.mxu0 0.0
    %3914 = vmatpush1.msra.mxu0 0.0
    %3915 = vmatprep.subr.mxu0 0.0
    %3916 = vmatpush1.msra.mxu0 0.0
    %3917 = vmatprep.subr.mxu0 0.0
    %3918 = vmatpush1.msra.mxu0 0.0
    %3919 = vmatprep.subr.mxu0 0.0
    %3920 = vmatpush1.msra.mxu0 0.0
    %3921 = vmatprep.subr.mxu0 0.0
    %3922 = vmatpush1.msra.mxu0 0.0
    %3923 = vmatprep.subr.mxu0 0.0
    %3924 = vmatpush1.msra.mxu0 0.0
    %3925 = vmatprep.subr.mxu0 0.0
    %3926 = vmatpush1.msra.mxu0 0.0
    %3927 = vmatprep.subr.mxu0 0.0
    %3928 = vmatpush1.msra.mxu0 0.0
    %3929 = vmatprep.subr.mxu0 0.0
    %3930 = vmatpush1.msra.mxu0 0.0
    %3931 = vmatprep.subr.mxu0 0.0
    %3932 = vmatpush1.msra.mxu0 0.0
    %3933 = vmatprep.subr.mxu0 0.0
    %3934 = vmatpush1.msra.mxu0 0.0
    %3935 = vmatprep.subr.mxu0 0.0
    %3936 = vmatpush1.msra.mxu0 0.0
    %3937 = vmatprep.subr.mxu0 0.0
    %3938 = vmatpush1.msra.mxu0 0.0
    %3939 = vmatprep.subr.mxu0 0.0
    %3940 = vmatpush1.msra.mxu0 0.0
    %3941 = vmatprep.subr.mxu0 0.0
    %3942 = vmatpush1.msra.mxu0 0.0
    %3943 = vmatprep.subr.mxu0 0.0
    %3944 = vmatpush1.msra.mxu0 0.0
    %3945 = vmatprep.subr.mxu0 0.0
    %3946 = vmatpush1.msra.mxu0 0.0
    %3947 = vmatprep.subr.mxu0 0.0
    %3948 = vmatpush1.msra.mxu0 0.0
    %3949 = vmatprep.subr.mxu0 0.0
    %3950 = vmatpush1.msra.mxu0 0.0
    %3951 = vmatprep.subr.mxu0 0.0
    %3952 = vmatpush1.msra.mxu0 0.0
    %3953 = vmatprep.subr.mxu0 0.0
    %3954 = vmatpush1.msra.mxu0 0.0
    %3955 = vmatprep.subr.mxu0 0.0
    %3956 = vmatpush1.msra.mxu0 0.0
    %3957 = vmatprep.subr.mxu0 0.0
    %3958 = vmatpush1.msra.mxu0 0.0
    %3959 = vmatprep.subr.mxu0 0.0
    %3960 = vmatpush1.msra.mxu0 0.0
    %3961 = vmatprep.subr.mxu0 0.0
    %3962 = vmatpush1.msra.mxu0 0.0
    %3963 = vmatprep.subr.mxu0 0.0
    %3964 = vmatpush1.msra.mxu0 0.0
    %3965 = vmatprep.subr.mxu0 0.0
    %3966 = vmatpush1.msra.mxu0 0.0
    %3967 = vmatprep.subr.mxu0 0.0
    %3968 = vmatpush1.msra.mxu0 0.0
    %3969 = vmatprep.subr.mxu0 0.0
    %3970 = vmatpush1.msra.mxu0 0.0
    %3971 = vmatprep.mubr.f32.mxu0 0.0
    %3972 = vmatmul.mubr.f32.gmra.mrb[0].mxu0 %v3902
    %v3973 = vpop.f32.mrb[0].mxu0
    %v3974 = vadd.f32 0.0, %v3973
    %v3975 = vpop.f32.mrb[0].mxu0
    %3976 = vdwg.mxu0
    %v3977 = vadd.f32 %v3896, %v3974
    %v3978 = vld [vmem:[#allocation3 + $0x32] sm:$0x3]
    %s3979 = scalar_lea.vmem %s3, 400
    %v3980 = vld [vmem:[%s3979] sm:$0xff]
    %v3981 = vld [vmem:[%s3979 + $0x8] sm:$0x3]
    %v3983 = vsel %vm44, %v3978, 0
    %v3986 = vsel %vm90, %v3981, 0
    %3988 = vmatprep.subr.mxu0 0.0
    %3989 = vmatpush1.msra.mxu0 %v3980
    %3990 = vmatprep.subr.mxu0 0.0
    %3991 = vmatpush1.msra.mxu0 %v3986
    %3992 = vmatprep.subr.mxu0 0.0
    %3993 = vmatpush1.msra.mxu0 0.0
    %3994 = vmatprep.subr.mxu0 0.0
    %3995 = vmatpush1.msra.mxu0 0.0
    %3996 = vmatprep.subr.mxu0 0.0
    %3997 = vmatpush1.msra.mxu0 0.0
    %3998 = vmatprep.subr.mxu0 0.0
    %3999 = vmatpush1.msra.mxu0 0.0
    %4000 = vmatprep.subr.mxu0 0.0
    %4001 = vmatpush1.msra.mxu0 0.0
    %4002 = vmatprep.subr.mxu0 0.0
    %4003 = vmatpush1.msra.mxu0 0.0
    %4004 = vmatprep.subr.mxu0 0.0
    %4005 = vmatpush1.msra.mxu0 0.0
    %4006 = vmatprep.subr.mxu0 0.0
    %4007 = vmatpush1.msra.mxu0 0.0
    %4008 = vmatprep.subr.mxu0 0.0
    %4009 = vmatpush1.msra.mxu0 0.0
    %4010 = vmatprep.subr.mxu0 0.0
    %4011 = vmatpush1.msra.mxu0 0.0
    %4012 = vmatprep.subr.mxu0 0.0
    %4013 = vmatpush1.msra.mxu0 0.0
    %4014 = vmatprep.subr.mxu0 0.0
    %4015 = vmatpush1.msra.mxu0 0.0
    %4016 = vmatprep.subr.mxu0 0.0
    %4017 = vmatpush1.msra.mxu0 0.0
    %4018 = vmatprep.subr.mxu0 0.0
    %4019 = vmatpush1.msra.mxu0 0.0
    %4020 = vmatprep.subr.mxu0 0.0
    %4021 = vmatpush1.msra.mxu0 0.0
    %4022 = vmatprep.subr.mxu0 0.0
    %4023 = vmatpush1.msra.mxu0 0.0
    %4024 = vmatprep.subr.mxu0 0.0
    %4025 = vmatpush1.msra.mxu0 0.0
    %4026 = vmatprep.subr.mxu0 0.0
    %4027 = vmatpush1.msra.mxu0 0.0
    %4028 = vmatprep.subr.mxu0 0.0
    %4029 = vmatpush1.msra.mxu0 0.0
    %4030 = vmatprep.subr.mxu0 0.0
    %4031 = vmatpush1.msra.mxu0 0.0
    %4032 = vmatprep.subr.mxu0 0.0
    %4033 = vmatpush1.msra.mxu0 0.0
    %4034 = vmatprep.subr.mxu0 0.0
    %4035 = vmatpush1.msra.mxu0 0.0
    %4036 = vmatprep.subr.mxu0 0.0
    %4037 = vmatpush1.msra.mxu0 0.0
    %4038 = vmatprep.subr.mxu0 0.0
    %4039 = vmatpush1.msra.mxu0 0.0
    %4040 = vmatprep.subr.mxu0 0.0
    %4041 = vmatpush1.msra.mxu0 0.0
    %4042 = vmatprep.subr.mxu0 0.0
    %4043 = vmatpush1.msra.mxu0 0.0
    %4044 = vmatprep.subr.mxu0 0.0
    %4045 = vmatpush1.msra.mxu0 0.0
    %4046 = vmatprep.subr.mxu0 0.0
    %4047 = vmatpush1.msra.mxu0 0.0
    %4048 = vmatprep.subr.mxu0 0.0
    %4049 = vmatpush1.msra.mxu0 0.0
    %4050 = vmatprep.subr.mxu0 0.0
    %4051 = vmatpush1.msra.mxu0 0.0
    %4052 = vmatprep.mubr.f32.mxu0 0.0
    %4053 = vmatmul.mubr.f32.gmra.mrb[0].mxu0 %v3983
    %v4054 = vpop.f32.mrb[0].mxu0
    %v4055 = vadd.f32 0.0, %v4054
    %v4056 = vpop.f32.mrb[0].mxu0
    %4057 = vdwg.mxu0
    %v4058 = vadd.f32 %v3977, %v4055
    %v4059 = vld [vmem:[%s6] sm:$0x1]
    %v4060 = vld [vmem:[%s6 + $0x1] sm:$0x1]
    %vm4061 = vcmask 484352
    %v4062 = vsel %vm4061, %v4058, 0.0
    %v4063 = vrot.slane %v4062, 4
    %v4064 = vadd.f32 %v4062, %v4063
    %v4065 = vrot.slane %v4064, 2
    %v4066 = vadd.f32 %v4064, %v4065
    %v4067 = vrot.slane %v4066, 1
    %v4068 = vadd.f32 %v4066, %v4067
    %v4069 = vmul.f32 %v4068, 0.5
    %v4070 = vsub.f32 %v4058, %v4069
    %v4071 = vmul.f32 %v4070, %v4070
    %v4072 = vsel %vm4061, %v4071, 0.0
    %v4073 = vrot.slane %v4072, 4
    %v4074 = vadd.f32 %v4072, %v4073
    %v4075 = vrot.slane %v4074, 2
    %v4076 = vadd.f32 %v4074, %v4075
    %v4077 = vrot.slane %v4076, 1
    %v4078 = vadd.f32 %v4076, %v4077
    %v4079 = vmul.f32 %v4078, 0.5
    %v4080 = vadd.f32 %v4079, 1e-05
    %v4081 = vrsqrt.pop %v4080
    %v4082 = vmul.f32 %v4059, %v4081
    %v4083 = vlaneseq
    %v4084 = vshrl.u32 %v4083, 7
    %v4085 = vsub.s32 0, %v4084
    %v4086 = vrot.slane %v4082, %v4085
    %v4087 = vmul.f32 %v4070, %v4086
    %v4088 = vlaneseq
    %v4089 = vshrl.u32 %v4088, 7
    %v4090 = vsub.s32 0, %v4089
    %v4091 = vrot.slane %v4060, %v4090
    %v4092 = vadd.f32 %v4087, %v4091
    %vm4093 = vcmp.ge.f32.partialorder %v4092, 0.0
    %v4094 = vmul.f32 %v4092, 0.01
    %v4095 = vsel %vm4093, %v4092, %v4094
    %4096 = vst.msk [vmem:[#allocation4] sm:$0x3] %vm4061, %v4095
    // Predicated region
    $region30: #{adverserail_cnn_forward.1} parent=1 // pred_check
      _
    $region31: #{adverserail_cnn_forward.1} parent=1 // pred_check_branch
      %4098 = sbr.rel (0) target = $region33
    $region32: #{adverserail_cnn_forward.1} parent=1 // pred_region
      %s4100 = ssub.s32 32, 32
      %4101 = vsyncadd [#allocation5], %s4100
      %s4103 = sshll.u32 [#allocation4], 4
      %s4104 = int_to_ptr.vmem [resolvable:$true] %s4103
      %4106 = dma.vmem_to_hbm [thread:$0]  %s4104, 32, %s7, [#allocation5]
    $region33: #{adverserail_cnn_forward.1} parent=1 // pred_fallthru
      _
    // Predicated region
    $region34: #{adverserail_cnn_forward.1} parent=1 // pred_check
      _
    $region35: #{adverserail_cnn_forward.1} parent=1 // pred_check_branch
      %4108 = sbr.rel (0) target = $region37
    $region36: #{adverserail_cnn_forward.1} parent=1 // pred_region
      %4109 = dma.done [#allocation5], 32
    $region37: #{adverserail_cnn_forward.1} parent=1 // pred_fallthru
      _
    %4110 = vsyncpa [#allocation5], 1

</llo_original>
